<compile_context>
chip_gen: v7x
topology: tpu7x:2x2x1
jax: 0.10.0
libtpu: 0.0.40
codegen_flags: <defaults>
</compile_context>

<pallas_src>
import functools
import itertools
import math

import jax
import jax.numpy as jnp
from jax import lax
from jax.experimental import pallas as pl
from jax.experimental.pallas import tpu as pltpu

# ---------------- config (small shapes consistent with the module) ----------------
VOCAB = 64
MAX_POS = 32
HIDDEN = 256          # module hard-codes 768; scaled down for a synthetic small run
N_HEADS = 2
HEAD_DIM = HIDDEN // N_HEADS   # 128 (lane aligned)
INTERMEDIATE = 512
N_LAYERS = 2
N_LABELS = 2
CLS_PAD = 128         # lane-dense logits block; wrapper slices [:, :N_LABELS]
LN_EPS = 1e-12

# contraction pattern for torch-layout weights (out, in):  x @ W.T
_CT = (((1,), (1,)), ((), ()))


# ---------------- in-kernel helpers ----------------

def _layernorm(x, g, b, eps):
    mu = jnp.mean(x, axis=-1, keepdims=True)
    var = jnp.mean(jnp.square(x - mu), axis=-1, keepdims=True)
    return (x - mu) * lax.rsqrt(var + eps) * g + b


def _gelu(x):   # erf-based gelu (matches HF BERT / torch default)
    # TODO(synk): switch to tanh-approx gelu if profiling at real INTERMEDIATE shows VALU binding.
    return 0.5 * x * (1.0 + lax.erf(x * 0.7071067811865476))


# ---------------- fused whole-model kernel ----------------

def _fused_kernel(emb_ref, eg_ref, eb_ref,
                  wqkv_ref, bqkv_ref, wo_ref, bo_ref,
                  ln1g_ref, ln1b_ref, w1_ref, b1_ref,
                  w2_ref, b2_ref, ln2g_ref, ln2b_ref,
                  wp_ref, bp_ref, a_ref, la_ref, wb_ref, et_ref,
                  wc_ref, bc_ref,
                  latin_ref, pooled_ref, logits_ref,
                  h_sc,
                  *, n_heads, head_dim, eps):
    H = n_heads * head_dim
    scale = 1.0 / math.sqrt(head_dim)
    l = pl.program_id(1)

    # layer 0: seed the carried hidden state with the embedding layernorm
    # (dropout = identity in eval mode).
    @pl.when(l == 0)
    def _():
        h_sc[...] = _layernorm(emb_ref[0], eg_ref[...], eb_ref[...], eps)

    h = h_sc[...]                                                     # (S, H) f32

    # ---- self attention (fused QKV; heads batched into one dot_general) ----
    hb = h.astype(jnp.bfloat16)
    qkv = lax.dot_general(hb, wqkv_ref[0], _CT,
                          preferred_element_type=jnp.float32) + bqkv_ref[0]   # (S, 3H)

    # TODO(synk): no attention_mask (reference forward(x) passes input_ids only).
    q3 = jnp.stack([qkv[:, hh * head_dim:(hh + 1) * head_dim]
                    for hh in range(n_heads)])                        # (nH, S, Dh)
    k3 = jnp.stack([qkv[:, H + hh * head_dim:H + (hh + 1) * head_dim]
                    for hh in range(n_heads)])
    v3 = jnp.stack([qkv[:, 2 * H + hh * head_dim:2 * H + (hh + 1) * head_dim]
                    for hh in range(n_heads)])

    s = jnp.einsum('hqd,hkd->hqk', q3, k3,
                   preferred_element_type=jnp.float32) * scale        # (nH, S, S)
    s = s - jnp.max(s, axis=-1, keepdims=True)
    p = jnp.exp(s)
    p = p * pl.reciprocal(jnp.sum(p, axis=-1, keepdims=True), approx=True)
    ctx3 = jnp.einsum('hqk,hkd->hqd', p, v3,
                      preferred_element_type=jnp.float32)             # (nH, S, Dh)
    # rebuild (S, H) context along the lane axis -> no scratch round trip, no transposes.
    ctx = jnp.concatenate([ctx3[hh] for hh in range(n_heads)], axis=-1)

    attn_out = lax.dot_general(ctx.astype(jnp.bfloat16), wo_ref[0], _CT,
                               preferred_element_type=jnp.float32) + bo_ref[0]
    h = _layernorm(attn_out + h, ln1g_ref[0], ln1b_ref[0], eps)

    # ---- feed-forward ----
    ffn = lax.dot_general(h.astype(jnp.bfloat16), w1_ref[0], _CT,
                          preferred_element_type=jnp.float32) + b1_ref[0]
    ffn = _gelu(ffn).astype(jnp.bfloat16)
    ffn_out = lax.dot_general(ffn, w2_ref[0], _CT,
                              preferred_element_type=jnp.float32) + b2_ref[0]
    h = _layernorm(ffn_out + h, ln2g_ref[0], ln2b_ref[0], eps)
    h_sc[...] = h

    # ---- fused head on the last layer step: CLS row -> RankOne pooler -> classifier ----
    @pl.when(l == pl.num_programs(1) - 1)
    def _():
        x = h[0:1, :]                                                 # CLS row, (1, H) f32
        latin_ref[0] = x                                              # latent_in
        # torch: dense(x) = x @ W.T + b
        dense = lax.dot_general(x.astype(jnp.bfloat16), wp_ref[...], _CT,
                                preferred_element_type=jnp.float32) + bp_ref[...]
        # rank-1 correction, no (H,H) temporaries and no second pooler matmul:
        #   x @ (-(W @ (beta⊗alpha)) + eta⊗lamda) = -(x·(W@beta))*alpha + (x·eta)*lamda
        t1 = jnp.sum(x * wb_ref[...], axis=-1, keepdims=True)         # x·(W@beta), (1,1)
        t2 = jnp.sum(x * et_ref[...], axis=-1, keepdims=True)         # x·eta
        pooled = jnp.tanh(dense - t1 * a_ref[...] + t2 * la_ref[...])
        pooled_ref[0] = pooled                                        # latent
        # classifier (dropout = identity in eval); lane-dense padded to 128 columns.
        logits_ref[0] = lax.dot_general(pooled.astype(jnp.bfloat16), wc_ref[...], _CT,
                                        preferred_element_type=jnp.float32) + bc_ref[...]


def fused_forward(prep, emb):
    """emb: (B, S, HIDDEN) f32 -> (latent_in (B,1,H), pooled (B,1,H), logits_pad (B,1,128))."""
    B, S, _ = emb.shape

    def bcast(shape):
        nd = len(shape)
        return pl.BlockSpec(shape, lambda b, l, _n=nd: (0,) * _n)

    def per_layer(shape):   # stream one layer's weights per grid step (double buffered)
        block = (1,) + tuple(shape[1:])
        pad = len(shape) - 1
        return pl.BlockSpec(block, lambda b, l, _p=pad: (l,) + (0,) * _p)

    in_specs = [
        pl.BlockSpec((1, S, HIDDEN), lambda b, l: (b, 0, 0)),                 # emb
        bcast((1, HIDDEN)), bcast((1, HIDDEN)),                               # emb LN g/b
        per_layer((N_LAYERS, 3 * HIDDEN, HIDDEN)),                            # wqkv
        per_layer((N_LAYERS, 1, 3 * HIDDEN)),                                 # bqkv
        per_layer((N_LAYERS, HIDDEN, HIDDEN)),                                # wo
        per_layer((N_LAYERS, 1, HIDDEN)),                                     # bo
        per_layer((N_LAYERS, 1, HIDDEN)), per_layer((N_LAYERS, 1, HIDDEN)),   # ln1 g/b
        per_layer((N_LAYERS, INTERMEDIATE, HIDDEN)),                          # w1
        per_layer((N_LAYERS, 1, INTERMEDIATE)),                               # b1
        per_layer((N_LAYERS, HIDDEN, INTERMEDIATE)),                          # w2
        per_layer((N_LAYERS, 1, HIDDEN)),                                     # b2
        per_layer((N_LAYERS, 1, HIDDEN)), per_layer((N_LAYERS, 1, HIDDEN)),   # ln2 g/b
        bcast((HIDDEN, HIDDEN)),                                              # pooler_w (bf16)
        bcast((1, HIDDEN)),                                                   # pooler_b
        bcast((1, HIDDEN)), bcast((1, HIDDEN)),                               # alpha, lamda
        bcast((1, HIDDEN)), bcast((1, HIDDEN)),                               # W@beta, eta
        bcast((CLS_PAD, HIDDEN)),                                             # cls_w padded (bf16)
        bcast((1, CLS_PAD)),                                                  # cls_b padded
    ]
    out_specs = [
        pl.BlockSpec((1, 1, HIDDEN), lambda b, l: (b, 0, 0)),                 # latent_in
        pl.BlockSpec((1, 1, HIDDEN), lambda b, l: (b, 0, 0)),                 # pooled (latent)
        pl.BlockSpec((1, 1, CLS_PAD), lambda b, l: (b, 0, 0)),                # logits (padded)
    ]

    kernel = functools.partial(_fused_kernel, n_heads=N_HEADS, head_dim=HEAD_DIM, eps=LN_EPS)
    # TODO(synk): at real BERT-base shapes additionally tile w1/w2 along INTERMEDIATE, set
    # pltpu.CompilerParams(vmem_limit_bytes=...) (v6e ~48-64MB, smaller chunks on v5e), and use
    # a flash-style (tq,tk>=128) attention tiling; at these toy shapes none of that pays off.
    return pl.pallas_call(
        kernel,
        out_shape=(jax.ShapeDtypeStruct((B, 1, HIDDEN), jnp.float32),
                   jax.ShapeDtypeStruct((B, 1, HIDDEN), jnp.float32),
                   jax.ShapeDtypeStruct((B, 1, CLS_PAD), jnp.float32)),
        grid_spec=pltpu.PrefetchScalarGridSpec(
            num_scalar_prefetch=0,
            grid=(B, N_LAYERS),
            in_specs=in_specs,
            out_specs=out_specs,
            scratch_shapes=[pltpu.VMEM((S, HIDDEN), jnp.float32)]),   # carried hidden state
        compiler_params=pltpu.CompilerParams(
            dimension_semantics=("parallel", "arbitrary")),
    )(emb,
      prep["emb_ln_g"], prep["emb_ln_b"],
      prep["wqkv"], prep["bqkv"], prep["wo"], prep["bo"],
      prep["ln1_g"], prep["ln1_b"], prep["w1"], prep["b1"],
      prep["w2"], prep["b2"], prep["ln2_g"], prep["ln2_b"],
      prep["pooler_w"], prep["pooler_b"],
      prep["alpha"], prep["lamda"], prep["w_beta"], prep["eta"],
      prep["cls_w"], prep["cls_b"])


# ---------------- model forward (mirrors MyAdaptedBert.forward) ----------------

@jax.jit
def my_adapted_bert_forward(prep, input_ids):
    """Returns (logits, (latent, latent_in))."""
    B, S = input_ids.shape
    emb = (prep["word_emb"][input_ids]
           + prep["pos_emb"][:S][None, :, :]
           + prep["type_emb"][0][None, None, :]).astype(jnp.float32)   # token_type_ids = 0

    latent_in3, pooled3, logits3 = fused_forward(prep, emb)
    latent_in = latent_in3[:, 0, :]                  # hidden_states[-1][:, 0]
    latent = pooled3[:, 0, :]                        # dropout(pooled) == pooled in eval
    logits = logits3[:, 0, :N_LABELS]                # slice lane-dense padded logits
    return logits, (latent, latent_in)


# ---------------- deterministic synthetic parameters ----------------

def init_params(key):
    counter = itertools.count()

    def nrm(shape, scale=0.02):
        return scale * jax.random.normal(jax.random.fold_in(key, next(counter)),
                                         shape, jnp.float32)

    params = {
        "word_emb": nrm((VOCAB, HIDDEN)),
        "pos_emb": nrm((MAX_POS, HIDDEN)),
        "type_emb": nrm((2, HIDDEN)),
        "emb_ln_g": jnp.ones((HIDDEN,), jnp.float32),
        "emb_ln_b": jnp.zeros((HIDDEN,), jnp.float32),
        "layers": [],
        "pooler_w": nrm((HIDDEN, HIDDEN)),
        "pooler_b": nrm((HIDDEN,)),
        "rankone_w": nrm((HIDDEN, 4)),        # nn.Linear(4, hidden, bias=False).weight
        "cls_w": nrm((N_LABELS, HIDDEN)),
        "cls_b": nrm((N_LABELS,)),
    }
    for _ in range(N_LAYERS):
        params["layers"].append({
            "wq": nrm((HIDDEN, HIDDEN)), "bq": nrm((HIDDEN,)),
            "wk": nrm((HIDDEN, HIDDEN)), "bk": nrm((HIDDEN,)),
            "wv": nrm((HIDDEN, HIDDEN)), "bv": nrm((HIDDEN,)),
            "wo": nrm((HIDDEN, HIDDEN)), "bo": nrm((HIDDEN,)),
            "ln1_g": jnp.ones((HIDDEN,), jnp.float32),
            "ln1_b": jnp.zeros((HIDDEN,), jnp.float32),
            "w1": nrm((INTERMEDIATE, HIDDEN)), "b1": nrm((INTERMEDIATE,)),
            "w2": nrm((HIDDEN, INTERMEDIATE)), "b2": nrm((HIDDEN,)),
            "ln2_g": jnp.ones((HIDDEN,), jnp.float32),
            "ln2_b": jnp.zeros((HIDDEN,), jnp.float32),
        })
    return params


def prepare_params(params):
    """One-time repack: torch layouts -> kernel layouts (stacked layers, bf16 matmul weights)."""
    layers = params["layers"]

    def stack(name):
        return jnp.stack([l[name] for l in layers])

    ro = params["rankone_w"]          # (H, 4) == RankOne.dense.weight;  .T rows: alpha,beta,lamda,eta
    alpha, beta, lamda, eta = ro[:, 0], ro[:, 1], ro[:, 2], ro[:, 3]
    # rank-1 dedup: (x@W)·beta == x·(W@beta) with W = pooler weight in torch (out,in) layout.
    w_beta = params["pooler_w"] @ beta                               # (H,), f32

    cls_w_pad = jnp.zeros((CLS_PAD, HIDDEN), jnp.float32).at[:N_LABELS].set(params["cls_w"])
    cls_b_pad = jnp.zeros((CLS_PAD,), jnp.float32).at[:N_LABELS].set(params["cls_b"])

    prep = {
        "word_emb": params["word_emb"],
        "pos_emb": params["pos_emb"],
        "type_emb": params["type_emb"],
        "emb_ln_g": params["emb_ln_g"].reshape(1, HIDDEN),
        "emb_ln_b": params["emb_ln_b"].reshape(1, HIDDEN),
        # fused QKV weight (L, 3H, H), torch (out, in) layout, bf16 for the MXU
        "wqkv": jnp.stack([jnp.concatenate([l["wq"], l["wk"], l["wv"]], axis=0)
                           for l in layers]).astype(jnp.bfloat16),
        "bqkv": jnp.stack([jnp.concatenate([l["bq"], l["bk"], l["bv"]])
                           for l in layers]).reshape(N_LAYERS, 1, 3 * HIDDEN),
        "wo": stack("wo").astype(jnp.bfloat16),
        "bo": stack("bo").reshape(N_LAYERS, 1, HIDDEN),
        "ln1_g": stack("ln1_g").reshape(N_LAYERS, 1, HIDDEN),
        "ln1_b": stack("ln1_b").reshape(N_LAYERS, 1, HIDDEN),
        "w1": stack("w1").astype(jnp.bfloat16),
        "b1": stack("b1").reshape(N_LAYERS, 1, INTERMEDIATE),
        "w2": stack("w2").astype(jnp.bfloat16),
        "b2": stack("b2").reshape(N_LAYERS, 1, HIDDEN),
        "ln2_g": stack("ln2_g").reshape(N_LAYERS, 1, HIDDEN),
        "ln2_b": stack("ln2_b").reshape(N_LAYERS, 1, HIDDEN),
        # pooler / RankOne / classifier
        "pooler_w": params["pooler_w"].astype(jnp.bfloat16),
        "pooler_b": params["pooler_b"].reshape(1, HIDDEN),
        "alpha": alpha.reshape(1, HIDDEN),
        "lamda": lamda.reshape(1, HIDDEN),
        "w_beta": w_beta.reshape(1, HIDDEN),
        "eta":   eta.reshape(1, HIDDEN),
        "cls_w": cls_w_pad.astype(jnp.bfloat16),
        "cls_b": cls_b_pad.reshape(1, CLS_PAD),
    }
    return prep


if __name__ == "__main__":
    root = jax.random.PRNGKey(0)
    pkey, dkey = jax.random.split(root)
    params = init_params(pkey)
    prep = prepare_params(params)

    B, S = 2, 8
    input_ids = jax.random.randint(dkey, (B, S), 0, VOCAB, dtype=jnp.int32)

    logits, (latent, latent_in) = my_adapted_bert_forward(prep, input_ids)
    jax.block_until_ready((logits, latent, latent_in))

    assert logits.shape == (B, N_LABELS)
    assert latent.shape == (B, HIDDEN)
    assert latent_in.shape == (B, HIDDEN)
    assert bool(jnp.all(jnp.isfinite(logits)))
    assert bool(jnp.all(jnp.isfinite(latent)))
    assert bool(jnp.all(jnp.isfinite(latent_in)))
    print("KERNEL_OK")
</pallas_src>

<mosaic_0001>
module attributes {stable_mosaic.version = 11 : i64} {
  func.func @_fused_kernel(%arg0: i32, %arg1: i32, %arg2: memref<1x8x256xf32, #tpu.memory_space<vmem>>, %arg3: memref<1x256xf32, #tpu.memory_space<vmem>>, %arg4: memref<1x256xf32, #tpu.memory_space<vmem>>, %arg5: memref<1x768x256xbf16, #tpu.memory_space<vmem>>, %arg6: memref<1x1x768xf32, #tpu.memory_space<vmem>>, %arg7: memref<1x256x256xbf16, #tpu.memory_space<vmem>>, %arg8: memref<1x1x256xf32, #tpu.memory_space<vmem>>, %arg9: memref<1x1x256xf32, #tpu.memory_space<vmem>>, %arg10: memref<1x1x256xf32, #tpu.memory_space<vmem>>, %arg11: memref<1x512x256xbf16, #tpu.memory_space<vmem>>, %arg12: memref<1x1x512xf32, #tpu.memory_space<vmem>>, %arg13: memref<1x256x512xbf16, #tpu.memory_space<vmem>>, %arg14: memref<1x1x256xf32, #tpu.memory_space<vmem>>, %arg15: memref<1x1x256xf32, #tpu.memory_space<vmem>>, %arg16: memref<1x1x256xf32, #tpu.memory_space<vmem>>, %arg17: memref<256x256xbf16, #tpu.memory_space<vmem>>, %arg18: memref<1x256xf32, #tpu.memory_space<vmem>>, %arg19: memref<1x256xf32, #tpu.memory_space<vmem>>, %arg20: memref<1x256xf32, #tpu.memory_space<vmem>>, %arg21: memref<1x256xf32, #tpu.memory_space<vmem>>, %arg22: memref<1x256xf32, #tpu.memory_space<vmem>>, %arg23: memref<128x256xbf16, #tpu.memory_space<vmem>>, %arg24: memref<1x128xf32, #tpu.memory_space<vmem>>, %arg25: memref<1x1x256xf32, #tpu.memory_space<vmem>>, %arg26: memref<1x1x256xf32, #tpu.memory_space<vmem>>, %arg27: memref<1x1x128xf32, #tpu.memory_space<vmem>>, %arg28: memref<8x256xf32, #tpu.memory_space<vmem>>) attributes {dimension_semantics = [#tpu.dimension_semantics<parallel>, #tpu.dimension_semantics<arbitrary>], iteration_bounds = array<i64: 2, 2>, scalar_prefetch = 0 : i64, scratch_operands = 1 : i64, tpu.core_type = #tpu.core_type<tc>, window_params = [{transform_indices = @transform_0, window_bounds = array<i64: 1, 8, 256>}, {pipeline_mode = #tpu.pipeline_mode<synchronous>, transform_indices = @transform_1, window_bounds = array<i64: 1, 256>}, {pipeline_mode = #tpu.pipeline_mode<synchronous>, transform_indices = @transform_2, window_bounds = array<i64: 1, 256>}, {transform_indices = @transform_3, window_bounds = array<i64: 1, 768, 256>}, {transform_indices = @transform_4, window_bounds = array<i64: 1, 1, 768>}, {transform_indices = @transform_5, window_bounds = array<i64: 1, 256, 256>}, {transform_indices = @transform_6, window_bounds = array<i64: 1, 1, 256>}, {transform_indices = @transform_7, window_bounds = array<i64: 1, 1, 256>}, {transform_indices = @transform_8, window_bounds = array<i64: 1, 1, 256>}, {transform_indices = @transform_9, window_bounds = array<i64: 1, 512, 256>}, {transform_indices = @transform_10, window_bounds = array<i64: 1, 1, 512>}, {transform_indices = @transform_11, window_bounds = array<i64: 1, 256, 512>}, {transform_indices = @transform_12, window_bounds = array<i64: 1, 1, 256>}, {transform_indices = @transform_13, window_bounds = array<i64: 1, 1, 256>}, {transform_indices = @transform_14, window_bounds = array<i64: 1, 1, 256>}, {pipeline_mode = #tpu.pipeline_mode<synchronous>, transform_indices = @transform_15, window_bounds = array<i64: 256, 256>}, {pipeline_mode = #tpu.pipeline_mode<synchronous>, transform_indices = @transform_16, window_bounds = array<i64: 1, 256>}, {pipeline_mode = #tpu.pipeline_mode<synchronous>, transform_indices = @transform_17, window_bounds = array<i64: 1, 256>}, {pipeline_mode = #tpu.pipeline_mode<synchronous>, transform_indices = @transform_18, window_bounds = array<i64: 1, 256>}, {pipeline_mode = #tpu.pipeline_mode<synchronous>, transform_indices = @transform_19, window_bounds = array<i64: 1, 256>}, {pipeline_mode = #tpu.pipeline_mode<synchronous>, transform_indices = @transform_20, window_bounds = array<i64: 1, 256>}, {pipeline_mode = #tpu.pipeline_mode<synchronous>, transform_indices = @transform_21, window_bounds = array<i64: 128, 256>}, {pipeline_mode = #tpu.pipeline_mode<synchronous>, transform_indices = @transform_22, window_bounds = array<i64: 1, 128>}, {transform_indices = @transform_23, window_bounds = array<i64: 1, 1, 256>}, {transform_indices = @transform_24, window_bounds = array<i64: 1, 1, 256>}, {transform_indices = @transform_25, window_bounds = array<i64: 1, 1, 128>}]} {
    %c0_i32 = arith.constant 0 : i32
    %0 = arith.cmpi eq, %arg1, %c0_i32 : i32
    %1 = arith.extui %0 : i1 to i32
    %c0_i32_0 = arith.constant 0 : i32
    %2 = arith.cmpi ne, %1, %c0_i32_0 : i32
    scf.if %2 {
      %c0_62 = arith.constant 0 : index
      %c0_63 = arith.constant 0 : index
      %c0_64 = arith.constant 0 : index
      %136 = vector.load %arg2[%c0_62, %c0_63, %c0_64] : memref<1x8x256xf32, #tpu.memory_space<vmem>>, vector<1x8x256xf32>
      %137 = vector.shape_cast %136 : vector<1x8x256xf32> to vector<8x256xf32>
      %c0_65 = arith.constant 0 : index
      %c0_66 = arith.constant 0 : index
      %138 = vector.load %arg3[%c0_65, %c0_66] : memref<1x256xf32, #tpu.memory_space<vmem>>, vector<1x256xf32>
      %c0_67 = arith.constant 0 : index
      %c0_68 = arith.constant 0 : index
      %139 = vector.load %arg4[%c0_67, %c0_68] : memref<1x256xf32, #tpu.memory_space<vmem>>, vector<1x256xf32>
      %cst_69 = arith.constant dense<0.000000e+00> : vector<8xf32>
      %140 = vector.multi_reduction <add>, %137, %cst_69 [1] : vector<8x256xf32> to vector<8xf32>
      %141 = vector.shape_cast %140 : vector<8xf32> to vector<8x1xf32>
      %cst_70 = arith.constant 2.560000e+02 : f32
      %142 = vector.broadcast %cst_70 : f32 to vector<8x1xf32>
      %143 = arith.divf %141, %142 : vector<8x1xf32>
      %144 = vector.broadcast %143 : vector<8x1xf32> to vector<8x256xf32>
      %145 = arith.subf %137, %144 : vector<8x256xf32>
      %146 = arith.mulf %145, %145 : vector<8x256xf32>
      %cst_71 = arith.constant dense<0.000000e+00> : vector<8xf32>
      %147 = vector.multi_reduction <add>, %146, %cst_71 [1] : vector<8x256xf32> to vector<8xf32>
      %148 = vector.shape_cast %147 : vector<8xf32> to vector<8x1xf32>
      %cst_72 = arith.constant 2.560000e+02 : f32
      %149 = vector.broadcast %cst_72 : f32 to vector<8x1xf32>
      %150 = arith.divf %148, %149 : vector<8x1xf32>
      %151 = vector.broadcast %143 : vector<8x1xf32> to vector<8x256xf32>
      %152 = arith.subf %137, %151 : vector<8x256xf32>
      %cst_73 = arith.constant 9.99999996E-13 : f32
      %153 = vector.broadcast %cst_73 : f32 to vector<8x1xf32>
      %154 = arith.addf %150, %153 : vector<8x1xf32>
      %155 = math.rsqrt %154 : vector<8x1xf32>
      %156 = vector.broadcast %155 : vector<8x1xf32> to vector<8x256xf32>
      %157 = arith.mulf %152, %156 : vector<8x256xf32>
      %158 = vector.broadcast %138 : vector<1x256xf32> to vector<8x256xf32>
      %159 = arith.mulf %157, %158 : vector<8x256xf32>
      %160 = vector.broadcast %139 : vector<1x256xf32> to vector<8x256xf32>
      %161 = arith.addf %159, %160 : vector<8x256xf32>
      %c0_74 = arith.constant 0 : index
      %c0_75 = arith.constant 0 : index
      %162 = vector.load %arg28[%c0_74, %c0_75] : memref<8x256xf32, #tpu.memory_space<vmem>>, vector<8x256xf32>
      tpu.vector_store %arg28[%c0_74, %c0_75], %161 {strides = array<i32>} : memref<8x256xf32, #tpu.memory_space<vmem>>, vector<8x256xf32>,
    } else {
    }
    %c0 = arith.constant 0 : index
    %c0_1 = arith.constant 0 : index
    %3 = vector.load %arg28[%c0, %c0_1] : memref<8x256xf32, #tpu.memory_space<vmem>>, vector<8x256xf32>
    %4 = arith.truncf %3 : vector<8x256xf32> to vector<8x256xbf16>
    %c0_2 = arith.constant 0 : index
    %c0_3 = arith.constant 0 : index
    %c0_4 = arith.constant 0 : index
    %5 = vector.load %arg5[%c0_2, %c0_3, %c0_4] : memref<1x768x256xbf16, #tpu.memory_space<vmem>>, vector<1x768x256xbf16>
    %6 = vector.shape_cast %5 : vector<1x768x256xbf16> to vector<768x256xbf16>
    %cst = arith.constant dense<0.000000e+00> : vector<8x768xf32>
    %7 = tpu.matmul %4, %6, %cst {dimension_numbers = #tpu.dot_dimension_numbers<[1], [1], [0], [0], [0, 0, 1, 0], [], []>} : vector<8x256xbf16>, vector<768x256xbf16>, vector<8x768xf32> -> vector<8x768xf32>
    %c0_5 = arith.constant 0 : index
    %c0_6 = arith.constant 0 : index
    %c0_7 = arith.constant 0 : index
    %8 = vector.load %arg6[%c0_5, %c0_6, %c0_7] : memref<1x1x768xf32, #tpu.memory_space<vmem>>, vector<1x1x768xf32>
    %9 = vector.shape_cast %8 : vector<1x1x768xf32> to vector<1x768xf32>
    %10 = vector.broadcast %9 : vector<1x768xf32> to vector<8x768xf32>
    %11 = arith.addf %7, %10 : vector<8x768xf32>
    %12 = vector.extract_strided_slice %11 {offsets = [0, 0], sizes = [8, 128], strides = [1, 1]} : vector<8x768xf32> to vector<8x128xf32>
    %13 = vector.extract_strided_slice %11 {offsets = [0, 128], sizes = [8, 128], strides = [1, 1]} : vector<8x768xf32> to vector<8x128xf32>
    %14 = vector.shape_cast %12 : vector<8x128xf32> to vector<1x8x128xf32>
    %15 = vector.shape_cast %13 : vector<8x128xf32> to vector<1x8x128xf32>
    %16 = tpu.concatenate %14, %15 in 0 : vector<1x8x128xf32>, vector<1x8x128xf32> -> vector<2x8x128xf32>
    %17 = vector.extract_strided_slice %11 {offsets = [0, 256], sizes = [8, 128], strides = [1, 1]} : vector<8x768xf32> to vector<8x128xf32>
    %18 = vector.extract_strided_slice %11 {offsets = [0, 384], sizes = [8, 128], strides = [1, 1]} : vector<8x768xf32> to vector<8x128xf32>
    %19 = vector.shape_cast %17 : vector<8x128xf32> to vector<1x8x128xf32>
    %20 = vector.shape_cast %18 : vector<8x128xf32> to vector<1x8x128xf32>
    %21 = tpu.concatenate %19, %20 in 0 : vector<1x8x128xf32>, vector<1x8x128xf32> -> vector<2x8x128xf32>
    %22 = vector.extract_strided_slice %11 {offsets = [0, 512], sizes = [8, 128], strides = [1, 1]} : vector<8x768xf32> to vector<8x128xf32>
    %23 = vector.extract_strided_slice %11 {offsets = [0, 640], sizes = [8, 128], strides = [1, 1]} : vector<8x768xf32> to vector<8x128xf32>
    %24 = vector.shape_cast %22 : vector<8x128xf32> to vector<1x8x128xf32>
    %25 = vector.shape_cast %23 : vector<8x128xf32> to vector<1x8x128xf32>
    %26 = tpu.concatenate %24, %25 in 0 : vector<1x8x128xf32>, vector<1x8x128xf32> -> vector<2x8x128xf32>
    "tpu.trace_start"() <{level = 10 : i32, message = "hqd,hkd->hqk"}> : () -> ()
    %cst_8 = arith.constant dense<0.000000e+00> : vector<2x8x8xf32>
    %27 = tpu.matmul %16, %21, %cst_8 {dimension_numbers = #tpu.dot_dimension_numbers<[2], [2], [1], [1], [0, 0, 0, 1, 1, 1], [0], [0]>} : vector<2x8x128xf32>, vector<2x8x128xf32>, vector<2x8x8xf32> -> vector<2x8x8xf32>
    "tpu.trace_stop"() : () -> ()
    %cst_9 = arith.constant 0.0883883461 : f32
    %28 = vector.broadcast %cst_9 : f32 to vector<2x8x8xf32>
    %29 = arith.mulf %27, %28 : vector<2x8x8xf32>
    %cst_10 = arith.constant dense<0xFF800000> : vector<2x8xf32>
    %30 = vector.multi_reduction <maximumf>, %29, %cst_10 [2] : vector<2x8x8xf32> to vector<2x8xf32>
    %31 = vector.shape_cast %30 : vector<2x8xf32> to vector<2x8x1xf32>
    %32 = vector.broadcast %31 : vector<2x8x1xf32> to vector<2x8x8xf32>
    %33 = arith.subf %29, %32 : vector<2x8x8xf32>
    %34 = math.exp %33 : vector<2x8x8xf32>
    %cst_11 = arith.constant dense<0.000000e+00> : vector<2x8xf32>
    %35 = vector.multi_reduction <add>, %34, %cst_11 [2] : vector<2x8x8xf32> to vector<2x8xf32>
    %36 = vector.shape_cast %35 : vector<2x8xf32> to vector<2x8x1xf32>
    %37 = tpu.reciprocal %36 {approx = true} : vector<2x8x1xf32> -> vector<2x8x1xf32>
    %38 = vector.broadcast %37 : vector<2x8x1xf32> to vector<2x8x8xf32>
    %39 = arith.mulf %34, %38 : vector<2x8x8xf32>
    "tpu.trace_start"() <{level = 10 : i32, message = "hqk,hkd->hqd"}> : () -> ()
    %cst_12 = arith.constant dense<0.000000e+00> : vector<2x8x128xf32>
    %40 = tpu.matmul %39, %26, %cst_12 {dimension_numbers = #tpu.dot_dimension_numbers<[2], [1], [1], [2], [0, 0, 0, 1, 1, 2], [0], [0]>} : vector<2x8x8xf32>, vector<2x8x128xf32>, vector<2x8x128xf32> -> vector<2x8x128xf32>
    "tpu.trace_stop"() : () -> ()
    %41 = vector.extract_strided_slice %40 {offsets = [0, 0, 0], sizes = [1, 8, 128], strides = [1, 1, 1]} : vector<2x8x128xf32> to vector<1x8x128xf32>
    %42 = vector.shape_cast %41 : vector<1x8x128xf32> to vector<8x128xf32>
    %43 = vector.extract_strided_slice %40 {offsets = [1, 0, 0], sizes = [1, 8, 128], strides = [1, 1, 1]} : vector<2x8x128xf32> to vector<1x8x128xf32>
    %44 = vector.shape_cast %43 : vector<1x8x128xf32> to vector<8x128xf32>
    %45 = tpu.concatenate %42, %44 in 1 : vector<8x128xf32>, vector<8x128xf32> -> vector<8x256xf32>
    %46 = arith.truncf %45 : vector<8x256xf32> to vector<8x256xbf16>
    %c0_13 = arith.constant 0 : index
    %c0_14 = arith.constant 0 : index
    %c0_15 = arith.constant 0 : index
    %47 = vector.load %arg7[%c0_13, %c0_14, %c0_15] : memref<1x256x256xbf16, #tpu.memory_space<vmem>>, vector<1x256x256xbf16>
    %48 = vector.shape_cast %47 : vector<1x256x256xbf16> to vector<256x256xbf16>
    %cst_16 = arith.constant dense<0.000000e+00> : vector<8x256xf32>
    %49 = tpu.matmul %46, %48, %cst_16 {dimension_numbers = #tpu.dot_dimension_numbers<[1], [1], [0], [0], [0, 0, 1, 0], [], []>} : vector<8x256xbf16>, vector<256x256xbf16>, vector<8x256xf32> -> vector<8x256xf32>
    %c0_17 = arith.constant 0 : index
    %c0_18 = arith.constant 0 : index
    %c0_19 = arith.constant 0 : index
    %50 = vector.load %arg8[%c0_17, %c0_18, %c0_19] : memref<1x1x256xf32, #tpu.memory_space<vmem>>, vector<1x1x256xf32>
    %51 = vector.shape_cast %50 : vector<1x1x256xf32> to vector<1x256xf32>
    %52 = vector.broadcast %51 : vector<1x256xf32> to vector<8x256xf32>
    %53 = arith.addf %49, %52 : vector<8x256xf32>
    %54 = arith.addf %53, %3 : vector<8x256xf32>
    %c0_20 = arith.constant 0 : index
    %c0_21 = arith.constant 0 : index
    %c0_22 = arith.constant 0 : index
    %55 = vector.load %arg9[%c0_20, %c0_21, %c0_22] : memref<1x1x256xf32, #tpu.memory_space<vmem>>, vector<1x1x256xf32>
    %56 = vector.shape_cast %55 : vector<1x1x256xf32> to vector<1x256xf32>
    %c0_23 = arith.constant 0 : index
    %c0_24 = arith.constant 0 : index
    %c0_25 = arith.constant 0 : index
    %57 = vector.load %arg10[%c0_23, %c0_24, %c0_25] : memref<1x1x256xf32, #tpu.memory_space<vmem>>, vector<1x1x256xf32>
    %58 = vector.shape_cast %57 : vector<1x1x256xf32> to vector<1x256xf32>
    %cst_26 = arith.constant dense<0.000000e+00> : vector<8xf32>
    %59 = vector.multi_reduction <add>, %54, %cst_26 [1] : vector<8x256xf32> to vector<8xf32>
    %60 = vector.shape_cast %59 : vector<8xf32> to vector<8x1xf32>
    %cst_27 = arith.constant 2.560000e+02 : f32
    %61 = vector.broadcast %cst_27 : f32 to vector<8x1xf32>
    %62 = arith.divf %60, %61 : vector<8x1xf32>
    %63 = vector.broadcast %62 : vector<8x1xf32> to vector<8x256xf32>
    %64 = arith.subf %54, %63 : vector<8x256xf32>
    %65 = arith.mulf %64, %64 : vector<8x256xf32>
    %cst_28 = arith.constant dense<0.000000e+00> : vector<8xf32>
    %66 = vector.multi_reduction <add>, %65, %cst_28 [1] : vector<8x256xf32> to vector<8xf32>
    %67 = vector.shape_cast %66 : vector<8xf32> to vector<8x1xf32>
    %cst_29 = arith.constant 2.560000e+02 : f32
    %68 = vector.broadcast %cst_29 : f32 to vector<8x1xf32>
    %69 = arith.divf %67, %68 : vector<8x1xf32>
    %70 = vector.broadcast %62 : vector<8x1xf32> to vector<8x256xf32>
    %71 = arith.subf %54, %70 : vector<8x256xf32>
    %cst_30 = arith.constant 9.99999996E-13 : f32
    %72 = vector.broadcast %cst_30 : f32 to vector<8x1xf32>
    %73 = arith.addf %69, %72 : vector<8x1xf32>
    %74 = math.rsqrt %73 : vector<8x1xf32>
    %75 = vector.broadcast %74 : vector<8x1xf32> to vector<8x256xf32>
    %76 = arith.mulf %71, %75 : vector<8x256xf32>
    %77 = vector.broadcast %56 : vector<1x256xf32> to vector<8x256xf32>
    %78 = arith.mulf %76, %77 : vector<8x256xf32>
    %79 = vector.broadcast %58 : vector<1x256xf32> to vector<8x256xf32>
    %80 = arith.addf %78, %79 : vector<8x256xf32>
    %81 = arith.truncf %80 : vector<8x256xf32> to vector<8x256xbf16>
    %c0_31 = arith.constant 0 : index
    %c0_32 = arith.constant 0 : index
    %c0_33 = arith.constant 0 : index
    %82 = vector.load %arg11[%c0_31, %c0_32, %c0_33] : memref<1x512x256xbf16, #tpu.memory_space<vmem>>, vector<1x512x256xbf16>
    %83 = vector.shape_cast %82 : vector<1x512x256xbf16> to vector<512x256xbf16>
    %cst_34 = arith.constant dense<0.000000e+00> : vector<8x512xf32>
    %84 = tpu.matmul %81, %83, %cst_34 {dimension_numbers = #tpu.dot_dimension_numbers<[1], [1], [0], [0], [0, 0, 1, 0], [], []>} : vector<8x256xbf16>, vector<512x256xbf16>, vector<8x512xf32> -> vector<8x512xf32>
    %c0_35 = arith.constant 0 : index
    %c0_36 = arith.constant 0 : index
    %c0_37 = arith.constant 0 : index
    %85 = vector.load %arg12[%c0_35, %c0_36, %c0_37] : memref<1x1x512xf32, #tpu.memory_space<vmem>>, vector<1x1x512xf32>
    %86 = vector.shape_cast %85 : vector<1x1x512xf32> to vector<1x512xf32>
    %87 = vector.broadcast %86 : vector<1x512xf32> to vector<8x512xf32>
    %88 = arith.addf %84, %87 : vector<8x512xf32>
    %cst_38 = arith.constant 5.000000e-01 : f32
    %89 = vector.broadcast %cst_38 : f32 to vector<8x512xf32>
    %90 = arith.mulf %89, %88 : vector<8x512xf32>
    %cst_39 = arith.constant 0.707106769 : f32
    %91 = vector.broadcast %cst_39 : f32 to vector<8x512xf32>
    %92 = arith.mulf %88, %91 : vector<8x512xf32>
    %93 = math.erf %92 : vector<8x512xf32>
    %cst_40 = arith.constant 1.000000e+00 : f32
    %94 = vector.broadcast %cst_40 : f32 to vector<8x512xf32>
    %95 = arith.addf %94, %93 : vector<8x512xf32>
    %96 = arith.mulf %90, %95 : vector<8x512xf32>
    %97 = arith.truncf %96 : vector<8x512xf32> to vector<8x512xbf16>
    %c0_41 = arith.constant 0 : index
    %c0_42 = arith.constant 0 : index
    %c0_43 = arith.constant 0 : index
    %98 = vector.load %arg13[%c0_41, %c0_42, %c0_43] : memref<1x256x512xbf16, #tpu.memory_space<vmem>>, vector<1x256x512xbf16>
    %99 = vector.shape_cast %98 : vector<1x256x512xbf16> to vector<256x512xbf16>
    %cst_44 = arith.constant dense<0.000000e+00> : vector<8x256xf32>
    %100 = tpu.matmul %97, %99, %cst_44 {dimension_numbers = #tpu.dot_dimension_numbers<[1], [1], [0], [0], [0, 0, 1, 0], [], []>} : vector<8x512xbf16>, vector<256x512xbf16>, vector<8x256xf32> -> vector<8x256xf32>
    %c0_45 = arith.constant 0 : index
    %c0_46 = arith.constant 0 : index
    %c0_47 = arith.constant 0 : index
    %101 = vector.load %arg14[%c0_45, %c0_46, %c0_47] : memref<1x1x256xf32, #tpu.memory_space<vmem>>, vector<1x1x256xf32>
    %102 = vector.shape_cast %101 : vector<1x1x256xf32> to vector<1x256xf32>
    %103 = vector.broadcast %102 : vector<1x256xf32> to vector<8x256xf32>
    %104 = arith.addf %100, %103 : vector<8x256xf32>
    %105 = arith.addf %104, %80 : vector<8x256xf32>
    %c0_48 = arith.constant 0 : index
    %c0_49 = arith.constant 0 : index
    %c0_50 = arith.constant 0 : index
    %106 = vector.load %arg15[%c0_48, %c0_49, %c0_50] : memref<1x1x256xf32, #tpu.memory_space<vmem>>, vector<1x1x256xf32>
    %107 = vector.shape_cast %106 : vector<1x1x256xf32> to vector<1x256xf32>
    %c0_51 = arith.constant 0 : index
    %c0_52 = arith.constant 0 : index
    %c0_53 = arith.constant 0 : index
    %108 = vector.load %arg16[%c0_51, %c0_52, %c0_53] : memref<1x1x256xf32, #tpu.memory_space<vmem>>, vector<1x1x256xf32>
    %109 = vector.shape_cast %108 : vector<1x1x256xf32> to vector<1x256xf32>
    %cst_54 = arith.constant dense<0.000000e+00> : vector<8xf32>
    %110 = vector.multi_reduction <add>, %105, %cst_54 [1] : vector<8x256xf32> to vector<8xf32>
    %111 = vector.shape_cast %110 : vector<8xf32> to vector<8x1xf32>
    %cst_55 = arith.constant 2.560000e+02 : f32
    %112 = vector.broadcast %cst_55 : f32 to vector<8x1xf32>
    %113 = arith.divf %111, %112 : vector<8x1xf32>
    %114 = vector.broadcast %113 : vector<8x1xf32> to vector<8x256xf32>
    %115 = arith.subf %105, %114 : vector<8x256xf32>
    %116 = arith.mulf %115, %115 : vector<8x256xf32>
    %cst_56 = arith.constant dense<0.000000e+00> : vector<8xf32>
    %117 = vector.multi_reduction <add>, %116, %cst_56 [1] : vector<8x256xf32> to vector<8xf32>
    %118 = vector.shape_cast %117 : vector<8xf32> to vector<8x1xf32>
    %cst_57 = arith.constant 2.560000e+02 : f32
    %119 = vector.broadcast %cst_57 : f32 to vector<8x1xf32>
    %120 = arith.divf %118, %119 : vector<8x1xf32>
    %121 = vector.broadcast %113 : vector<8x1xf32> to vector<8x256xf32>
    %122 = arith.subf %105, %121 : vector<8x256xf32>
    %cst_58 = arith.constant 9.99999996E-13 : f32
    %123 = vector.broadcast %cst_58 : f32 to vector<8x1xf32>
    %124 = arith.addf %120, %123 : vector<8x1xf32>
    %125 = math.rsqrt %124 : vector<8x1xf32>
    %126 = vector.broadcast %125 : vector<8x1xf32> to vector<8x256xf32>
    %127 = arith.mulf %122, %126 : vector<8x256xf32>
    %128 = vector.broadcast %107 : vector<1x256xf32> to vector<8x256xf32>
    %129 = arith.mulf %127, %128 : vector<8x256xf32>
    %130 = vector.broadcast %109 : vector<1x256xf32> to vector<8x256xf32>
    %131 = arith.addf %129, %130 : vector<8x256xf32>
    %c0_59 = arith.constant 0 : index
    %c0_60 = arith.constant 0 : index
    %132 = vector.load %arg28[%c0_59, %c0_60] : memref<8x256xf32, #tpu.memory_space<vmem>>, vector<8x256xf32>
    tpu.vector_store %arg28[%c0_59, %c0_60], %131 {strides = array<i32>} : memref<8x256xf32, #tpu.memory_space<vmem>>, vector<8x256xf32>,
    %c1_i32 = arith.constant 1 : i32
    %133 = arith.cmpi eq, %arg1, %c1_i32 : i32
    %134 = arith.extui %133 : i1 to i32
    %c0_i32_61 = arith.constant 0 : i32
    %135 = arith.cmpi ne, %134, %c0_i32_61 : i32
    scf.if %135 {
      %136 = vector.extract_strided_slice %131 {offsets = [0, 0], sizes = [1, 256], strides = [1, 1]} : vector<8x256xf32> to vector<1x256xf32>
      %c0_62 = arith.constant 0 : index
      %c0_63 = arith.constant 0 : index
      %c0_64 = arith.constant 0 : index
      %137 = vector.load %arg25[%c0_62, %c0_63, %c0_64] : memref<1x1x256xf32, #tpu.memory_space<vmem>>, vector<1x1x256xf32>
      %138 = vector.shape_cast %137 : vector<1x1x256xf32> to vector<1x256xf32>
      %139 = vector.shape_cast %136 : vector<1x256xf32> to vector<1x1x256xf32>
      tpu.vector_store %arg25[%c0_62, %c0_63, %c0_64], %139 {strides = array<i32>} : memref<1x1x256xf32, #tpu.memory_space<vmem>>, vector<1x1x256xf32>,
      %140 = arith.truncf %136 : vector<1x256xf32> to vector<1x256xbf16>
      %c0_65 = arith.constant 0 : index
      %c0_66 = arith.constant 0 : index
      %141 = vector.load %arg17[%c0_65, %c0_66] : memref<256x256xbf16, #tpu.memory_space<vmem>>, vector<256x256xbf16>
      %cst_67 = arith.constant dense<0.000000e+00> : vector<1x256xf32>
      %142 = tpu.matmul %140, %141, %cst_67 {dimension_numbers = #tpu.dot_dimension_numbers<[1], [1], [0], [0], [0, 0, 1, 0], [], []>} : vector<1x256xbf16>, vector<256x256xbf16>, vector<1x256xf32> -> vector<1x256xf32>
      %c0_68 = arith.constant 0 : index
      %c0_69 = arith.constant 0 : index
      %143 = vector.load %arg18[%c0_68, %c0_69] : memref<1x256xf32, #tpu.memory_space<vmem>>, vector<1x256xf32>
      %144 = arith.addf %142, %143 : vector<1x256xf32>
      %c0_70 = arith.constant 0 : index
      %c0_71 = arith.constant 0 : index
      %145 = vector.load %arg21[%c0_70, %c0_71] : memref<1x256xf32, #tpu.memory_space<vmem>>, vector<1x256xf32>
      %146 = arith.mulf %136, %145 : vector<1x256xf32>
      %cst_72 = arith.constant dense<0.000000e+00> : vector<1xf32>
      %147 = vector.multi_reduction <add>, %146, %cst_72 [1] : vector<1x256xf32> to vector<1xf32>
      %148 = vector.shape_cast %147 : vector<1xf32> to vector<1x1xf32>
      %c0_73 = arith.constant 0 : index
      %c0_74 = arith.constant 0 : index
      %149 = vector.load %arg22[%c0_73, %c0_74] : memref<1x256xf32, #tpu.memory_space<vmem>>, vector<1x256xf32>
      %150 = arith.mulf %136, %149 : vector<1x256xf32>
      %cst_75 = arith.constant dense<0.000000e+00> : vector<1xf32>
      %151 = vector.multi_reduction <add>, %150, %cst_75 [1] : vector<1x256xf32> to vector<1xf32>
      %152 = vector.shape_cast %151 : vector<1xf32> to vector<1x1xf32>
      %c0_76 = arith.constant 0 : index
      %c0_77 = arith.constant 0 : index
      %153 = vector.load %arg19[%c0_76, %c0_77] : memref<1x256xf32, #tpu.memory_space<vmem>>, vector<1x256xf32>
      %154 = vector.broadcast %148 : vector<1x1xf32> to vector<1x256xf32>
      %155 = arith.mulf %154, %153 : vector<1x256xf32>
      %156 = arith.subf %144, %155 : vector<1x256xf32>
      %c0_78 = arith.constant 0 : index
      %c0_79 = arith.constant 0 : index
      %157 = vector.load %arg20[%c0_78, %c0_79] : memref<1x256xf32, #tpu.memory_space<vmem>>, vector<1x256xf32>
      %158 = vector.broadcast %152 : vector<1x1xf32> to vector<1x256xf32>
      %159 = arith.mulf %158, %157 : vector<1x256xf32>
      %160 = arith.addf %156, %159 : vector<1x256xf32>
      %161 = math.tanh %160 : vector<1x256xf32>
      %c0_80 = arith.constant 0 : index
      %c0_81 = arith.constant 0 : index
      %c0_82 = arith.constant 0 : index
      %162 = vector.load %arg26[%c0_80, %c0_81, %c0_82] : memref<1x1x256xf32, #tpu.memory_space<vmem>>, vector<1x1x256xf32>
      %163 = vector.shape_cast %162 : vector<1x1x256xf32> to vector<1x256xf32>
      %164 = vector.shape_cast %161 : vector<1x256xf32> to vector<1x1x256xf32>
      tpu.vector_store %arg26[%c0_80, %c0_81, %c0_82], %164 {strides = array<i32>} : memref<1x1x256xf32, #tpu.memory_space<vmem>>, vector<1x1x256xf32>,
      %165 = arith.truncf %161 : vector<1x256xf32> to vector<1x256xbf16>
      %c0_83 = arith.constant 0 : index
      %c0_84 = arith.constant 0 : index
      %166 = vector.load %arg23[%c0_83, %c0_84] : memref<128x256xbf16, #tpu.memory_space<vmem>>, vector<128x256xbf16>
      %cst_85 = arith.constant dense<0.000000e+00> : vector<1x128xf32>
      %167 = tpu.matmul %165, %166, %cst_85 {dimension_numbers = #tpu.dot_dimension_numbers<[1], [1], [0], [0], [0, 0, 1, 0], [], []>} : vector<1x256xbf16>, vector<128x256xbf16>, vector<1x128xf32> -> vector<1x128xf32>
      %c0_86 = arith.constant 0 : index
      %c0_87 = arith.constant 0 : index
      %168 = vector.load %arg24[%c0_86, %c0_87] : memref<1x128xf32, #tpu.memory_space<vmem>>, vector<1x128xf32>
      %169 = arith.addf %167, %168 : vector<1x128xf32>
      %c0_88 = arith.constant 0 : index
      %c0_89 = arith.constant 0 : index
      %c0_90 = arith.constant 0 : index
      %170 = vector.load %arg27[%c0_88, %c0_89, %c0_90] : memref<1x1x128xf32, #tpu.memory_space<vmem>>, vector<1x1x128xf32>
      %171 = vector.shape_cast %170 : vector<1x1x128xf32> to vector<1x128xf32>
      %172 = vector.shape_cast %169 : vector<1x128xf32> to vector<1x1x128xf32>
      tpu.vector_store %arg27[%c0_88, %c0_89, %c0_90], %172 {strides = array<i32>} : memref<1x1x128xf32, #tpu.memory_space<vmem>>, vector<1x1x128xf32>,
    } else {
    }
    return
  }
  func.func @transform_0(%arg0: i32, %arg1: i32) -> (i32, i32, i32) {
    %c0_i32 = arith.constant 0 : i32
    %c0_i32_0 = arith.constant 0 : i32
    %c0_i32_1 = arith.constant 0 : i32
    return %arg0, %c0_i32, %c0_i32_0 : i32, i32, i32
  }
  func.func @transform_1(%arg0: i32, %arg1: i32) -> (i32, i32) {
    %c0_i32 = arith.constant 0 : i32
    %c0_i32_0 = arith.constant 0 : i32
    %c0_i32_1 = arith.constant 0 : i32
    return %c0_i32, %c0_i32_0 : i32, i32
  }
  func.func @transform_2(%arg0: i32, %arg1: i32) -> (i32, i32) {
    %c0_i32 = arith.constant 0 : i32
    %c0_i32_0 = arith.constant 0 : i32
    %c0_i32_1 = arith.constant 0 : i32
    return %c0_i32, %c0_i32_0 : i32, i32
  }
  func.func @transform_3(%arg0: i32, %arg1: i32) -> (i32, i32, i32) {
    %c0_i32 = arith.constant 0 : i32
    %c0_i32_0 = arith.constant 0 : i32
    %c0_i32_1 = arith.constant 0 : i32
    return %arg1, %c0_i32, %c0_i32_0 : i32, i32, i32
  }
  func.func @transform_4(%arg0: i32, %arg1: i32) -> (i32, i32, i32) {
    %c0_i32 = arith.constant 0 : i32
    %c0_i32_0 = arith.constant 0 : i32
    %c0_i32_1 = arith.constant 0 : i32
    return %arg1, %c0_i32, %c0_i32_0 : i32, i32, i32
  }
  func.func @transform_5(%arg0: i32, %arg1: i32) -> (i32, i32, i32) {
    %c0_i32 = arith.constant 0 : i32
    %c0_i32_0 = arith.constant 0 : i32
    %c0_i32_1 = arith.constant 0 : i32
    return %arg1, %c0_i32, %c0_i32_0 : i32, i32, i32
  }
  func.func @transform_6(%arg0: i32, %arg1: i32) -> (i32, i32, i32) {
    %c0_i32 = arith.constant 0 : i32
    %c0_i32_0 = arith.constant 0 : i32
    %c0_i32_1 = arith.constant 0 : i32
    return %arg1, %c0_i32, %c0_i32_0 : i32, i32, i32
  }
  func.func @transform_7(%arg0: i32, %arg1: i32) -> (i32, i32, i32) {
    %c0_i32 = arith.constant 0 : i32
    %c0_i32_0 = arith.constant 0 : i32
    %c0_i32_1 = arith.constant 0 : i32
    return %arg1, %c0_i32, %c0_i32_0 : i32, i32, i32
  }
  func.func @transform_8(%arg0: i32, %arg1: i32) -> (i32, i32, i32) {
    %c0_i32 = arith.constant 0 : i32
    %c0_i32_0 = arith.constant 0 : i32
    %c0_i32_1 = arith.constant 0 : i32
    return %arg1, %c0_i32, %c0_i32_0 : i32, i32, i32
  }
  func.func @transform_9(%arg0: i32, %arg1: i32) -> (i32, i32, i32) {
    %c0_i32 = arith.constant 0 : i32
    %c0_i32_0 = arith.constant 0 : i32
    %c0_i32_1 = arith.constant 0 : i32
    return %arg1, %c0_i32, %c0_i32_0 : i32, i32, i32
  }
  func.func @transform_10(%arg0: i32, %arg1: i32) -> (i32, i32, i32) {
    %c0_i32 = arith.constant 0 : i32
    %c0_i32_0 = arith.constant 0 : i32
    %c0_i32_1 = arith.constant 0 : i32
    return %arg1, %c0_i32, %c0_i32_0 : i32, i32, i32
  }
  func.func @transform_11(%arg0: i32, %arg1: i32) -> (i32, i32, i32) {
    %c0_i32 = arith.constant 0 : i32
    %c0_i32_0 = arith.constant 0 : i32
    %c0_i32_1 = arith.constant 0 : i32
    return %arg1, %c0_i32, %c0_i32_0 : i32, i32, i32
  }
  func.func @transform_12(%arg0: i32, %arg1: i32) -> (i32, i32, i32) {
    %c0_i32 = arith.constant 0 : i32
    %c0_i32_0 = arith.constant 0 : i32
    %c0_i32_1 = arith.constant 0 : i32
    return %arg1, %c0_i32, %c0_i32_0 : i32, i32, i32
  }
  func.func @transform_13(%arg0: i32, %arg1: i32) -> (i32, i32, i32) {
    %c0_i32 = arith.constant 0 : i32
    %c0_i32_0 = arith.constant 0 : i32
    %c0_i32_1 = arith.constant 0 : i32
    return %arg1, %c0_i32, %c0_i32_0 : i32, i32, i32
  }
  func.func @transform_14(%arg0: i32, %arg1: i32) -> (i32, i32, i32) {
    %c0_i32 = arith.constant 0 : i32
    %c0_i32_0 = arith.constant 0 : i32
    %c0_i32_1 = arith.constant 0 : i32
    return %arg1, %c0_i32, %c0_i32_0 : i32, i32, i32
  }
  func.func @transform_15(%arg0: i32, %arg1: i32) -> (i32, i32) {
    %c0_i32 = arith.constant 0 : i32
    %c0_i32_0 = arith.constant 0 : i32
    %c0_i32_1 = arith.constant 0 : i32
    return %c0_i32, %c0_i32_0 : i32, i32
  }
  func.func @transform_16(%arg0: i32, %arg1: i32) -> (i32, i32) {
    %c0_i32 = arith.constant 0 : i32
    %c0_i32_0 = arith.constant 0 : i32
    %c0_i32_1 = arith.constant 0 : i32
    return %c0_i32, %c0_i32_0 : i32, i32
  }
  func.func @transform_17(%arg0: i32, %arg1: i32) -> (i32, i32) {
    %c0_i32 = arith.constant 0 : i32
    %c0_i32_0 = arith.constant 0 : i32
    %c0_i32_1 = arith.constant 0 : i32
    return %c0_i32, %c0_i32_0 : i32, i32
  }
  func.func @transform_18(%arg0: i32, %arg1: i32) -> (i32, i32) {
    %c0_i32 = arith.constant 0 : i32
    %c0_i32_0 = arith.constant 0 : i32
    %c0_i32_1 = arith.constant 0 : i32
    return %c0_i32, %c0_i32_0 : i32, i32
  }
  func.func @transform_19(%arg0: i32, %arg1: i32) -> (i32, i32) {
    %c0_i32 = arith.constant 0 : i32
    %c0_i32_0 = arith.constant 0 : i32
    %c0_i32_1 = arith.constant 0 : i32
    return %c0_i32, %c0_i32_0 : i32, i32
  }
  func.func @transform_20(%arg0: i32, %arg1: i32) -> (i32, i32) {
    %c0_i32 = arith.constant 0 : i32
    %c0_i32_0 = arith.constant 0 : i32
    %c0_i32_1 = arith.constant 0 : i32
    return %c0_i32, %c0_i32_0 : i32, i32
  }
  func.func @transform_21(%arg0: i32, %arg1: i32) -> (i32, i32) {
    %c0_i32 = arith.constant 0 : i32
    %c0_i32_0 = arith.constant 0 : i32
    %c0_i32_1 = arith.constant 0 : i32
    return %c0_i32, %c0_i32_0 : i32, i32
  }
  func.func @transform_22(%arg0: i32, %arg1: i32) -> (i32, i32) {
    %c0_i32 = arith.constant 0 : i32
    %c0_i32_0 = arith.constant 0 : i32
    %c0_i32_1 = arith.constant 0 : i32
    return %c0_i32, %c0_i32_0 : i32, i32
  }
  func.func @transform_23(%arg0: i32, %arg1: i32) -> (i32, i32, i32) {
    %c0_i32 = arith.constant 0 : i32
    %c0_i32_0 = arith.constant 0 : i32
    %c0_i32_1 = arith.constant 0 : i32
    return %arg0, %c0_i32, %c0_i32_0 : i32, i32, i32
  }
  func.func @transform_24(%arg0: i32, %arg1: i32) -> (i32, i32, i32) {
    %c0_i32 = arith.constant 0 : i32
    %c0_i32_0 = arith.constant 0 : i32
    %c0_i32_1 = arith.constant 0 : i32
    return %arg0, %c0_i32, %c0_i32_0 : i32, i32, i32
  }
  func.func @transform_25(%arg0: i32, %arg1: i32) -> (i32, i32, i32) {
    %c0_i32 = arith.constant 0 : i32
    %c0_i32_0 = arith.constant 0 : i32
    %c0_i32_1 = arith.constant 0 : i32
    return %arg0, %c0_i32, %c0_i32_0 : i32, i32, i32
  }
}

</mosaic_0001>

<llo_original>
// kernel: my_adapted_bert_forward.1
$region0: #{my_adapted_bert_forward.1}
  #allocation0 [shape = 'u32[]', space=smem, size = 0x4, offset = 0x4, fixed_abs, tag = 'smem constant byte address 0x4 - core index']
  #allocation1 [shape = 'u32[144,128]{1,0:T(1,128)}', space=vmem, size = 0x12000, scoped, tag = 'internal scratch']
  #allocation2 [shape = 'f32[8,256]{1,0:T(8,128)}', space=vmem, size = 0x2000, scoped, tag = 'scratch operand']
  %s0 = inlined_call_operand.vmem [shape: f32[2,8,256], index: 0, kind: input, shape index: {}]
  %s1 = inlined_call_operand.vmem [shape: f32[1,256], index: 1, kind: input, shape index: {}]
  %s2 = inlined_call_operand.vmem [shape: f32[1,256], index: 2, kind: input, shape index: {}]
  %s3 = inlined_call_operand.hbm [shape: bf16[2,768,256], index: 3, kind: input, shape index: {}]
  %s4 = inlined_call_operand.vmem [shape: f32[2,1,768], index: 4, kind: input, shape index: {}]
  %s5 = inlined_call_operand.hbm [shape: bf16[2,256,256], index: 5, kind: input, shape index: {}]
  %s6 = inlined_call_operand.vmem [shape: f32[2,1,256], index: 6, kind: input, shape index: {}]
  %s7 = inlined_call_operand.vmem [shape: f32[2,1,256], index: 7, kind: input, shape index: {}]
  %s8 = inlined_call_operand.vmem [shape: f32[2,1,256], index: 8, kind: input, shape index: {}]
  %s9 = inlined_call_operand.hbm [shape: bf16[2,512,256], index: 9, kind: input, shape index: {}]
  %s10 = inlined_call_operand.vmem [shape: f32[2,1,512], index: 10, kind: input, shape index: {}]
  %s11 = inlined_call_operand.hbm [shape: bf16[2,256,512], index: 11, kind: input, shape index: {}]
  %s12 = inlined_call_operand.vmem [shape: f32[2,1,256], index: 12, kind: input, shape index: {}]
  %s13 = inlined_call_operand.vmem [shape: f32[2,1,256], index: 13, kind: input, shape index: {}]
  %s14 = inlined_call_operand.vmem [shape: f32[2,1,256], index: 14, kind: input, shape index: {}]
  %s15 = inlined_call_operand.vmem [shape: bf16[256,256], index: 15, kind: input, shape index: {}]
  %s16 = inlined_call_operand.vmem [shape: f32[1,256], index: 16, kind: input, shape index: {}]
  %s17 = inlined_call_operand.vmem [shape: f32[1,256], index: 17, kind: input, shape index: {}]
  %s18 = inlined_call_operand.vmem [shape: f32[1,256], index: 18, kind: input, shape index: {}]
  %s19 = inlined_call_operand.vmem [shape: f32[1,256], index: 19, kind: input, shape index: {}]
  %s20 = inlined_call_operand.vmem [shape: f32[1,256], index: 20, kind: input, shape index: {}]
  %s21 = inlined_call_operand.vmem [shape: bf16[128,256], index: 21, kind: input, shape index: {}]
  %s22 = inlined_call_operand.vmem [shape: f32[1,128], index: 22, kind: input, shape index: {}]
  %s23 = inlined_call_operand.vmem [shape: f32[2,1,256], index: 23, kind: output, shape index: {0}]
  %s24 = inlined_call_operand.vmem [shape: f32[2,1,256], index: 24, kind: output, shape index: {1}]
  %s25 = inlined_call_operand.hbm [shape: f32[2,1,128], index: 25, kind: output, shape index: {2}]
  %26 = xla_tuple %s23, %s24, %s25
  %s27 = sld [smem:[#allocation0]]
  $region165: #{my_adapted_bert_forward.1} parent=0
    _
  %s29 = ssub.s32 1, %s27
  %s30 = scalar_select 0, %s29, %s27
  $region1: #{my_adapted_bert_forward.1} parent=0
    #allocation3 [shape = 'u8[786432]{0}', space=vmem, size = 0xc0000, scoped, tag = 'input window, operand 3']
    #allocation4 [shape = 's32[2]{0}', space=sflag, size = 0x8, scoped, tag = 'scoped memory for my_adapted_bert_forward.1']
    #allocation5 [shape = 's32[2]{0}', space=sflag, size = 0x8, scoped, tag = 'scoped memory for my_adapted_bert_forward.1']
    #allocation6 [shape = 'u8[262144]{0}', space=vmem, size = 0x40000, scoped, tag = 'input window, operand 5']
    #allocation7 [shape = 's32[2]{0}', space=sflag, size = 0x8, scoped, tag = 'scoped memory for my_adapted_bert_forward.1']
    #allocation8 [shape = 'u8[524288]{0}', space=vmem, size = 0x80000, scoped, tag = 'input window, operand 9']
    #allocation9 [shape = 'u8[524288]{0}', space=vmem, size = 0x80000, scoped, tag = 'input window, operand 11']
    #allocation10 [shape = 's32[2]{0}', space=sflag, size = 0x8, scoped, tag = 'scoped memory for my_adapted_bert_forward.1']
    #allocation11 [shape = 'u8[1024]{0}', space=vmem, size = 0x400, scoped, tag = 'output window, operand 2']
    %31 = vsyncpa [#allocation4], 0
    %s32 = scalar_lea.sflag [#allocation4], 1
    %33 = vsyncpa %s32, 0
    %34 = vsyncpa [#allocation7], 0
    %s35 = scalar_lea.sflag [#allocation7], 1
    %36 = vsyncpa %s35, 0
    %37 = vsyncpa [#allocation10], 0
    %s38 = scalar_lea.sflag [#allocation10], 1
    %39 = vsyncpa %s38, 0
    %40 = vsyncpa [#allocation5], 0
    %s41 = scalar_lea.sflag [#allocation5], 1
    %42 = vsyncpa %s41, 0
    loop: start=0, step=1, limit=6
    $region2: #{my_adapted_bert_forward.1} parent=1 // loop_pre_header
      _
    $region3: #{my_adapted_bert_forward.1} parent=1 // loop_header
      %s44 = sphi 0, %s48
      %p45 = scmp.ge.s32.totalorder %s44, 6
      %s51 = sphi 0, %s63
      %s52 = sphi 0, %s59
      %s53 = sphi 0, %s51
      %s54 = sphi 0, %s52
      %s55 = sphi 0, %s53
      %s56 = sphi 0, %s54
      %s66 = sphi 0, %s68
      %s69 = sphi 0, %s66
      %s70 = sphi 0, %s69
      %s86 = sphi 0, %s70
      %s90 = sphi 0, %s90
      %s92 = sphi 0, %s90
      %s93 = sphi 0, %s92
      %s107 = sphi 0, %s93
      %s111 = sphi 0, %s111
      %s113 = sphi 0, %s111
      %s114 = sphi 0, %s113
      %s128 = sphi 0, %s114
      %s134 = sphi 0, %s136
      %s137 = sphi 0, %s134
      %s138 = sphi 0, %s137
      %s154 = sphi 0, %s138
      %s160 = sphi 0, %s162
      %s163 = sphi 0, %s160
      %s164 = sphi 0, %s163
      %s180 = sphi 0, %s164
      %s186 = sphi 0, %s188
      %s189 = sphi 0, %s186
      %s190 = sphi 0, %s189
      %s206 = sphi 0, %s190
      %s212 = sphi 0, %s214
      %s215 = sphi 0, %s212
      %s216 = sphi 0, %s215
      %s232 = sphi 0, %s216
      %s238 = sphi 0, %s240
      %s241 = sphi 0, %s238
      %s242 = sphi 0, %s241
      %s258 = sphi 0, %s242
      %s264 = sphi 0, %s266
      %s267 = sphi 0, %s264
      %s268 = sphi 0, %s267
      %s284 = sphi 0, %s268
      %s290 = sphi 0, %s292
      %s293 = sphi 0, %s290
      %s294 = sphi 0, %s293
      %s310 = sphi 0, %s294
      %s316 = sphi 0, %s318
      %s319 = sphi 0, %s316
      %s320 = sphi 0, %s319
      %s336 = sphi 0, %s320
      %s342 = sphi 0, %s344
      %s345 = sphi 0, %s342
      %s346 = sphi 0, %s345
      %s362 = sphi 0, %s346
      %s368 = sphi 0, %s370
      %s371 = sphi 0, %s368
      %s372 = sphi 0, %s371
      %s388 = sphi 0, %s372
      %s394 = sphi 0, %s396
      %s397 = sphi 0, %s394
      %s398 = sphi 0, %s397
      %s414 = sphi 0, %s398
      %s420 = sphi 0, %s422
      %s423 = sphi 0, %s420
      %s424 = sphi 0, %s423
      %s440 = sphi 0, %s424
      %s444 = sphi 0, %s444
      %s446 = sphi 0, %s444
      %s447 = sphi 0, %s446
      %s461 = sphi 0, %s447
      %s465 = sphi 0, %s465
      %s467 = sphi 0, %s465
      %s468 = sphi 0, %s467
      %s482 = sphi 0, %s468
      %s486 = sphi 0, %s486
      %s488 = sphi 0, %s486
      %s489 = sphi 0, %s488
      %s503 = sphi 0, %s489
      %s507 = sphi 0, %s507
      %s509 = sphi 0, %s507
      %s510 = sphi 0, %s509
      %s524 = sphi 0, %s510
      %s528 = sphi 0, %s528
      %s530 = sphi 0, %s528
      %s531 = sphi 0, %s530
      %s545 = sphi 0, %s531
      %s549 = sphi 0, %s549
      %s551 = sphi 0, %s549
      %s552 = sphi 0, %s551
      %s566 = sphi 0, %s552
      %s570 = sphi 0, %s570
      %s572 = sphi 0, %s570
      %s573 = sphi 0, %s572
      %s587 = sphi 0, %s573
      %s591 = sphi 0, %s591
      %s593 = sphi 0, %s591
      %s594 = sphi 0, %s593
      %s608 = sphi 0, %s594
      %s614 = sphi 0, %s616
      %s617 = sphi 0, %s614
      %s618 = sphi 0, %s617
      %s634 = sphi 0, %s618
      %s640 = sphi 0, %s642
      %s643 = sphi 0, %s640
      %s644 = sphi 0, %s643
      %s660 = sphi 0, %s644
      %s666 = sphi 0, %s668
      %s669 = sphi 0, %s666
      %s670 = sphi 0, %s669
      %s686 = sphi 0, %s670
    $region4: #{my_adapted_bert_forward.1} parent=1 // loop_header_branch
      %47 = sbr.rel (%p45) target = $region8
    $region5: #{my_adapted_bert_forward.1} parent=1 // loop_body
      %s49 = ssub.s32 %s44, 1
      %s50 = ssub.s32 %s44, 2
      %s57 = sadd.s32 1, %s52
      %p58 = scmp.ge.s32.totalorder %s57, 2
      %s59 = scalar_select %p58, 0, %s57
      %s60 = sadd.s32 1, %s51
      %s61 = scalar_select %p58, %s60, %s51
      %p62 = scmp.ge.s32.totalorder %s61, 2
      %s63 = scalar_select %p62, 0, %s61
      %s64 = ssub.s32 %s51, %s63
      %p65 = scmp.eq.s32.totalorder %s64, 0
      %s67 = sadd.s32 %s66, 1
      %s68 = scalar_select %p65, %s66, %s67
      %p71 = pneg %p65
      %p72 = scmp.eq.s32.totalorder %s44, 3
      %p73 = por %p71, %p72
      %p74 = scmp.ne.s32.totalorder %s66, %s69
      %p75 = scmp.eq.s32.totalorder %s44, 0
      %p76 = por %p74, %p75
      %p77 = scmp.ne.s32.totalorder %s66, %s69
      %p78 = scmp.eq.s32.totalorder %s49, 3
      %p79 = por %p77, %p78
      %p80 = scmp.ne.s32.totalorder %s69, %s70
      %p81 = scmp.eq.s32.totalorder %s49, 0
      %p82 = por %p80, %p81
      %p83 = scmp.ne.s32.totalorder %s69, %s70
      %p84 = scmp.eq.s32.totalorder %s50, 3
      %p85 = por %p83, %p84
      %p87 = scmp.ne.s32.totalorder %s70, %s86
      %p88 = scmp.eq.s32.totalorder %s50, 0
      %p89 = por %p87, %p88
      %s91 = sadd.s32 %s90, 1
      %p94 = scmp.eq.s32.totalorder %s44, 3
      %p95 = scmp.ne.s32.totalorder %s90, %s92
      %p96 = scmp.eq.s32.totalorder %s44, 0
      %p97 = por %p95, %p96
      %p98 = scmp.ne.s32.totalorder %s90, %s92
      %p99 = scmp.eq.s32.totalorder %s49, 3
      %p100 = por %p98, %p99
      %p101 = scmp.ne.s32.totalorder %s92, %s93
      %p102 = scmp.eq.s32.totalorder %s49, 0
      %p103 = por %p101, %p102
      %p104 = scmp.ne.s32.totalorder %s92, %s93
      %p105 = scmp.eq.s32.totalorder %s50, 3
      %p106 = por %p104, %p105
      %p108 = scmp.ne.s32.totalorder %s93, %s107
      %p109 = scmp.eq.s32.totalorder %s50, 0
      %p110 = por %p108, %p109
      %s112 = sadd.s32 %s111, 1
      %p115 = scmp.eq.s32.totalorder %s44, 3
      %p116 = scmp.ne.s32.totalorder %s111, %s113
      %p117 = scmp.eq.s32.totalorder %s44, 0
      %p118 = por %p116, %p117
      %p119 = scmp.ne.s32.totalorder %s111, %s113
      %p120 = scmp.eq.s32.totalorder %s49, 3
      %p121 = por %p119, %p120
      %p122 = scmp.ne.s32.totalorder %s113, %s114
      %p123 = scmp.eq.s32.totalorder %s49, 0
      %p124 = por %p122, %p123
      %p125 = scmp.ne.s32.totalorder %s113, %s114
      %p126 = scmp.eq.s32.totalorder %s50, 3
      %p127 = por %p125, %p126
      %p129 = scmp.ne.s32.totalorder %s114, %s128
      %p130 = scmp.eq.s32.totalorder %s50, 0
      %p131 = por %p129, %p130
      %s132 = ssub.s32 %s52, %s59
      %p133 = scmp.eq.s32.totalorder %s132, 0
      %s135 = sadd.s32 %s134, 1
      %s136 = scalar_select %p133, %s134, %s135
      %p139 = pneg %p133
      %p140 = scmp.eq.s32.totalorder %s44, 3
      %p141 = por %p139, %p140
      %p142 = scmp.ne.s32.totalorder %s134, %s137
      %p143 = scmp.eq.s32.totalorder %s44, 0
      %p144 = por %p142, %p143
      %p145 = scmp.ne.s32.totalorder %s134, %s137
      %p146 = scmp.eq.s32.totalorder %s49, 3
      %p147 = por %p145, %p146
      %p148 = scmp.ne.s32.totalorder %s137, %s138
      %p149 = scmp.eq.s32.totalorder %s49, 0
      %p150 = por %p148, %p149
      %p151 = scmp.ne.s32.totalorder %s137, %s138
      %p152 = scmp.eq.s32.totalorder %s50, 3
      %p153 = por %p151, %p152
      %p155 = scmp.ne.s32.totalorder %s138, %s154
      %p156 = scmp.eq.s32.totalorder %s50, 0
      %p157 = por %p155, %p156
      %s158 = ssub.s32 %s52, %s59
      %p159 = scmp.eq.s32.totalorder %s158, 0
      %s161 = sadd.s32 %s160, 1
      %s162 = scalar_select %p159, %s160, %s161
      %p165 = pneg %p159
      %p166 = scmp.eq.s32.totalorder %s44, 3
      %p167 = por %p165, %p166
      %p168 = scmp.ne.s32.totalorder %s160, %s163
      %p169 = scmp.eq.s32.totalorder %s44, 0
      %p170 = por %p168, %p169
      %p171 = scmp.ne.s32.totalorder %s160, %s163
      %p172 = scmp.eq.s32.totalorder %s49, 3
      %p173 = por %p171, %p172
      %p174 = scmp.ne.s32.totalorder %s163, %s164
      %p175 = scmp.eq.s32.totalorder %s49, 0
      %p176 = por %p174, %p175
      %p177 = scmp.ne.s32.totalorder %s163, %s164
      %p178 = scmp.eq.s32.totalorder %s50, 3
      %p179 = por %p177, %p178
      %p181 = scmp.ne.s32.totalorder %s164, %s180
      %p182 = scmp.eq.s32.totalorder %s50, 0
      %p183 = por %p181, %p182
      %s184 = ssub.s32 %s52, %s59
      %p185 = scmp.eq.s32.totalorder %s184, 0
      %s187 = sadd.s32 %s186, 1
      %s188 = scalar_select %p185, %s186, %s187
      %p191 = pneg %p185
      %p192 = scmp.eq.s32.totalorder %s44, 3
      %p193 = por %p191, %p192
      %p194 = scmp.ne.s32.totalorder %s186, %s189
      %p195 = scmp.eq.s32.totalorder %s44, 0
      %p196 = por %p194, %p195
      %p197 = scmp.ne.s32.totalorder %s186, %s189
      %p198 = scmp.eq.s32.totalorder %s49, 3
      %p199 = por %p197, %p198
      %p200 = scmp.ne.s32.totalorder %s189, %s190
      %p201 = scmp.eq.s32.totalorder %s49, 0
      %p202 = por %p200, %p201
      %p203 = scmp.ne.s32.totalorder %s189, %s190
      %p204 = scmp.eq.s32.totalorder %s50, 3
      %p205 = por %p203, %p204
      %p207 = scmp.ne.s32.totalorder %s190, %s206
      %p208 = scmp.eq.s32.totalorder %s50, 0
      %p209 = por %p207, %p208
      %s210 = ssub.s32 %s52, %s59
      %p211 = scmp.eq.s32.totalorder %s210, 0
      %s213 = sadd.s32 %s212, 1
      %s214 = scalar_select %p211, %s212, %s213
      %p217 = pneg %p211
      %p218 = scmp.eq.s32.totalorder %s44, 3
      %p219 = por %p217, %p218
      %p220 = scmp.ne.s32.totalorder %s212, %s215
      %p221 = scmp.eq.s32.totalorder %s44, 0
      %p222 = por %p220, %p221
      %p223 = scmp.ne.s32.totalorder %s212, %s215
      %p224 = scmp.eq.s32.totalorder %s49, 3
      %p225 = por %p223, %p224
      %p226 = scmp.ne.s32.totalorder %s215, %s216
      %p227 = scmp.eq.s32.totalorder %s49, 0
      %p228 = por %p226, %p227
      %p229 = scmp.ne.s32.totalorder %s215, %s216
      %p230 = scmp.eq.s32.totalorder %s50, 3
      %p231 = por %p229, %p230
      %p233 = scmp.ne.s32.totalorder %s216, %s232
      %p234 = scmp.eq.s32.totalorder %s50, 0
      %p235 = por %p233, %p234
      %s236 = ssub.s32 %s52, %s59
      %p237 = scmp.eq.s32.totalorder %s236, 0
      %s239 = sadd.s32 %s238, 1
      %s240 = scalar_select %p237, %s238, %s239
      %p243 = pneg %p237
      %p244 = scmp.eq.s32.totalorder %s44, 3
      %p245 = por %p243, %p244
      %p246 = scmp.ne.s32.totalorder %s238, %s241
      %p247 = scmp.eq.s32.totalorder %s44, 0
      %p248 = por %p246, %p247
      %p249 = scmp.ne.s32.totalorder %s238, %s241
      %p250 = scmp.eq.s32.totalorder %s49, 3
      %p251 = por %p249, %p250
      %p252 = scmp.ne.s32.totalorder %s241, %s242
      %p253 = scmp.eq.s32.totalorder %s49, 0
      %p254 = por %p252, %p253
      %p255 = scmp.ne.s32.totalorder %s241, %s242
      %p256 = scmp.eq.s32.totalorder %s50, 3
      %p257 = por %p255, %p256
      %p259 = scmp.ne.s32.totalorder %s242, %s258
      %p260 = scmp.eq.s32.totalorder %s50, 0
      %p261 = por %p259, %p260
      %s262 = ssub.s32 %s52, %s59
      %p263 = scmp.eq.s32.totalorder %s262, 0
      %s265 = sadd.s32 %s264, 1
      %s266 = scalar_select %p263, %s264, %s265
      %p269 = pneg %p263
      %p270 = scmp.eq.s32.totalorder %s44, 3
      %p271 = por %p269, %p270
      %p272 = scmp.ne.s32.totalorder %s264, %s267
      %p273 = scmp.eq.s32.totalorder %s44, 0
      %p274 = por %p272, %p273
      %p275 = scmp.ne.s32.totalorder %s264, %s267
      %p276 = scmp.eq.s32.totalorder %s49, 3
      %p277 = por %p275, %p276
      %p278 = scmp.ne.s32.totalorder %s267, %s268
      %p279 = scmp.eq.s32.totalorder %s49, 0
      %p280 = por %p278, %p279
      %p281 = scmp.ne.s32.totalorder %s267, %s268
      %p282 = scmp.eq.s32.totalorder %s50, 3
      %p283 = por %p281, %p282
      %p285 = scmp.ne.s32.totalorder %s268, %s284
      %p286 = scmp.eq.s32.totalorder %s50, 0
      %p287 = por %p285, %p286
      %s288 = ssub.s32 %s52, %s59
      %p289 = scmp.eq.s32.totalorder %s288, 0
      %s291 = sadd.s32 %s290, 1
      %s292 = scalar_select %p289, %s290, %s291
      %p295 = pneg %p289
      %p296 = scmp.eq.s32.totalorder %s44, 3
      %p297 = por %p295, %p296
      %p298 = scmp.ne.s32.totalorder %s290, %s293
      %p299 = scmp.eq.s32.totalorder %s44, 0
      %p300 = por %p298, %p299
      %p301 = scmp.ne.s32.totalorder %s290, %s293
      %p302 = scmp.eq.s32.totalorder %s49, 3
      %p303 = por %p301, %p302
      %p304 = scmp.ne.s32.totalorder %s293, %s294
      %p305 = scmp.eq.s32.totalorder %s49, 0
      %p306 = por %p304, %p305
      %p307 = scmp.ne.s32.totalorder %s293, %s294
      %p308 = scmp.eq.s32.totalorder %s50, 3
      %p309 = por %p307, %p308
      %p311 = scmp.ne.s32.totalorder %s294, %s310
      %p312 = scmp.eq.s32.totalorder %s50, 0
      %p313 = por %p311, %p312
      %s314 = ssub.s32 %s52, %s59
      %p315 = scmp.eq.s32.totalorder %s314, 0
      %s317 = sadd.s32 %s316, 1
      %s318 = scalar_select %p315, %s316, %s317
      %p321 = pneg %p315
      %p322 = scmp.eq.s32.totalorder %s44, 3
      %p323 = por %p321, %p322
      %p324 = scmp.ne.s32.totalorder %s316, %s319
      %p325 = scmp.eq.s32.totalorder %s44, 0
      %p326 = por %p324, %p325
      %p327 = scmp.ne.s32.totalorder %s316, %s319
      %p328 = scmp.eq.s32.totalorder %s49, 3
      %p329 = por %p327, %p328
      %p330 = scmp.ne.s32.totalorder %s319, %s320
      %p331 = scmp.eq.s32.totalorder %s49, 0
      %p332 = por %p330, %p331
      %p333 = scmp.ne.s32.totalorder %s319, %s320
      %p334 = scmp.eq.s32.totalorder %s50, 3
      %p335 = por %p333, %p334
      %p337 = scmp.ne.s32.totalorder %s320, %s336
      %p338 = scmp.eq.s32.totalorder %s50, 0
      %p339 = por %p337, %p338
      %s340 = ssub.s32 %s52, %s59
      %p341 = scmp.eq.s32.totalorder %s340, 0
      %s343 = sadd.s32 %s342, 1
      %s344 = scalar_select %p341, %s342, %s343
      %p347 = pneg %p341
      %p348 = scmp.eq.s32.totalorder %s44, 3
      %p349 = por %p347, %p348
      %p350 = scmp.ne.s32.totalorder %s342, %s345
      %p351 = scmp.eq.s32.totalorder %s44, 0
      %p352 = por %p350, %p351
      %p353 = scmp.ne.s32.totalorder %s342, %s345
      %p354 = scmp.eq.s32.totalorder %s49, 3
      %p355 = por %p353, %p354
      %p356 = scmp.ne.s32.totalorder %s345, %s346
      %p357 = scmp.eq.s32.totalorder %s49, 0
      %p358 = por %p356, %p357
      %p359 = scmp.ne.s32.totalorder %s345, %s346
      %p360 = scmp.eq.s32.totalorder %s50, 3
      %p361 = por %p359, %p360
      %p363 = scmp.ne.s32.totalorder %s346, %s362
      %p364 = scmp.eq.s32.totalorder %s50, 0
      %p365 = por %p363, %p364
      %s366 = ssub.s32 %s52, %s59
      %p367 = scmp.eq.s32.totalorder %s366, 0
      %s369 = sadd.s32 %s368, 1
      %s370 = scalar_select %p367, %s368, %s369
      %p373 = pneg %p367
      %p374 = scmp.eq.s32.totalorder %s44, 3
      %p375 = por %p373, %p374
      %p376 = scmp.ne.s32.totalorder %s368, %s371
      %p377 = scmp.eq.s32.totalorder %s44, 0
      %p378 = por %p376, %p377
      %p379 = scmp.ne.s32.totalorder %s368, %s371
      %p380 = scmp.eq.s32.totalorder %s49, 3
      %p381 = por %p379, %p380
      %p382 = scmp.ne.s32.totalorder %s371, %s372
      %p383 = scmp.eq.s32.totalorder %s49, 0
      %p384 = por %p382, %p383
      %p385 = scmp.ne.s32.totalorder %s371, %s372
      %p386 = scmp.eq.s32.totalorder %s50, 3
      %p387 = por %p385, %p386
      %p389 = scmp.ne.s32.totalorder %s372, %s388
      %p390 = scmp.eq.s32.totalorder %s50, 0
      %p391 = por %p389, %p390
      %s392 = ssub.s32 %s52, %s59
      %p393 = scmp.eq.s32.totalorder %s392, 0
      %s395 = sadd.s32 %s394, 1
      %s396 = scalar_select %p393, %s394, %s395
      %p399 = pneg %p393
      %p400 = scmp.eq.s32.totalorder %s44, 3
      %p401 = por %p399, %p400
      %p402 = scmp.ne.s32.totalorder %s394, %s397
      %p403 = scmp.eq.s32.totalorder %s44, 0
      %p404 = por %p402, %p403
      %p405 = scmp.ne.s32.totalorder %s394, %s397
      %p406 = scmp.eq.s32.totalorder %s49, 3
      %p407 = por %p405, %p406
      %p408 = scmp.ne.s32.totalorder %s397, %s398
      %p409 = scmp.eq.s32.totalorder %s49, 0
      %p410 = por %p408, %p409
      %p411 = scmp.ne.s32.totalorder %s397, %s398
      %p412 = scmp.eq.s32.totalorder %s50, 3
      %p413 = por %p411, %p412
      %p415 = scmp.ne.s32.totalorder %s398, %s414
      %p416 = scmp.eq.s32.totalorder %s50, 0
      %p417 = por %p415, %p416
      %s418 = ssub.s32 %s52, %s59
      %p419 = scmp.eq.s32.totalorder %s418, 0
      %s421 = sadd.s32 %s420, 1
      %s422 = scalar_select %p419, %s420, %s421
      %p425 = pneg %p419
      %p426 = scmp.eq.s32.totalorder %s44, 3
      %p427 = por %p425, %p426
      %p428 = scmp.ne.s32.totalorder %s420, %s423
      %p429 = scmp.eq.s32.totalorder %s44, 0
      %p430 = por %p428, %p429
      %p431 = scmp.ne.s32.totalorder %s420, %s423
      %p432 = scmp.eq.s32.totalorder %s49, 3
      %p433 = por %p431, %p432
      %p434 = scmp.ne.s32.totalorder %s423, %s424
      %p435 = scmp.eq.s32.totalorder %s49, 0
      %p436 = por %p434, %p435
      %p437 = scmp.ne.s32.totalorder %s423, %s424
      %p438 = scmp.eq.s32.totalorder %s50, 3
      %p439 = por %p437, %p438
      %p441 = scmp.ne.s32.totalorder %s424, %s440
      %p442 = scmp.eq.s32.totalorder %s50, 0
      %p443 = por %p441, %p442
      %s445 = sadd.s32 %s444, 1
      %p448 = scmp.eq.s32.totalorder %s44, 3
      %p449 = scmp.ne.s32.totalorder %s444, %s446
      %p450 = scmp.eq.s32.totalorder %s44, 0
      %p451 = por %p449, %p450
      %p452 = scmp.ne.s32.totalorder %s444, %s446
      %p453 = scmp.eq.s32.totalorder %s49, 3
      %p454 = por %p452, %p453
      %p455 = scmp.ne.s32.totalorder %s446, %s447
      %p456 = scmp.eq.s32.totalorder %s49, 0
      %p457 = por %p455, %p456
      %p458 = scmp.ne.s32.totalorder %s446, %s447
      %p459 = scmp.eq.s32.totalorder %s50, 3
      %p460 = por %p458, %p459
      %p462 = scmp.ne.s32.totalorder %s447, %s461
      %p463 = scmp.eq.s32.totalorder %s50, 0
      %p464 = por %p462, %p463
      %s466 = sadd.s32 %s465, 1
      %p469 = scmp.eq.s32.totalorder %s44, 3
      %p470 = scmp.ne.s32.totalorder %s465, %s467
      %p471 = scmp.eq.s32.totalorder %s44, 0
      %p472 = por %p470, %p471
      %p473 = scmp.ne.s32.totalorder %s465, %s467
      %p474 = scmp.eq.s32.totalorder %s49, 3
      %p475 = por %p473, %p474
      %p476 = scmp.ne.s32.totalorder %s467, %s468
      %p477 = scmp.eq.s32.totalorder %s49, 0
      %p478 = por %p476, %p477
      %p479 = scmp.ne.s32.totalorder %s467, %s468
      %p480 = scmp.eq.s32.totalorder %s50, 3
      %p481 = por %p479, %p480
      %p483 = scmp.ne.s32.totalorder %s468, %s482
      %p484 = scmp.eq.s32.totalorder %s50, 0
      %p485 = por %p483, %p484
      %s487 = sadd.s32 %s486, 1
      %p490 = scmp.eq.s32.totalorder %s44, 3
      %p491 = scmp.ne.s32.totalorder %s486, %s488
      %p492 = scmp.eq.s32.totalorder %s44, 0
      %p493 = por %p491, %p492
      %p494 = scmp.ne.s32.totalorder %s486, %s488
      %p495 = scmp.eq.s32.totalorder %s49, 3
      %p496 = por %p494, %p495
      %p497 = scmp.ne.s32.totalorder %s488, %s489
      %p498 = scmp.eq.s32.totalorder %s49, 0
      %p499 = por %p497, %p498
      %p500 = scmp.ne.s32.totalorder %s488, %s489
      %p501 = scmp.eq.s32.totalorder %s50, 3
      %p502 = por %p500, %p501
      %p504 = scmp.ne.s32.totalorder %s489, %s503
      %p505 = scmp.eq.s32.totalorder %s50, 0
      %p506 = por %p504, %p505
      %s508 = sadd.s32 %s507, 1
      %p511 = scmp.eq.s32.totalorder %s44, 3
      %p512 = scmp.ne.s32.totalorder %s507, %s509
      %p513 = scmp.eq.s32.totalorder %s44, 0
      %p514 = por %p512, %p513
      %p515 = scmp.ne.s32.totalorder %s507, %s509
      %p516 = scmp.eq.s32.totalorder %s49, 3
      %p517 = por %p515, %p516
      %p518 = scmp.ne.s32.totalorder %s509, %s510
      %p519 = scmp.eq.s32.totalorder %s49, 0
      %p520 = por %p518, %p519
      %p521 = scmp.ne.s32.totalorder %s509, %s510
      %p522 = scmp.eq.s32.totalorder %s50, 3
      %p523 = por %p521, %p522
      %p525 = scmp.ne.s32.totalorder %s510, %s524
      %p526 = scmp.eq.s32.totalorder %s50, 0
      %p527 = por %p525, %p526
      %s529 = sadd.s32 %s528, 1
      %p532 = scmp.eq.s32.totalorder %s44, 3
      %p533 = scmp.ne.s32.totalorder %s528, %s530
      %p534 = scmp.eq.s32.totalorder %s44, 0
      %p535 = por %p533, %p534
      %p536 = scmp.ne.s32.totalorder %s528, %s530
      %p537 = scmp.eq.s32.totalorder %s49, 3
      %p538 = por %p536, %p537
      %p539 = scmp.ne.s32.totalorder %s530, %s531
      %p540 = scmp.eq.s32.totalorder %s49, 0
      %p541 = por %p539, %p540
      %p542 = scmp.ne.s32.totalorder %s530, %s531
      %p543 = scmp.eq.s32.totalorder %s50, 3
      %p544 = por %p542, %p543
      %p546 = scmp.ne.s32.totalorder %s531, %s545
      %p547 = scmp.eq.s32.totalorder %s50, 0
      %p548 = por %p546, %p547
      %s550 = sadd.s32 %s549, 1
      %p553 = scmp.eq.s32.totalorder %s44, 3
      %p554 = scmp.ne.s32.totalorder %s549, %s551
      %p555 = scmp.eq.s32.totalorder %s44, 0
      %p556 = por %p554, %p555
      %p557 = scmp.ne.s32.totalorder %s549, %s551
      %p558 = scmp.eq.s32.totalorder %s49, 3
      %p559 = por %p557, %p558
      %p560 = scmp.ne.s32.totalorder %s551, %s552
      %p561 = scmp.eq.s32.totalorder %s49, 0
      %p562 = por %p560, %p561
      %p563 = scmp.ne.s32.totalorder %s551, %s552
      %p564 = scmp.eq.s32.totalorder %s50, 3
      %p565 = por %p563, %p564
      %p567 = scmp.ne.s32.totalorder %s552, %s566
      %p568 = scmp.eq.s32.totalorder %s50, 0
      %p569 = por %p567, %p568
      %s571 = sadd.s32 %s570, 1
      %p574 = scmp.eq.s32.totalorder %s44, 3
      %p575 = scmp.ne.s32.totalorder %s570, %s572
      %p576 = scmp.eq.s32.totalorder %s44, 0
      %p577 = por %p575, %p576
      %p578 = scmp.ne.s32.totalorder %s570, %s572
      %p579 = scmp.eq.s32.totalorder %s49, 3
      %p580 = por %p578, %p579
      %p581 = scmp.ne.s32.totalorder %s572, %s573
      %p582 = scmp.eq.s32.totalorder %s49, 0
      %p583 = por %p581, %p582
      %p584 = scmp.ne.s32.totalorder %s572, %s573
      %p585 = scmp.eq.s32.totalorder %s50, 3
      %p586 = por %p584, %p585
      %p588 = scmp.ne.s32.totalorder %s573, %s587
      %p589 = scmp.eq.s32.totalorder %s50, 0
      %p590 = por %p588, %p589
      %s592 = sadd.s32 %s591, 1
      %p595 = scmp.eq.s32.totalorder %s44, 3
      %p596 = scmp.ne.s32.totalorder %s591, %s593
      %p597 = scmp.eq.s32.totalorder %s44, 0
      %p598 = por %p596, %p597
      %p599 = scmp.ne.s32.totalorder %s591, %s593
      %p600 = scmp.eq.s32.totalorder %s49, 3
      %p601 = por %p599, %p600
      %p602 = scmp.ne.s32.totalorder %s593, %s594
      %p603 = scmp.eq.s32.totalorder %s49, 0
      %p604 = por %p602, %p603
      %p605 = scmp.ne.s32.totalorder %s593, %s594
      %p606 = scmp.eq.s32.totalorder %s50, 3
      %p607 = por %p605, %p606
      %p609 = scmp.ne.s32.totalorder %s594, %s608
      %p610 = scmp.eq.s32.totalorder %s50, 0
      %p611 = por %p609, %p610
      %s612 = ssub.s32 %s51, %s63
      %p613 = scmp.eq.s32.totalorder %s612, 0
      %s615 = sadd.s32 %s614, 1
      %s616 = scalar_select %p613, %s614, %s615
      %p619 = pneg %p613
      %p620 = scmp.eq.s32.totalorder %s44, 3
      %p621 = por %p619, %p620
      %p622 = scmp.ne.s32.totalorder %s614, %s617
      %p623 = scmp.eq.s32.totalorder %s44, 0
      %p624 = por %p622, %p623
      %p625 = scmp.ne.s32.totalorder %s614, %s617
      %p626 = scmp.eq.s32.totalorder %s49, 3
      %p627 = por %p625, %p626
      %p628 = scmp.ne.s32.totalorder %s617, %s618
      %p629 = scmp.eq.s32.totalorder %s49, 0
      %p630 = por %p628, %p629
      %p631 = scmp.ne.s32.totalorder %s617, %s618
      %p632 = scmp.eq.s32.totalorder %s50, 3
      %p633 = por %p631, %p632
      %p635 = scmp.ne.s32.totalorder %s618, %s634
      %p636 = scmp.eq.s32.totalorder %s50, 0
      %p637 = por %p635, %p636
      %s638 = ssub.s32 %s51, %s63
      %p639 = scmp.eq.s32.totalorder %s638, 0
      %s641 = sadd.s32 %s640, 1
      %s642 = scalar_select %p639, %s640, %s641
      %p645 = pneg %p639
      %p646 = scmp.eq.s32.totalorder %s44, 3
      %p647 = por %p645, %p646
      %p648 = scmp.ne.s32.totalorder %s640, %s643
      %p649 = scmp.eq.s32.totalorder %s44, 0
      %p650 = por %p648, %p649
      %p651 = scmp.ne.s32.totalorder %s640, %s643
      %p652 = scmp.eq.s32.totalorder %s49, 3
      %p653 = por %p651, %p652
      %p654 = scmp.ne.s32.totalorder %s643, %s644
      %p655 = scmp.eq.s32.totalorder %s49, 0
      %p656 = por %p654, %p655
      %p657 = scmp.ne.s32.totalorder %s643, %s644
      %p658 = scmp.eq.s32.totalorder %s50, 3
      %p659 = por %p657, %p658
      %p661 = scmp.ne.s32.totalorder %s644, %s660
      %p662 = scmp.eq.s32.totalorder %s50, 0
      %p663 = por %p661, %p662
      %s664 = ssub.s32 %s51, %s63
      %p665 = scmp.eq.s32.totalorder %s664, 0
      %s667 = sadd.s32 %s666, 1
      %s668 = scalar_select %p665, %s666, %s667
      %p671 = pneg %p665
      %p672 = scmp.eq.s32.totalorder %s44, 3
      %p673 = por %p671, %p672
      %p674 = scmp.ne.s32.totalorder %s666, %s669
      %p675 = scmp.eq.s32.totalorder %s44, 0
      %p676 = por %p674, %p675
      %p677 = scmp.ne.s32.totalorder %s666, %s669
      %p678 = scmp.eq.s32.totalorder %s49, 3
      %p679 = por %p677, %p678
      %p680 = scmp.ne.s32.totalorder %s669, %s670
      %p681 = scmp.eq.s32.totalorder %s49, 0
      %p682 = por %p680, %p681
      %p683 = scmp.ne.s32.totalorder %s669, %s670
      %p684 = scmp.eq.s32.totalorder %s50, 3
      %p685 = por %p683, %p684
      %p687 = scmp.ne.s32.totalorder %s670, %s686
      %p688 = scmp.eq.s32.totalorder %s50, 0
      %p689 = por %p687, %p688
      %p690 = scmp.le.s32.totalorder 1, %s44
      %p691 = scmp.lt.s32.totalorder %s44, 5
      %p692 = pnand %p690, %p691
      %p693 = pneg %p692
      // Predicated region
      $region9: #{my_adapted_bert_forward.1} parent=5 // pred_check
        _
      $region10: #{my_adapted_bert_forward.1} parent=5 // pred_check_branch
        %695 = sbr.rel (%p692) target = $region12
      $region11: #{my_adapted_bert_forward.1} parent=5 // pred_region
        %s696 = ssub.s32 %s44, 1
        // Predicated region
        $region13: #{my_adapted_bert_forward.1} parent=11 // pred_check
          %p697 = pneg %p103
        $region14: #{my_adapted_bert_forward.1} parent=11 // pred_check_branch
          %699 = sbr.rel (%p697) target = $region16
        $region15: #{my_adapted_bert_forward.1} parent=11 // pred_region
          _
        $region16: #{my_adapted_bert_forward.1} parent=11 // pred_fallthru
          _
        // Predicated region
        $region17: #{my_adapted_bert_forward.1} parent=11 // pred_check
          %p700 = pneg %p124
        $region18: #{my_adapted_bert_forward.1} parent=11 // pred_check_branch
          %702 = sbr.rel (%p700) target = $region20
        $region19: #{my_adapted_bert_forward.1} parent=11 // pred_region
          _
        $region20: #{my_adapted_bert_forward.1} parent=11 // pred_fallthru
          _
        // Predicated region
        $region21: #{my_adapted_bert_forward.1} parent=11 // pred_check
          %p703 = pneg %p457
        $region22: #{my_adapted_bert_forward.1} parent=11 // pred_check_branch
          %705 = sbr.rel (%p703) target = $region24
        $region23: #{my_adapted_bert_forward.1} parent=11 // pred_region
          _
        $region24: #{my_adapted_bert_forward.1} parent=11 // pred_fallthru
          _
        // Predicated region
        $region25: #{my_adapted_bert_forward.1} parent=11 // pred_check
          %p706 = pneg %p478
        $region26: #{my_adapted_bert_forward.1} parent=11 // pred_check_branch
          %708 = sbr.rel (%p706) target = $region28
        $region27: #{my_adapted_bert_forward.1} parent=11 // pred_region
          _
        $region28: #{my_adapted_bert_forward.1} parent=11 // pred_fallthru
          _
        // Predicated region
        $region29: #{my_adapted_bert_forward.1} parent=11 // pred_check
          %p709 = pneg %p499
        $region30: #{my_adapted_bert_forward.1} parent=11 // pred_check_branch
          %711 = sbr.rel (%p709) target = $region32
        $region31: #{my_adapted_bert_forward.1} parent=11 // pred_region
          _
        $region32: #{my_adapted_bert_forward.1} parent=11 // pred_fallthru
          _
        // Predicated region
        $region33: #{my_adapted_bert_forward.1} parent=11 // pred_check
          %p712 = pneg %p520
        $region34: #{my_adapted_bert_forward.1} parent=11 // pred_check_branch
          %714 = sbr.rel (%p712) target = $region36
        $region35: #{my_adapted_bert_forward.1} parent=11 // pred_region
          _
        $region36: #{my_adapted_bert_forward.1} parent=11 // pred_fallthru
          _
        // Predicated region
        $region37: #{my_adapted_bert_forward.1} parent=11 // pred_check
          %p715 = pneg %p541
        $region38: #{my_adapted_bert_forward.1} parent=11 // pred_check_branch
          %717 = sbr.rel (%p715) target = $region40
        $region39: #{my_adapted_bert_forward.1} parent=11 // pred_region
          _
        $region40: #{my_adapted_bert_forward.1} parent=11 // pred_fallthru
          _
        // Predicated region
        $region41: #{my_adapted_bert_forward.1} parent=11 // pred_check
          %p718 = pneg %p562
        $region42: #{my_adapted_bert_forward.1} parent=11 // pred_check_branch
          %720 = sbr.rel (%p718) target = $region44
        $region43: #{my_adapted_bert_forward.1} parent=11 // pred_region
          _
        $region44: #{my_adapted_bert_forward.1} parent=11 // pred_fallthru
          _
        // Predicated region
        $region45: #{my_adapted_bert_forward.1} parent=11 // pred_check
          %p721 = pneg %p583
        $region46: #{my_adapted_bert_forward.1} parent=11 // pred_check_branch
          %723 = sbr.rel (%p721) target = $region48
        $region47: #{my_adapted_bert_forward.1} parent=11 // pred_region
          _
        $region48: #{my_adapted_bert_forward.1} parent=11 // pred_fallthru
          _
        // Predicated region
        $region49: #{my_adapted_bert_forward.1} parent=11 // pred_check
          %p724 = pneg %p604
        $region50: #{my_adapted_bert_forward.1} parent=11 // pred_check_branch
          %726 = sbr.rel (%p724) target = $region52
        $region51: #{my_adapted_bert_forward.1} parent=11 // pred_region
          _
        $region52: #{my_adapted_bert_forward.1} parent=11 // pred_fallthru
          _
      $region12: #{my_adapted_bert_forward.1} parent=5 // pred_fallthru
        _
      %p727 = scmp.lt.s32.totalorder %s44, 4
      // Predicated region
      $region53: #{my_adapted_bert_forward.1} parent=5 // pred_check
        %p728 = pneg %p727
      $region54: #{my_adapted_bert_forward.1} parent=5 // pred_check_branch
        %730 = sbr.rel (%p728) target = $region56
      $region55: #{my_adapted_bert_forward.1} parent=5 // pred_region
        // Predicated region
        $region57: #{my_adapted_bert_forward.1} parent=55 // pred_check
          %p731 = pneg %p76
        $region58: #{my_adapted_bert_forward.1} parent=55 // pred_check_branch
          %733 = sbr.rel (%p731) target = $region60
        $region59: #{my_adapted_bert_forward.1} parent=55 // pred_region
          %p734 = scmp.lt.s32.totalorder %s51, 1
          %s735 = scalar_select %p734, %s51, 1
          %s736 = smul.addr %s735, 2
          %s737 = smul.addr %s736, 8
          %s738 = scalar_lea.vmem %s0, %s737
        $region60: #{my_adapted_bert_forward.1} parent=55 // pred_fallthru
          _
        // Predicated region
        $region61: #{my_adapted_bert_forward.1} parent=55 // pred_check
          %p739 = pneg %p144
        $region62: #{my_adapted_bert_forward.1} parent=55 // pred_check_branch
          %741 = sbr.rel (%p739) target = $region64
        $region63: #{my_adapted_bert_forward.1} parent=55 // pred_region
          %s742 = sand.u32 %s134, 1
          %s743 = scalar_lea.sflag [#allocation4], %s742
          %s744 = sand.u32 %s134, 1
          %s745 = smul.addr %s744, 768
          %s746 = scalar_lea.vmem [#allocation3], %s745
          %s748 = ssub.s32 12288, 12288
          %749 = vsyncadd %s743, %s748
          %s750 = smul.addr %s52, 192
          %s751 = smul.addr %s750, 64
          %s752 = scalar_lea.hbm %s3, %s751
          %s753 = sshll.u32 %s746, 4
          %s754 = int_to_ptr.vmem [resolvable:$true] %s753
          %759 = dma.hbm_to_vmem [thread:$0]  %s752, 12288, %s754, %s743, 128, 128, 8
        $region64: #{my_adapted_bert_forward.1} parent=55 // pred_fallthru
          _
        // Predicated region
        $region65: #{my_adapted_bert_forward.1} parent=55 // pred_check
          %p760 = pneg %p170
        $region66: #{my_adapted_bert_forward.1} parent=55 // pred_check_branch
          %762 = sbr.rel (%p760) target = $region68
        $region67: #{my_adapted_bert_forward.1} parent=55 // pred_region
          %p763 = scmp.lt.s32.totalorder %s52, 1
          %s764 = scalar_select %p763, %s52, 1
          %s765 = smul.addr %s764, 6
          %s766 = scalar_lea.vmem %s4, %s765
        $region68: #{my_adapted_bert_forward.1} parent=55 // pred_fallthru
          _
        // Predicated region
        $region69: #{my_adapted_bert_forward.1} parent=55 // pred_check
          %p767 = pneg %p196
        $region70: #{my_adapted_bert_forward.1} parent=55 // pred_check_branch
          %769 = sbr.rel (%p767) target = $region72
        $region71: #{my_adapted_bert_forward.1} parent=55 // pred_region
          %s770 = sand.u32 %s44, 1
          %s771 = scalar_lea.sflag [#allocation7], %s770
          %s772 = sand.u32 %s186, 1
          %s773 = smul.addr %s772, 256
          %s774 = scalar_lea.vmem [#allocation6], %s773
          %s776 = ssub.s32 4096, 4096
          %777 = vsyncadd %s771, %s776
          %s778 = smul.addr %s52, 64
          %s779 = smul.addr %s778, 64
          %s780 = scalar_lea.hbm %s5, %s779
          %s781 = sshll.u32 %s774, 4
          %s782 = int_to_ptr.vmem [resolvable:$true] %s781
          %787 = dma.hbm_to_vmem [thread:$0]  %s780, 4096, %s782, %s771, 128, 128, 8
        $region72: #{my_adapted_bert_forward.1} parent=55 // pred_fallthru
          _
        // Predicated region
        $region73: #{my_adapted_bert_forward.1} parent=55 // pred_check
          %p788 = pneg %p222
        $region74: #{my_adapted_bert_forward.1} parent=55 // pred_check_branch
          %790 = sbr.rel (%p788) target = $region76
        $region75: #{my_adapted_bert_forward.1} parent=55 // pred_region
          %p791 = scmp.lt.s32.totalorder %s52, 1
          %s792 = scalar_select %p791, %s52, 1
          %s793 = smul.addr %s792, 2
          %s794 = scalar_lea.vmem %s6, %s793
        $region76: #{my_adapted_bert_forward.1} parent=55 // pred_fallthru
          _
        // Predicated region
        $region77: #{my_adapted_bert_forward.1} parent=55 // pred_check
          %p795 = pneg %p248
        $region78: #{my_adapted_bert_forward.1} parent=55 // pred_check_branch
          %797 = sbr.rel (%p795) target = $region80
        $region79: #{my_adapted_bert_forward.1} parent=55 // pred_region
          %p798 = scmp.lt.s32.totalorder %s52, 1
          %s799 = scalar_select %p798, %s52, 1
          %s800 = smul.addr %s799, 2
          %s801 = scalar_lea.vmem %s7, %s800
        $region80: #{my_adapted_bert_forward.1} parent=55 // pred_fallthru
          _
        // Predicated region
        $region81: #{my_adapted_bert_forward.1} parent=55 // pred_check
          %p802 = pneg %p274
        $region82: #{my_adapted_bert_forward.1} parent=55 // pred_check_branch
          %804 = sbr.rel (%p802) target = $region84
        $region83: #{my_adapted_bert_forward.1} parent=55 // pred_region
          %p805 = scmp.lt.s32.totalorder %s52, 1
          %s806 = scalar_select %p805, %s52, 1
          %s807 = smul.addr %s806, 2
          %s808 = scalar_lea.vmem %s8, %s807
        $region84: #{my_adapted_bert_forward.1} parent=55 // pred_fallthru
          _
        // Predicated region
        $region85: #{my_adapted_bert_forward.1} parent=55 // pred_check
          %p809 = pneg %p300
        $region86: #{my_adapted_bert_forward.1} parent=55 // pred_check_branch
          %811 = sbr.rel (%p809) target = $region88
        $region87: #{my_adapted_bert_forward.1} parent=55 // pred_region
          %s812 = sand.u32 %s44, 1
          %s813 = scalar_lea.sflag [#allocation7], %s812
          %s814 = sand.u32 %s290, 1
          %s815 = smul.addr %s814, 512
          %s816 = scalar_lea.vmem [#allocation8], %s815
          %s818 = ssub.s32 8192, 8192
          %819 = vsyncadd %s813, %s818
          %s820 = smul.addr %s52, 128
          %s821 = smul.addr %s820, 64
          %s822 = scalar_lea.hbm %s9, %s821
          %s823 = sshll.u32 %s816, 4
          %s824 = int_to_ptr.vmem [resolvable:$true] %s823
          %829 = dma.hbm_to_vmem [thread:$0]  %s822, 8192, %s824, %s813, 128, 128, 8
        $region88: #{my_adapted_bert_forward.1} parent=55 // pred_fallthru
          _
        // Predicated region
        $region89: #{my_adapted_bert_forward.1} parent=55 // pred_check
          %p830 = pneg %p326
        $region90: #{my_adapted_bert_forward.1} parent=55 // pred_check_branch
          %832 = sbr.rel (%p830) target = $region92
        $region91: #{my_adapted_bert_forward.1} parent=55 // pred_region
          %p833 = scmp.lt.s32.totalorder %s52, 1
          %s834 = scalar_select %p833, %s52, 1
          %s835 = smul.addr %s834, 4
          %s836 = scalar_lea.vmem %s10, %s835
        $region92: #{my_adapted_bert_forward.1} parent=55 // pred_fallthru
          _
        // Predicated region
        $region93: #{my_adapted_bert_forward.1} parent=55 // pred_check
          %p837 = pneg %p352
        $region94: #{my_adapted_bert_forward.1} parent=55 // pred_check_branch
          %839 = sbr.rel (%p837) target = $region96
        $region95: #{my_adapted_bert_forward.1} parent=55 // pred_region
          %s840 = sand.u32 %s342, 1
          %s841 = scalar_lea.sflag [#allocation10], %s840
          %s842 = sand.u32 %s342, 1
          %s843 = smul.addr %s842, 512
          %s844 = scalar_lea.vmem [#allocation9], %s843
          %s846 = ssub.s32 8192, 8192
          %847 = vsyncadd %s841, %s846
          %s848 = smul.addr %s52, 128
          %s849 = smul.addr %s848, 64
          %s850 = scalar_lea.hbm %s11, %s849
          %s851 = sshll.u32 %s844, 4
          %s852 = int_to_ptr.vmem [resolvable:$true] %s851
          %857 = dma.hbm_to_vmem [thread:$0]  %s850, 8192, %s852, %s841, 256, 256, 16
        $region96: #{my_adapted_bert_forward.1} parent=55 // pred_fallthru
          _
        // Predicated region
        $region97: #{my_adapted_bert_forward.1} parent=55 // pred_check
          %p858 = pneg %p378
        $region98: #{my_adapted_bert_forward.1} parent=55 // pred_check_branch
          %860 = sbr.rel (%p858) target = $region100
        $region99: #{my_adapted_bert_forward.1} parent=55 // pred_region
          %p861 = scmp.lt.s32.totalorder %s52, 1
          %s862 = scalar_select %p861, %s52, 1
          %s863 = smul.addr %s862, 2
          %s864 = scalar_lea.vmem %s12, %s863
        $region100: #{my_adapted_bert_forward.1} parent=55 // pred_fallthru
          _
        // Predicated region
        $region101: #{my_adapted_bert_forward.1} parent=55 // pred_check
          %p865 = pneg %p404
        $region102: #{my_adapted_bert_forward.1} parent=55 // pred_check_branch
          %867 = sbr.rel (%p865) target = $region104
        $region103: #{my_adapted_bert_forward.1} parent=55 // pred_region
          %p868 = scmp.lt.s32.totalorder %s52, 1
          %s869 = scalar_select %p868, %s52, 1
          %s870 = smul.addr %s869, 2
          %s871 = scalar_lea.vmem %s13, %s870
        $region104: #{my_adapted_bert_forward.1} parent=55 // pred_fallthru
          _
        // Predicated region
        $region105: #{my_adapted_bert_forward.1} parent=55 // pred_check
          %p872 = pneg %p430
        $region106: #{my_adapted_bert_forward.1} parent=55 // pred_check_branch
          %874 = sbr.rel (%p872) target = $region108
        $region107: #{my_adapted_bert_forward.1} parent=55 // pred_region
          %p875 = scmp.lt.s32.totalorder %s52, 1
          %s876 = scalar_select %p875, %s52, 1
          %s877 = smul.addr %s876, 2
          %s878 = scalar_lea.vmem %s14, %s877
        $region108: #{my_adapted_bert_forward.1} parent=55 // pred_fallthru
          _
      $region56: #{my_adapted_bert_forward.1} parent=5 // pred_fallthru
        _
      %p879 = scmp.le.s32.totalorder 1, %s44
      %p880 = scmp.lt.s32.totalorder %s44, 5
      %p881 = pnand %p879, %p880
      %p882 = pneg %p881
      // Predicated region
      $region109: #{my_adapted_bert_forward.1} parent=5 // pred_check
        _
      $region110: #{my_adapted_bert_forward.1} parent=5 // pred_check_branch
        %884 = sbr.rel (%p881) target = $region112
      $region111: #{my_adapted_bert_forward.1} parent=5 // pred_region
        %s885 = ssub.s32 %s44, 1
        %s886 = sand.u32 %s137, 1
        %s887 = scalar_lea.sflag [#allocation4], %s886
        %s888 = sand.u32 %s137, 1
        %s889 = smul.addr %s888, 768
        %s890 = scalar_lea.vmem [#allocation3], %s889
        // Predicated region
        $region113: #{my_adapted_bert_forward.1} parent=111 // pred_check
          %p891 = pneg %p150
        $region114: #{my_adapted_bert_forward.1} parent=111 // pred_check_branch
          %893 = sbr.rel (%p891) target = $region116
        $region115: #{my_adapted_bert_forward.1} parent=111 // pred_region
          %894 = dma.done %s887, 12288
        $region116: #{my_adapted_bert_forward.1} parent=111 // pred_fallthru
          _
        %s895 = sand.u32 %s49, 1
        %s896 = scalar_lea.sflag [#allocation7], %s895
        %s897 = sand.u32 %s189, 1
        %s898 = smul.addr %s897, 256
        %s899 = scalar_lea.vmem [#allocation6], %s898
        // Predicated region
        $region117: #{my_adapted_bert_forward.1} parent=111 // pred_check
          %p900 = pneg %p202
        $region118: #{my_adapted_bert_forward.1} parent=111 // pred_check_branch
          %902 = sbr.rel (%p900) target = $region120
        $region119: #{my_adapted_bert_forward.1} parent=111 // pred_region
          %903 = dma.done %s896, 4096
        $region120: #{my_adapted_bert_forward.1} parent=111 // pred_fallthru
          _
        %s904 = sand.u32 %s49, 1
        %s905 = scalar_lea.sflag [#allocation7], %s904
        %s906 = sand.u32 %s293, 1
        %s907 = smul.addr %s906, 512
        %s908 = scalar_lea.vmem [#allocation8], %s907
        // Predicated region
        $region121: #{my_adapted_bert_forward.1} parent=111 // pred_check
          %p909 = pneg %p306
        $region122: #{my_adapted_bert_forward.1} parent=111 // pred_check_branch
          %911 = sbr.rel (%p909) target = $region124
        $region123: #{my_adapted_bert_forward.1} parent=111 // pred_region
          %912 = dma.done %s905, 8192
        $region124: #{my_adapted_bert_forward.1} parent=111 // pred_fallthru
          _
        %s913 = sand.u32 %s345, 1
        %s914 = scalar_lea.sflag [#allocation10], %s913
        %s915 = sand.u32 %s345, 1
        %s916 = smul.addr %s915, 512
        %s917 = scalar_lea.vmem [#allocation9], %s916
        // Predicated region
        $region125: #{my_adapted_bert_forward.1} parent=111 // pred_check
          %p918 = pneg %p358
        $region126: #{my_adapted_bert_forward.1} parent=111 // pred_check_branch
          %920 = sbr.rel (%p918) target = $region128
        $region127: #{my_adapted_bert_forward.1} parent=111 // pred_region
          %921 = dma.done %s914, 8192
        $region128: #{my_adapted_bert_forward.1} parent=111 // pred_fallthru
          _
        %p922 = scmp.lt.s32.totalorder %s53, 1
        %s923 = scalar_select %p922, %s53, 1
        %s924 = smul.addr %s923, 2
        %s925 = smul.addr %s924, 8
        %s926 = scalar_lea.vmem %s0, %s925
        %p927 = pneg %p82
        %p928 = pneg %p79
        %p929 = pneg %p103
        %p930 = pneg %p100
        %p931 = pneg %p124
        %p932 = pneg %p121
        %s933 = sand.u32 %s137, 1
        %s934 = scalar_lea.sflag [#allocation4], %s933
        %s935 = sand.u32 %s137, 1
        %s936 = smul.addr %s935, 768
        %s937 = scalar_lea.vmem [#allocation3], %s936
        %p938 = pneg %p150
        %p939 = pneg %p147
        %p940 = scmp.lt.s32.totalorder %s54, 1
        %s941 = scalar_select %p940, %s54, 1
        %s942 = smul.addr %s941, 6
        %s943 = scalar_lea.vmem %s4, %s942
        %p944 = pneg %p176
        %p945 = pneg %p173
        %s946 = sand.u32 %s49, 1
        %s947 = scalar_lea.sflag [#allocation7], %s946
        %s948 = sand.u32 %s189, 1
        %s949 = smul.addr %s948, 256
        %s950 = scalar_lea.vmem [#allocation6], %s949
        %p951 = pneg %p202
        %p952 = pneg %p199
        %p953 = scmp.lt.s32.totalorder %s54, 1
        %s954 = scalar_select %p953, %s54, 1
        %s955 = smul.addr %s954, 2
        %s956 = scalar_lea.vmem %s6, %s955
        %p957 = pneg %p228
        %p958 = pneg %p225
        %p959 = scmp.lt.s32.totalorder %s54, 1
        %s960 = scalar_select %p959, %s54, 1
        %s961 = smul.addr %s960, 2
        %s962 = scalar_lea.vmem %s7, %s961
        %p963 = pneg %p254
        %p964 = pneg %p251
        %p965 = scmp.lt.s32.totalorder %s54, 1
        %s966 = scalar_select %p965, %s54, 1
        %s967 = smul.addr %s966, 2
        %s968 = scalar_lea.vmem %s8, %s967
        %p969 = pneg %p280
        %p970 = pneg %p277
        %s971 = sand.u32 %s49, 1
        %s972 = scalar_lea.sflag [#allocation7], %s971
        %s973 = sand.u32 %s293, 1
        %s974 = smul.addr %s973, 512
        %s975 = scalar_lea.vmem [#allocation8], %s974
        %p976 = pneg %p306
        %p977 = pneg %p303
        %p978 = scmp.lt.s32.totalorder %s54, 1
        %s979 = scalar_select %p978, %s54, 1
        %s980 = smul.addr %s979, 4
        %s981 = scalar_lea.vmem %s10, %s980
        %p982 = pneg %p332
        %p983 = pneg %p329
        %s984 = sand.u32 %s345, 1
        %s985 = scalar_lea.sflag [#allocation10], %s984
        %s986 = sand.u32 %s345, 1
        %s987 = smul.addr %s986, 512
        %s988 = scalar_lea.vmem [#allocation9], %s987
        %p989 = pneg %p358
        %p990 = pneg %p355
        %p991 = scmp.lt.s32.totalorder %s54, 1
        %s992 = scalar_select %p991, %s54, 1
        %s993 = smul.addr %s992, 2
        %s994 = scalar_lea.vmem %s12, %s993
        %p995 = pneg %p384
        %p996 = pneg %p381
        %p997 = scmp.lt.s32.totalorder %s54, 1
        %s998 = scalar_select %p997, %s54, 1
        %s999 = smul.addr %s998, 2
        %s1000 = scalar_lea.vmem %s13, %s999
        %p1001 = pneg %p410
        %p1002 = pneg %p407
        %p1003 = scmp.lt.s32.totalorder %s54, 1
        %s1004 = scalar_select %p1003, %s54, 1
        %s1005 = smul.addr %s1004, 2
        %s1006 = scalar_lea.vmem %s14, %s1005
        %p1007 = pneg %p436
        %p1008 = pneg %p433
        %p1009 = pneg %p457
        %p1010 = pneg %p454
        %p1011 = pneg %p478
        %p1012 = pneg %p475
        %p1013 = pneg %p499
        %p1014 = pneg %p496
        %p1015 = pneg %p520
        %p1016 = pneg %p517
        %p1017 = pneg %p541
        %p1018 = pneg %p538
        %p1019 = pneg %p562
        %p1020 = pneg %p559
        %p1021 = pneg %p583
        %p1022 = pneg %p580
        %p1023 = pneg %p604
        %p1024 = pneg %p601
        %p1025 = pneg %p630
        %p1026 = pneg %p627
        %p1027 = scmp.lt.s32.totalorder %s53, 1
        %s1028 = scalar_select %p1027, %s53, 1
        %s1029 = smul.addr %s1028, 2
        %s1030 = scalar_lea.vmem %s23, %s1029
        %p1031 = pneg %p656
        %p1032 = pneg %p653
        %p1033 = scmp.lt.s32.totalorder %s53, 1
        %s1034 = scalar_select %p1033, %s53, 1
        %s1035 = smul.addr %s1034, 2
        %s1036 = scalar_lea.vmem %s24, %s1035
        %p1037 = pneg %p682
        %p1038 = pneg %p679
        %s1039 = sand.u32 %s669, 1
        %s1040 = scalar_lea.sflag [#allocation5], %s1039
        %s1041 = sand.u32 %s669, 1
        %s1042 = scalar_lea.vmem [#allocation11], %s1041
        %p1043 = scmp.lt.s32.totalorder %s53, 1
        %s1044 = scalar_select %p1043, %s53, 1
        %s1045 = smul.addr %s1044, 2
        %s1046 = smul.addr %s1045, 8
        %s1047 = scalar_lea.vmem %s0, %s1046
        %p1048 = scmp.lt.s32.totalorder %s54, 1
        %s1049 = scalar_select %p1048, %s54, 1
        %s1050 = smul.addr %s1049, 6
        %s1051 = scalar_lea.vmem %s4, %s1050
        %p1052 = scmp.lt.s32.totalorder %s54, 1
        %s1053 = scalar_select %p1052, %s54, 1
        %s1054 = smul.addr %s1053, 2
        %s1055 = scalar_lea.vmem %s6, %s1054
        %p1056 = scmp.lt.s32.totalorder %s54, 1
        %s1057 = scalar_select %p1056, %s54, 1
        %s1058 = smul.addr %s1057, 2
        %s1059 = scalar_lea.vmem %s7, %s1058
        %p1060 = scmp.lt.s32.totalorder %s54, 1
        %s1061 = scalar_select %p1060, %s54, 1
        %s1062 = smul.addr %s1061, 2
        %s1063 = scalar_lea.vmem %s8, %s1062
        %p1064 = scmp.lt.s32.totalorder %s54, 1
        %s1065 = scalar_select %p1064, %s54, 1
        %s1066 = smul.addr %s1065, 4
        %s1067 = scalar_lea.vmem %s10, %s1066
        %p1068 = scmp.lt.s32.totalorder %s54, 1
        %s1069 = scalar_select %p1068, %s54, 1
        %s1070 = smul.addr %s1069, 2
        %s1071 = scalar_lea.vmem %s12, %s1070
        %p1072 = scmp.lt.s32.totalorder %s54, 1
        %s1073 = scalar_select %p1072, %s54, 1
        %s1074 = smul.addr %s1073, 2
        %s1075 = scalar_lea.vmem %s13, %s1074
        %p1076 = scmp.lt.s32.totalorder %s54, 1
        %s1077 = scalar_select %p1076, %s54, 1
        %s1078 = smul.addr %s1077, 2
        %s1079 = scalar_lea.vmem %s14, %s1078
        %p1080 = scmp.lt.s32.totalorder %s53, 1
        %s1081 = scalar_select %p1080, %s53, 1
        %s1082 = smul.addr %s1081, 2
        %s1083 = scalar_lea.vmem %s23, %s1082
        %p1084 = scmp.lt.s32.totalorder %s53, 1
        %s1085 = scalar_select %p1084, %s53, 1
        %s1086 = smul.addr %s1085, 2
        %s1087 = scalar_lea.vmem %s24, %s1086
        %p1089 = scmp.eq.s32.totalorder %s54, 0
        // Predicated region
        $region129: #{my_adapted_bert_forward.1} parent=111 // pred_check
          %p1090 = pneg %p1089
        $region130: #{my_adapted_bert_forward.1} parent=111 // pred_check_branch
          %1092 = sbr.rel (%p1090) target = $region132
        $region131: #{my_adapted_bert_forward.1} parent=111 // pred_region
          %v1093 = vld [vmem:[%s1047] sm:$0xff]
          %v1094 = vld [vmem:[%s1047 + $0x8] sm:$0xff]
          %v1095 = vld [vmem:[%s1] sm:$0x3]
          %v1096 = vld [vmem:[%s2] sm:$0x3]
          %v1097 = vadd.f32 %v1093, %v1094
          %1098 = vadd.xlane.f32.xlu0 %v1097
          %v1099 = vpop.xlane.xlu0 %1098
          %v1100 = vrcp.pop 256.0
          %v1101 = vmul.f32 %v1099, %v1100
          %v1102 = vsub.f32 %v1093, %v1101
          %v1103 = vsub.f32 %v1094, %v1101
          %v1104 = vmul.f32 %v1102, %v1102
          %v1105 = vmul.f32 %v1103, %v1103
          %v1106 = vadd.f32 %v1104, %v1105
          %1107 = vadd.xlane.f32.xlu0 %v1106
          %v1108 = vpop.xlane.xlu0 %1107
          %v1109 = vmul.f32 %v1108, %v1100
          %v1110 = vadd.f32 %v1109, 1e-12
          %v1111 = vrsqrt.pop %v1110
          %v1112 = vmul.f32 %v1102, %v1111
          %v1113 = vmul.f32 %v1103, %v1111
          %v1115 = vlaneseq
          %v1116 = vshrl.u32 %v1115, 7
          %v1117 = vsub.s32 0, %v1116
          %v1118 = vrot.slane %v1095, %v1117
          %v1119 = vlaneseq
          %v1120 = vshrl.u32 %v1119, 7
          %v1121 = vsub.s32 1, %v1120
          %v1122 = vrot.slane %v1095, %v1121
          %v1125 = vmul.f32 %v1112, %v1118
          %v1126 = vmul.f32 %v1113, %v1122
          %v1128 = vlaneseq
          %v1129 = vshrl.u32 %v1128, 7
          %v1130 = vsub.s32 0, %v1129
          %v1131 = vrot.slane %v1096, %v1130
          %v1132 = vlaneseq
          %v1133 = vshrl.u32 %v1132, 7
          %v1134 = vsub.s32 1, %v1133
          %v1135 = vrot.slane %v1096, %v1134
          %v1138 = vadd.f32 %v1125, %v1131
          %v1139 = vadd.f32 %v1126, %v1135
          %1140 = vst [vmem:[#allocation2] sm:$0xff] %v1138
          %1141 = vst [vmem:[#allocation2 + $0x8] sm:$0xff] %v1139
        $region132: #{my_adapted_bert_forward.1} parent=111 // pred_fallthru
          _
        %v1142 = vld [vmem:[#allocation2] sm:$0xff]
        %v1143 = vld [vmem:[#allocation2 + $0x8] sm:$0xff]
        %v1144 = vpack.c.bf16 %v1142, %v1142
        %v1145 = vpack.c.bf16 %v1143, %v1143
        %v1146 = vld [vmem:[%s890] sm:$0xff]
        %v1147 = vld [vmem:[%s890 + $0x8] sm:$0xff]
        %v1148 = vld [vmem:[%s890 + $0x10] sm:$0xff]
        %v1149 = vld [vmem:[%s890 + $0x18] sm:$0xff]
        %v1150 = vld [vmem:[%s890 + $0x20] sm:$0xff]
        %v1151 = vld [vmem:[%s890 + $0x28] sm:$0xff]
        %v1152 = vld [vmem:[%s890 + $0x30] sm:$0xff]
        %v1153 = vld [vmem:[%s890 + $0x38] sm:$0xff]
        %v1154 = vld [vmem:[%s890 + $0x40] sm:$0xff]
        %v1155 = vld [vmem:[%s890 + $0x48] sm:$0xff]
        %v1156 = vld [vmem:[%s890 + $0x50] sm:$0xff]
        %v1157 = vld [vmem:[%s890 + $0x58] sm:$0xff]
        %v1158 = vld [vmem:[%s890 + $0x60] sm:$0xff]
        %v1159 = vld [vmem:[%s890 + $0x68] sm:$0xff]
        %v1160 = vld [vmem:[%s890 + $0x70] sm:$0xff]
        %v1161 = vld [vmem:[%s890 + $0x78] sm:$0xff]
        %v1162 = vld [vmem:[%s890 + $0x80] sm:$0xff]
        %v1163 = vld [vmem:[%s890 + $0x88] sm:$0xff]
        %v1164 = vld [vmem:[%s890 + $0x90] sm:$0xff]
        %v1165 = vld [vmem:[%s890 + $0x98] sm:$0xff]
        %v1166 = vld [vmem:[%s890 + $0xa0] sm:$0xff]
        %v1167 = vld [vmem:[%s890 + $0xa8] sm:$0xff]
        %v1168 = vld [vmem:[%s890 + $0xb0] sm:$0xff]
        %v1169 = vld [vmem:[%s890 + $0xb8] sm:$0xff]
        %v1170 = vld [vmem:[%s890 + $0xc0] sm:$0xff]
        %v1171 = vld [vmem:[%s890 + $0xc8] sm:$0xff]
        %v1172 = vld [vmem:[%s890 + $0xd0] sm:$0xff]
        %v1173 = vld [vmem:[%s890 + $0xd8] sm:$0xff]
        %v1174 = vld [vmem:[%s890 + $0xe0] sm:$0xff]
        %v1175 = vld [vmem:[%s890 + $0xe8] sm:$0xff]
        %v1176 = vld [vmem:[%s890 + $0xf0] sm:$0xff]
        %v1177 = vld [vmem:[%s890 + $0xf8] sm:$0xff]
        %v1178 = vld [vmem:[%s890 + $0x100] sm:$0xff]
        %v1179 = vld [vmem:[%s890 + $0x108] sm:$0xff]
        %v1180 = vld [vmem:[%s890 + $0x110] sm:$0xff]
        %v1181 = vld [vmem:[%s890 + $0x118] sm:$0xff]
        %v1182 = vld [vmem:[%s890 + $0x120] sm:$0xff]
        %v1183 = vld [vmem:[%s890 + $0x128] sm:$0xff]
        %v1184 = vld [vmem:[%s890 + $0x130] sm:$0xff]
        %v1185 = vld [vmem:[%s890 + $0x138] sm:$0xff]
        %v1186 = vld [vmem:[%s890 + $0x140] sm:$0xff]
        %v1187 = vld [vmem:[%s890 + $0x148] sm:$0xff]
        %v1188 = vld [vmem:[%s890 + $0x150] sm:$0xff]
        %v1189 = vld [vmem:[%s890 + $0x158] sm:$0xff]
        %v1190 = vld [vmem:[%s890 + $0x160] sm:$0xff]
        %v1191 = vld [vmem:[%s890 + $0x168] sm:$0xff]
        %v1192 = vld [vmem:[%s890 + $0x170] sm:$0xff]
        %v1193 = vld [vmem:[%s890 + $0x178] sm:$0xff]
        %v1194 = vld [vmem:[%s890 + $0x180] sm:$0xff]
        %v1195 = vld [vmem:[%s890 + $0x188] sm:$0xff]
        %v1196 = vld [vmem:[%s890 + $0x190] sm:$0xff]
        %v1197 = vld [vmem:[%s890 + $0x198] sm:$0xff]
        %v1198 = vld [vmem:[%s890 + $0x1a0] sm:$0xff]
        %v1199 = vld [vmem:[%s890 + $0x1a8] sm:$0xff]
        %v1200 = vld [vmem:[%s890 + $0x1b0] sm:$0xff]
        %v1201 = vld [vmem:[%s890 + $0x1b8] sm:$0xff]
        %v1202 = vld [vmem:[%s890 + $0x1c0] sm:$0xff]
        %v1203 = vld [vmem:[%s890 + $0x1c8] sm:$0xff]
        %v1204 = vld [vmem:[%s890 + $0x1d0] sm:$0xff]
        %v1205 = vld [vmem:[%s890 + $0x1d8] sm:$0xff]
        %v1206 = vld [vmem:[%s890 + $0x1e0] sm:$0xff]
        %v1207 = vld [vmem:[%s890 + $0x1e8] sm:$0xff]
        %v1208 = vld [vmem:[%s890 + $0x1f0] sm:$0xff]
        %v1209 = vld [vmem:[%s890 + $0x1f8] sm:$0xff]
        %v1210 = vld [vmem:[%s890 + $0x200] sm:$0xff]
        %v1211 = vld [vmem:[%s890 + $0x208] sm:$0xff]
        %v1212 = vld [vmem:[%s890 + $0x210] sm:$0xff]
        %v1213 = vld [vmem:[%s890 + $0x218] sm:$0xff]
        %v1214 = vld [vmem:[%s890 + $0x220] sm:$0xff]
        %v1215 = vld [vmem:[%s890 + $0x228] sm:$0xff]
        %v1216 = vld [vmem:[%s890 + $0x230] sm:$0xff]
        %v1217 = vld [vmem:[%s890 + $0x238] sm:$0xff]
        %v1218 = vld [vmem:[%s890 + $0x240] sm:$0xff]
        %v1219 = vld [vmem:[%s890 + $0x248] sm:$0xff]
        %v1220 = vld [vmem:[%s890 + $0x250] sm:$0xff]
        %v1221 = vld [vmem:[%s890 + $0x258] sm:$0xff]
        %v1222 = vld [vmem:[%s890 + $0x260] sm:$0xff]
        %v1223 = vld [vmem:[%s890 + $0x268] sm:$0xff]
        %v1224 = vld [vmem:[%s890 + $0x270] sm:$0xff]
        %v1225 = vld [vmem:[%s890 + $0x278] sm:$0xff]
        %v1226 = vld [vmem:[%s890 + $0x280] sm:$0xff]
        %v1227 = vld [vmem:[%s890 + $0x288] sm:$0xff]
        %v1228 = vld [vmem:[%s890 + $0x290] sm:$0xff]
        %v1229 = vld [vmem:[%s890 + $0x298] sm:$0xff]
        %v1230 = vld [vmem:[%s890 + $0x2a0] sm:$0xff]
        %v1231 = vld [vmem:[%s890 + $0x2a8] sm:$0xff]
        %v1232 = vld [vmem:[%s890 + $0x2b0] sm:$0xff]
        %v1233 = vld [vmem:[%s890 + $0x2b8] sm:$0xff]
        %v1234 = vld [vmem:[%s890 + $0x2c0] sm:$0xff]
        %v1235 = vld [vmem:[%s890 + $0x2c8] sm:$0xff]
        %v1236 = vld [vmem:[%s890 + $0x2d0] sm:$0xff]
        %v1237 = vld [vmem:[%s890 + $0x2d8] sm:$0xff]
        %v1238 = vld [vmem:[%s890 + $0x2e0] sm:$0xff]
        %v1239 = vld [vmem:[%s890 + $0x2e8] sm:$0xff]
        %v1240 = vld [vmem:[%s890 + $0x2f0] sm:$0xff]
        %v1241 = vld [vmem:[%s890 + $0x2f8] sm:$0xff]
        %v1242 = vld [vmem:[%s1051] sm:$0x3f]
        %v1244 = vlaneseq
        %v1245 = vshrl.u32 %v1244, 7
        %v1246 = vsub.s32 0, %v1245
        %v1247 = vrot.slane %v1242, %v1246
        %v1248 = vlaneseq
        %v1249 = vshrl.u32 %v1248, 7
        %v1250 = vsub.s32 1, %v1249
        %v1251 = vrot.slane %v1242, %v1250
        %v1252 = vlaneseq
        %v1253 = vshrl.u32 %v1252, 7
        %v1254 = vsub.s32 2, %v1253
        %v1255 = vrot.slane %v1242, %v1254
        %v1256 = vlaneseq
        %v1257 = vshrl.u32 %v1256, 7
        %v1258 = vsub.s32 3, %v1257
        %v1259 = vrot.slane %v1242, %v1258
        %v1260 = vlaneseq
        %v1261 = vshrl.u32 %v1260, 7
        %v1262 = vsub.s32 4, %v1261
        %v1263 = vrot.slane %v1242, %v1262
        %v1264 = vlaneseq
        %v1265 = vshrl.u32 %v1264, 7
        %v1266 = vsub.s32 5, %v1265
        %v1267 = vrot.slane %v1242, %v1266
        %v1370 = vunpack.c.l.b16 %v1146
        %v1371 = vunpack.c.h.b16 %v1146
        %v1372 = vunpack.c.l.b16 %v1147
        %v1373 = vunpack.c.h.b16 %v1147
        %v1374 = vunpack.c.l.b16 %v1148
        %v1375 = vunpack.c.h.b16 %v1148
        %v1376 = vunpack.c.l.b16 %v1149
        %v1377 = vunpack.c.h.b16 %v1149
        %v1378 = vunpack.c.l.b16 %v1150
        %v1379 = vunpack.c.h.b16 %v1150
        %v1380 = vunpack.c.l.b16 %v1151
        %v1381 = vunpack.c.h.b16 %v1151
        %v1382 = vunpack.c.l.b16 %v1152
        %v1383 = vunpack.c.h.b16 %v1152
        %v1384 = vunpack.c.l.b16 %v1153
        %v1385 = vunpack.c.h.b16 %v1153
        %v1386 = vunpack.c.l.b16 %v1154
        %v1387 = vunpack.c.h.b16 %v1154
        %v1388 = vunpack.c.l.b16 %v1155
        %v1389 = vunpack.c.h.b16 %v1155
        %v1390 = vunpack.c.l.b16 %v1156
        %v1391 = vunpack.c.h.b16 %v1156
        %v1392 = vunpack.c.l.b16 %v1157
        %v1393 = vunpack.c.h.b16 %v1157
        %v1394 = vunpack.c.l.b16 %v1158
        %v1395 = vunpack.c.h.b16 %v1158
        %v1396 = vunpack.c.l.b16 %v1159
        %v1397 = vunpack.c.h.b16 %v1159
        %v1398 = vunpack.c.l.b16 %v1160
        %v1399 = vunpack.c.h.b16 %v1160
        %v1400 = vunpack.c.l.b16 %v1161
        %v1401 = vunpack.c.h.b16 %v1161
        %v1402 = vunpack.c.l.b16 %v1162
        %v1403 = vunpack.c.h.b16 %v1162
        %v1404 = vunpack.c.l.b16 %v1163
        %v1405 = vunpack.c.h.b16 %v1163
        %v1406 = vunpack.c.l.b16 %v1164
        %v1407 = vunpack.c.h.b16 %v1164
        %v1408 = vunpack.c.l.b16 %v1165
        %v1409 = vunpack.c.h.b16 %v1165
        %v1410 = vunpack.c.l.b16 %v1166
        %v1411 = vunpack.c.h.b16 %v1166
        %v1412 = vunpack.c.l.b16 %v1167
        %v1413 = vunpack.c.h.b16 %v1167
        %v1414 = vunpack.c.l.b16 %v1168
        %v1415 = vunpack.c.h.b16 %v1168
        %v1416 = vunpack.c.l.b16 %v1169
        %v1417 = vunpack.c.h.b16 %v1169
        %v1418 = vunpack.c.l.b16 %v1170
        %v1419 = vunpack.c.h.b16 %v1170
        %v1420 = vunpack.c.l.b16 %v1171
        %v1421 = vunpack.c.h.b16 %v1171
        %v1422 = vunpack.c.l.b16 %v1172
        %v1423 = vunpack.c.h.b16 %v1172
        %v1424 = vunpack.c.l.b16 %v1173
        %v1425 = vunpack.c.h.b16 %v1173
        %v1426 = vunpack.c.l.b16 %v1174
        %v1427 = vunpack.c.h.b16 %v1174
        %v1428 = vunpack.c.l.b16 %v1175
        %v1429 = vunpack.c.h.b16 %v1175
        %v1430 = vunpack.c.l.b16 %v1176
        %v1431 = vunpack.c.h.b16 %v1176
        %v1432 = vunpack.c.l.b16 %v1177
        %v1433 = vunpack.c.h.b16 %v1177
        %v1434 = vunpack.c.l.b16 %v1178
        %v1435 = vunpack.c.h.b16 %v1178
        %v1436 = vunpack.c.l.b16 %v1179
        %v1437 = vunpack.c.h.b16 %v1179
        %v1438 = vunpack.c.l.b16 %v1180
        %v1439 = vunpack.c.h.b16 %v1180
        %v1440 = vunpack.c.l.b16 %v1181
        %v1441 = vunpack.c.h.b16 %v1181
        %v1442 = vunpack.c.l.b16 %v1182
        %v1443 = vunpack.c.h.b16 %v1182
        %v1444 = vunpack.c.l.b16 %v1183
        %v1445 = vunpack.c.h.b16 %v1183
        %v1446 = vunpack.c.l.b16 %v1184
        %v1447 = vunpack.c.h.b16 %v1184
        %v1448 = vunpack.c.l.b16 %v1185
        %v1449 = vunpack.c.h.b16 %v1185
        %v1450 = vunpack.c.l.b16 %v1186
        %v1451 = vunpack.c.h.b16 %v1186
        %v1452 = vunpack.c.l.b16 %v1187
        %v1453 = vunpack.c.h.b16 %v1187
        %v1454 = vunpack.c.l.b16 %v1188
        %v1455 = vunpack.c.h.b16 %v1188
        %v1456 = vunpack.c.l.b16 %v1189
        %v1457 = vunpack.c.h.b16 %v1189
        %v1458 = vunpack.c.l.b16 %v1190
        %v1459 = vunpack.c.h.b16 %v1190
        %v1460 = vunpack.c.l.b16 %v1191
        %v1461 = vunpack.c.h.b16 %v1191
        %v1462 = vunpack.c.l.b16 %v1192
        %v1463 = vunpack.c.h.b16 %v1192
        %v1464 = vunpack.c.l.b16 %v1193
        %v1465 = vunpack.c.h.b16 %v1193
        %v1466 = vunpack.c.l.b16 %v1194
        %v1467 = vunpack.c.h.b16 %v1194
        %v1468 = vunpack.c.l.b16 %v1195
        %v1469 = vunpack.c.h.b16 %v1195
        %v1470 = vunpack.c.l.b16 %v1196
        %v1471 = vunpack.c.h.b16 %v1196
        %v1472 = vunpack.c.l.b16 %v1197
        %v1473 = vunpack.c.h.b16 %v1197
        %v1474 = vunpack.c.l.b16 %v1198
        %v1475 = vunpack.c.h.b16 %v1198
        %v1476 = vunpack.c.l.b16 %v1199
        %v1477 = vunpack.c.h.b16 %v1199
        %v1478 = vunpack.c.l.b16 %v1200
        %v1479 = vunpack.c.h.b16 %v1200
        %v1480 = vunpack.c.l.b16 %v1201
        %v1481 = vunpack.c.h.b16 %v1201
        %v1482 = vunpack.c.l.b16 %v1202
        %v1483 = vunpack.c.h.b16 %v1202
        %v1484 = vunpack.c.l.b16 %v1203
        %v1485 = vunpack.c.h.b16 %v1203
        %v1486 = vunpack.c.l.b16 %v1204
        %v1487 = vunpack.c.h.b16 %v1204
        %v1488 = vunpack.c.l.b16 %v1205
        %v1489 = vunpack.c.h.b16 %v1205
        %v1490 = vunpack.c.l.b16 %v1206
        %v1491 = vunpack.c.h.b16 %v1206
        %v1492 = vunpack.c.l.b16 %v1207
        %v1493 = vunpack.c.h.b16 %v1207
        %v1494 = vunpack.c.l.b16 %v1208
        %v1495 = vunpack.c.h.b16 %v1208
        %v1496 = vunpack.c.l.b16 %v1209
        %v1497 = vunpack.c.h.b16 %v1209
        %v1498 = vunpack.c.l.b16 %v1210
        %v1499 = vunpack.c.h.b16 %v1210
        %v1500 = vunpack.c.l.b16 %v1211
        %v1501 = vunpack.c.h.b16 %v1211
        %v1502 = vunpack.c.l.b16 %v1212
        %v1503 = vunpack.c.h.b16 %v1212
        %v1504 = vunpack.c.l.b16 %v1213
        %v1505 = vunpack.c.h.b16 %v1213
        %v1506 = vunpack.c.l.b16 %v1214
        %v1507 = vunpack.c.h.b16 %v1214
        %v1508 = vunpack.c.l.b16 %v1215
        %v1509 = vunpack.c.h.b16 %v1215
        %v1510 = vunpack.c.l.b16 %v1216
        %v1511 = vunpack.c.h.b16 %v1216
        %v1512 = vunpack.c.l.b16 %v1217
        %v1513 = vunpack.c.h.b16 %v1217
        %v1514 = vunpack.c.l.b16 %v1218
        %v1515 = vunpack.c.h.b16 %v1218
        %v1516 = vunpack.c.l.b16 %v1219
        %v1517 = vunpack.c.h.b16 %v1219
        %v1518 = vunpack.c.l.b16 %v1220
        %v1519 = vunpack.c.h.b16 %v1220
        %v1520 = vunpack.c.l.b16 %v1221
        %v1521 = vunpack.c.h.b16 %v1221
        %v1522 = vunpack.c.l.b16 %v1222
        %v1523 = vunpack.c.h.b16 %v1222
        %v1524 = vunpack.c.l.b16 %v1223
        %v1525 = vunpack.c.h.b16 %v1223
        %v1526 = vunpack.c.l.b16 %v1224
        %v1527 = vunpack.c.h.b16 %v1224
        %v1528 = vunpack.c.l.b16 %v1225
        %v1529 = vunpack.c.h.b16 %v1225
        %v1530 = vunpack.c.l.b16 %v1226
        %v1531 = vunpack.c.h.b16 %v1226
        %v1532 = vunpack.c.l.b16 %v1227
        %v1533 = vunpack.c.h.b16 %v1227
        %v1534 = vunpack.c.l.b16 %v1228
        %v1535 = vunpack.c.h.b16 %v1228
        %v1536 = vunpack.c.l.b16 %v1229
        %v1537 = vunpack.c.h.b16 %v1229
        %v1538 = vunpack.c.l.b16 %v1230
        %v1539 = vunpack.c.h.b16 %v1230
        %v1540 = vunpack.c.l.b16 %v1231
        %v1541 = vunpack.c.h.b16 %v1231
        %v1542 = vunpack.c.l.b16 %v1232
        %v1543 = vunpack.c.h.b16 %v1232
        %v1544 = vunpack.c.l.b16 %v1233
        %v1545 = vunpack.c.h.b16 %v1233
        %v1546 = vunpack.c.l.b16 %v1234
        %v1547 = vunpack.c.h.b16 %v1234
        %v1548 = vunpack.c.l.b16 %v1235
        %v1549 = vunpack.c.h.b16 %v1235
        %v1550 = vunpack.c.l.b16 %v1236
        %v1551 = vunpack.c.h.b16 %v1236
        %v1552 = vunpack.c.l.b16 %v1237
        %v1553 = vunpack.c.h.b16 %v1237
        %v1554 = vunpack.c.l.b16 %v1238
        %v1555 = vunpack.c.h.b16 %v1238
        %v1556 = vunpack.c.l.b16 %v1239
        %v1557 = vunpack.c.h.b16 %v1239
        %v1558 = vunpack.c.l.b16 %v1240
        %v1559 = vunpack.c.h.b16 %v1240
        %v1560 = vunpack.c.l.b16 %v1241
        %v1561 = vunpack.c.h.b16 %v1241
        %v1562 = vpack.c.b16 %v1372, %v1370
        %v1563 = vpack.c.b16 %v1373, %v1371
        %v1564 = vpack.c.b16 %v1376, %v1374
        %v1565 = vpack.c.b16 %v1377, %v1375
        %v1566 = vpack.c.b16 %v1380, %v1378
        %v1567 = vpack.c.b16 %v1381, %v1379
        %v1568 = vpack.c.b16 %v1384, %v1382
        %v1569 = vpack.c.b16 %v1385, %v1383
        %v1570 = vpack.c.b16 %v1388, %v1386
        %v1571 = vpack.c.b16 %v1389, %v1387
        %v1572 = vpack.c.b16 %v1392, %v1390
        %v1573 = vpack.c.b16 %v1393, %v1391
        %v1574 = vpack.c.b16 %v1396, %v1394
        %v1575 = vpack.c.b16 %v1397, %v1395
        %v1576 = vpack.c.b16 %v1400, %v1398
        %v1577 = vpack.c.b16 %v1401, %v1399
        %v1578 = vpack.c.b16 %v1404, %v1402
        %v1579 = vpack.c.b16 %v1405, %v1403
        %v1580 = vpack.c.b16 %v1408, %v1406
        %v1581 = vpack.c.b16 %v1409, %v1407
        %v1582 = vpack.c.b16 %v1412, %v1410
        %v1583 = vpack.c.b16 %v1413, %v1411
        %v1584 = vpack.c.b16 %v1416, %v1414
        %v1585 = vpack.c.b16 %v1417, %v1415
        %v1586 = vpack.c.b16 %v1420, %v1418
        %v1587 = vpack.c.b16 %v1421, %v1419
        %v1588 = vpack.c.b16 %v1424, %v1422
        %v1589 = vpack.c.b16 %v1425, %v1423
        %v1590 = vpack.c.b16 %v1428, %v1426
        %v1591 = vpack.c.b16 %v1429, %v1427
        %v1592 = vpack.c.b16 %v1432, %v1430
        %v1593 = vpack.c.b16 %v1433, %v1431
        %v1594 = vpack.c.b16 %v1436, %v1434
        %v1595 = vpack.c.b16 %v1437, %v1435
        %v1596 = vpack.c.b16 %v1440, %v1438
        %v1597 = vpack.c.b16 %v1441, %v1439
        %v1598 = vpack.c.b16 %v1444, %v1442
        %v1599 = vpack.c.b16 %v1445, %v1443
        %v1600 = vpack.c.b16 %v1448, %v1446
        %v1601 = vpack.c.b16 %v1449, %v1447
        %v1602 = vpack.c.b16 %v1452, %v1450
        %v1603 = vpack.c.b16 %v1453, %v1451
        %v1604 = vpack.c.b16 %v1456, %v1454
        %v1605 = vpack.c.b16 %v1457, %v1455
        %v1606 = vpack.c.b16 %v1460, %v1458
        %v1607 = vpack.c.b16 %v1461, %v1459
        %v1608 = vpack.c.b16 %v1464, %v1462
        %v1609 = vpack.c.b16 %v1465, %v1463
        %v1610 = vpack.c.b16 %v1468, %v1466
        %v1611 = vpack.c.b16 %v1469, %v1467
        %v1612 = vpack.c.b16 %v1472, %v1470
        %v1613 = vpack.c.b16 %v1473, %v1471
        %v1614 = vpack.c.b16 %v1476, %v1474
        %v1615 = vpack.c.b16 %v1477, %v1475
        %v1616 = vpack.c.b16 %v1480, %v1478
        %v1617 = vpack.c.b16 %v1481, %v1479
        %v1618 = vpack.c.b16 %v1484, %v1482
        %v1619 = vpack.c.b16 %v1485, %v1483
        %v1620 = vpack.c.b16 %v1488, %v1486
        %v1621 = vpack.c.b16 %v1489, %v1487
        %v1622 = vpack.c.b16 %v1492, %v1490
        %v1623 = vpack.c.b16 %v1493, %v1491
        %v1624 = vpack.c.b16 %v1496, %v1494
        %v1625 = vpack.c.b16 %v1497, %v1495
        %v1626 = vpack.c.b16 %v1500, %v1498
        %v1627 = vpack.c.b16 %v1501, %v1499
        %v1628 = vpack.c.b16 %v1504, %v1502
        %v1629 = vpack.c.b16 %v1505, %v1503
        %v1630 = vpack.c.b16 %v1508, %v1506
        %v1631 = vpack.c.b16 %v1509, %v1507
        %v1632 = vpack.c.b16 %v1512, %v1510
        %v1633 = vpack.c.b16 %v1513, %v1511
        %v1634 = vpack.c.b16 %v1516, %v1514
        %v1635 = vpack.c.b16 %v1517, %v1515
        %v1636 = vpack.c.b16 %v1520, %v1518
        %v1637 = vpack.c.b16 %v1521, %v1519
        %v1638 = vpack.c.b16 %v1524, %v1522
        %v1639 = vpack.c.b16 %v1525, %v1523
        %v1640 = vpack.c.b16 %v1528, %v1526
        %v1641 = vpack.c.b16 %v1529, %v1527
        %v1642 = vpack.c.b16 %v1532, %v1530
        %v1643 = vpack.c.b16 %v1533, %v1531
        %v1644 = vpack.c.b16 %v1536, %v1534
        %v1645 = vpack.c.b16 %v1537, %v1535
        %v1646 = vpack.c.b16 %v1540, %v1538
        %v1647 = vpack.c.b16 %v1541, %v1539
        %v1648 = vpack.c.b16 %v1544, %v1542
        %v1649 = vpack.c.b16 %v1545, %v1543
        %v1650 = vpack.c.b16 %v1548, %v1546
        %v1651 = vpack.c.b16 %v1549, %v1547
        %v1652 = vpack.c.b16 %v1552, %v1550
        %v1653 = vpack.c.b16 %v1553, %v1551
        %v1654 = vpack.c.b16 %v1556, %v1554
        %v1655 = vpack.c.b16 %v1557, %v1555
        %v1656 = vpack.c.b16 %v1560, %v1558
        %v1657 = vpack.c.b16 %v1561, %v1559
        %1754 = vmatprep.subr.bf16.mxu0 %v1563
        %1755 = vmatpush1.bf16.xpose.msra.mxu0 %v1562
        %1756 = vmatprep.subr.bf16.mxu0 %v1565
        %1757 = vmatpush1.bf16.xpose.msra.mxu0 %v1564
        %1758 = vmatprep.subr.bf16.mxu0 %v1567
        %1759 = vmatpush1.bf16.xpose.msra.mxu0 %v1566
        %1760 = vmatprep.subr.bf16.mxu0 %v1569
        %1761 = vmatpush1.bf16.xpose.msra.mxu0 %v1568
        %1762 = vmatprep.subr.bf16.mxu0 %v1571
        %1763 = vmatpush1.bf16.xpose.msra.mxu0 %v1570
        %1764 = vmatprep.subr.bf16.mxu0 %v1573
        %1765 = vmatpush1.bf16.xpose.msra.mxu0 %v1572
        %1766 = vmatprep.subr.bf16.mxu0 %v1575
        %1767 = vmatpush1.bf16.xpose.msra.mxu0 %v1574
        %1768 = vmatprep.subr.bf16.mxu0 %v1577
        %1769 = vmatpush1.bf16.xpose.msra.mxu0 %v1576
        %1770 = vmatprep.subr.bf16.mxu0 %v1579
        %1771 = vmatpush1.bf16.xpose.msra.mxu0 %v1578
        %1772 = vmatprep.subr.bf16.mxu0 %v1581
        %1773 = vmatpush1.bf16.xpose.msra.mxu0 %v1580
        %1774 = vmatprep.subr.bf16.mxu0 %v1583
        %1775 = vmatpush1.bf16.xpose.msra.mxu0 %v1582
        %1776 = vmatprep.subr.bf16.mxu0 %v1585
        %1777 = vmatpush1.bf16.xpose.msra.mxu0 %v1584
        %1778 = vmatprep.subr.bf16.mxu0 %v1587
        %1779 = vmatpush1.bf16.xpose.msra.mxu0 %v1586
        %1780 = vmatprep.subr.bf16.mxu0 %v1589
        %1781 = vmatpush1.bf16.xpose.msra.mxu0 %v1588
        %1782 = vmatprep.subr.bf16.mxu0 %v1591
        %1783 = vmatpush1.bf16.xpose.msra.mxu0 %v1590
        %1784 = vmatprep.subr.bf16.mxu0 %v1593
        %1785 = vmatpush1.bf16.xpose.msra.mxu0 %v1592
        %1786 = vmatprep.mubr.bf16.mxu0 %v1145
        %1787 = vmatmul.mubr.bf16.gmra.mrb[0].mxu0 %v1144
        %v1788 = vpop.f32.mrb[0].mxu0
        %v1789 = vadd.f32 %v1247, %v1788
        %v1790 = vpop.f32.mrb[0].mxu0
        %v1791 = vadd.f32 %v1251, %v1790
        %v1792 = vpop.f32.mrb[0].mxu0
        %v1793 = vpop.f32.mrb[0].mxu0
        %1794 = vdwg.mxu0
        %1795 = vmatprep.subr.bf16.mxu0 %v1595
        %1796 = vmatpush1.bf16.xpose.msra.mxu0 %v1594
        %1797 = vmatprep.subr.bf16.mxu0 %v1597
        %1798 = vmatpush1.bf16.xpose.msra.mxu0 %v1596
        %1799 = vmatprep.subr.bf16.mxu0 %v1599
        %1800 = vmatpush1.bf16.xpose.msra.mxu0 %v1598
        %1801 = vmatprep.subr.bf16.mxu0 %v1601
        %1802 = vmatpush1.bf16.xpose.msra.mxu0 %v1600
        %1803 = vmatprep.subr.bf16.mxu0 %v1603
        %1804 = vmatpush1.bf16.xpose.msra.mxu0 %v1602
        %1805 = vmatprep.subr.bf16.mxu0 %v1605
        %1806 = vmatpush1.bf16.xpose.msra.mxu0 %v1604
        %1807 = vmatprep.subr.bf16.mxu0 %v1607
        %1808 = vmatpush1.bf16.xpose.msra.mxu0 %v1606
        %1809 = vmatprep.subr.bf16.mxu0 %v1609
        %1810 = vmatpush1.bf16.xpose.msra.mxu0 %v1608
        %1811 = vmatprep.subr.bf16.mxu0 %v1611
        %1812 = vmatpush1.bf16.xpose.msra.mxu0 %v1610
        %1813 = vmatprep.subr.bf16.mxu0 %v1613
        %1814 = vmatpush1.bf16.xpose.msra.mxu0 %v1612
        %1815 = vmatprep.subr.bf16.mxu0 %v1615
        %1816 = vmatpush1.bf16.xpose.msra.mxu0 %v1614
        %1817 = vmatprep.subr.bf16.mxu0 %v1617
        %1818 = vmatpush1.bf16.xpose.msra.mxu0 %v1616
        %1819 = vmatprep.subr.bf16.mxu0 %v1619
        %1820 = vmatpush1.bf16.xpose.msra.mxu0 %v1618
        %1821 = vmatprep.subr.bf16.mxu0 %v1621
        %1822 = vmatpush1.bf16.xpose.msra.mxu0 %v1620
        %1823 = vmatprep.subr.bf16.mxu0 %v1623
        %1824 = vmatpush1.bf16.xpose.msra.mxu0 %v1622
        %1825 = vmatprep.subr.bf16.mxu0 %v1625
        %1826 = vmatpush1.bf16.xpose.msra.mxu0 %v1624
        %1827 = vmatprep.mubr.bf16.mxu0 %v1145
        %1828 = vmatmul.mubr.bf16.gmra.mrb[0].mxu0 %v1144
        %v1829 = vpop.f32.mrb[0].mxu0
        %v1830 = vadd.f32 %v1255, %v1829
        %v1831 = vpop.f32.mrb[0].mxu0
        %v1832 = vadd.f32 %v1259, %v1831
        %v1833 = vpop.f32.mrb[0].mxu0
        %v1834 = vpop.f32.mrb[0].mxu0
        %1835 = vdwg.mxu0
        %1836 = vmatprep.subr.bf16.mxu0 %v1627
        %1837 = vmatpush1.bf16.xpose.msra.mxu0 %v1626
        %1838 = vmatprep.subr.bf16.mxu0 %v1629
        %1839 = vmatpush1.bf16.xpose.msra.mxu0 %v1628
        %1840 = vmatprep.subr.bf16.mxu0 %v1631
        %1841 = vmatpush1.bf16.xpose.msra.mxu0 %v1630
        %1842 = vmatprep.subr.bf16.mxu0 %v1633
        %1843 = vmatpush1.bf16.xpose.msra.mxu0 %v1632
        %1844 = vmatprep.subr.bf16.mxu0 %v1635
        %1845 = vmatpush1.bf16.xpose.msra.mxu0 %v1634
        %1846 = vmatprep.subr.bf16.mxu0 %v1637
        %1847 = vmatpush1.bf16.xpose.msra.mxu0 %v1636
        %1848 = vmatprep.subr.bf16.mxu0 %v1639
        %1849 = vmatpush1.bf16.xpose.msra.mxu0 %v1638
        %1850 = vmatprep.subr.bf16.mxu0 %v1641
        %1851 = vmatpush1.bf16.xpose.msra.mxu0 %v1640
        %1852 = vmatprep.subr.bf16.mxu0 %v1643
        %1853 = vmatpush1.bf16.xpose.msra.mxu0 %v1642
        %1854 = vmatprep.subr.bf16.mxu0 %v1645
        %1855 = vmatpush1.bf16.xpose.msra.mxu0 %v1644
        %1856 = vmatprep.subr.bf16.mxu0 %v1647
        %1857 = vmatpush1.bf16.xpose.msra.mxu0 %v1646
        %1858 = vmatprep.subr.bf16.mxu0 %v1649
        %1859 = vmatpush1.bf16.xpose.msra.mxu0 %v1648
        %1860 = vmatprep.subr.bf16.mxu0 %v1651
        %1861 = vmatpush1.bf16.xpose.msra.mxu0 %v1650
        %1862 = vmatprep.subr.bf16.mxu0 %v1653
        %1863 = vmatpush1.bf16.xpose.msra.mxu0 %v1652
        %1864 = vmatprep.subr.bf16.mxu0 %v1655
        %1865 = vmatpush1.bf16.xpose.msra.mxu0 %v1654
        %1866 = vmatprep.subr.bf16.mxu0 %v1657
        %1867 = vmatpush1.bf16.xpose.msra.mxu0 %v1656
        %1868 = vmatprep.mubr.bf16.mxu0 %v1145
        %1869 = vmatmul.mubr.bf16.gmra.mrb[0].mxu0 %v1144
        %v1870 = vpop.f32.mrb[0].mxu0
        %v1871 = vadd.f32 %v1263, %v1870
        %v1872 = vpop.f32.mrb[0].mxu0
        %v1873 = vadd.f32 %v1267, %v1872
        %v1874 = vpop.f32.mrb[0].mxu0
        %v1875 = vpop.f32.mrb[0].mxu0
        %1876 = vdwg.mxu0
        %1877 = vmatprep.subr.mxu0 0.0
        %1878 = vmatpush1.xpose.msra.mxu0 %v1830
        %1879 = vmatprep.subr.mxu0 0.0
        %1880 = vmatpush1.xpose.msra.mxu0 0.0
        %1881 = vmatprep.subr.mxu0 0.0
        %1882 = vmatpush1.xpose.msra.mxu0 0.0
        %1883 = vmatprep.subr.mxu0 0.0
        %1884 = vmatpush1.xpose.msra.mxu0 0.0
        %1885 = vmatprep.subr.mxu0 0.0
        %1886 = vmatpush1.xpose.msra.mxu0 0.0
        %1887 = vmatprep.subr.mxu0 0.0
        %1888 = vmatpush1.xpose.msra.mxu0 0.0
        %1889 = vmatprep.subr.mxu0 0.0
        %1890 = vmatpush1.xpose.msra.mxu0 0.0
        %1891 = vmatprep.subr.mxu0 0.0
        %1892 = vmatpush1.xpose.msra.mxu0 0.0
        %1893 = vmatprep.subr.mxu0 0.0
        %1894 = vmatpush1.xpose.msra.mxu0 0.0
        %1895 = vmatprep.subr.mxu0 0.0
        %1896 = vmatpush1.xpose.msra.mxu0 0.0
        %1897 = vmatprep.subr.mxu0 0.0
        %1898 = vmatpush1.xpose.msra.mxu0 0.0
        %1899 = vmatprep.subr.mxu0 0.0
        %1900 = vmatpush1.xpose.msra.mxu0 0.0
        %1901 = vmatprep.subr.mxu0 0.0
        %1902 = vmatpush1.xpose.msra.mxu0 0.0
        %1903 = vmatprep.subr.mxu0 0.0
        %1904 = vmatpush1.xpose.msra.mxu0 0.0
        %1905 = vmatprep.subr.mxu0 0.0
        %1906 = vmatpush1.xpose.msra.mxu0 0.0
        %1907 = vmatprep.subr.mxu0 0.0
        %1908 = vmatpush1.xpose.msra.mxu0 0.0
        %1909 = vmatprep.subr.mxu0 0.0
        %1910 = vmatpush1.xpose.msra.mxu0 0.0
        %1911 = vmatprep.subr.mxu0 0.0
        %1912 = vmatpush1.xpose.msra.mxu0 0.0
        %1913 = vmatprep.subr.mxu0 0.0
        %1914 = vmatpush1.xpose.msra.mxu0 0.0
        %1915 = vmatprep.subr.mxu0 0.0
        %1916 = vmatpush1.xpose.msra.mxu0 0.0
        %1917 = vmatprep.subr.mxu0 0.0
        %1918 = vmatpush1.xpose.msra.mxu0 0.0
        %1919 = vmatprep.subr.mxu0 0.0
        %1920 = vmatpush1.xpose.msra.mxu0 0.0
        %1921 = vmatprep.subr.mxu0 0.0
        %1922 = vmatpush1.xpose.msra.mxu0 0.0
        %1923 = vmatprep.subr.mxu0 0.0
        %1924 = vmatpush1.xpose.msra.mxu0 0.0
        %1925 = vmatprep.subr.mxu0 0.0
        %1926 = vmatpush1.xpose.msra.mxu0 0.0
        %1927 = vmatprep.subr.mxu0 0.0
        %1928 = vmatpush1.xpose.msra.mxu0 0.0
        %1929 = vmatprep.subr.mxu0 0.0
        %1930 = vmatpush1.xpose.msra.mxu0 0.0
        %1931 = vmatprep.subr.mxu0 0.0
        %1932 = vmatpush1.xpose.msra.mxu0 0.0
        %1933 = vmatprep.subr.mxu0 0.0
        %1934 = vmatpush1.xpose.msra.mxu0 0.0
        %1935 = vmatprep.subr.mxu0 0.0
        %1936 = vmatpush1.xpose.msra.mxu0 0.0
        %1937 = vmatprep.subr.mxu0 0.0
        %1938 = vmatpush1.xpose.msra.mxu0 0.0
        %1939 = vmatprep.subr.mxu0 0.0
        %1940 = vmatpush1.xpose.msra.mxu0 0.0
        %1941 = vmatprep.mubr.f32.mxu0 0.0
        %1942 = vmatmul.mubr.f32.gmra.mrb[0].mxu0 %v1789
        %v1943 = vpop.f32.mrb[0].mxu0
        %v1944 = vadd.f32 0.0, %v1943
        %v1945 = vpop.f32.mrb[0].mxu0
        %1946 = vdwg.mxu0
        %1947 = vmatprep.subr.mxu0 0.0
        %1948 = vmatpush1.xpose.msra.mxu0 %v1832
        %1949 = vmatprep.subr.mxu0 0.0
        %1950 = vmatpush1.xpose.msra.mxu0 0.0
        %1951 = vmatprep.subr.mxu0 0.0
        %1952 = vmatpush1.xpose.msra.mxu0 0.0
        %1953 = vmatprep.subr.mxu0 0.0
        %1954 = vmatpush1.xpose.msra.mxu0 0.0
        %1955 = vmatprep.subr.mxu0 0.0
        %1956 = vmatpush1.xpose.msra.mxu0 0.0
        %1957 = vmatprep.subr.mxu0 0.0
        %1958 = vmatpush1.xpose.msra.mxu0 0.0
        %1959 = vmatprep.subr.mxu0 0.0
        %1960 = vmatpush1.xpose.msra.mxu0 0.0
        %1961 = vmatprep.subr.mxu0 0.0
        %1962 = vmatpush1.xpose.msra.mxu0 0.0
        %1963 = vmatprep.subr.mxu0 0.0
        %1964 = vmatpush1.xpose.msra.mxu0 0.0
        %1965 = vmatprep.subr.mxu0 0.0
        %1966 = vmatpush1.xpose.msra.mxu0 0.0
        %1967 = vmatprep.subr.mxu0 0.0
        %1968 = vmatpush1.xpose.msra.mxu0 0.0
        %1969 = vmatprep.subr.mxu0 0.0
        %1970 = vmatpush1.xpose.msra.mxu0 0.0
        %1971 = vmatprep.subr.mxu0 0.0
        %1972 = vmatpush1.xpose.msra.mxu0 0.0
        %1973 = vmatprep.subr.mxu0 0.0
        %1974 = vmatpush1.xpose.msra.mxu0 0.0
        %1975 = vmatprep.subr.mxu0 0.0
        %1976 = vmatpush1.xpose.msra.mxu0 0.0
        %1977 = vmatprep.subr.mxu0 0.0
        %1978 = vmatpush1.xpose.msra.mxu0 0.0
        %1979 = vmatprep.subr.mxu0 0.0
        %1980 = vmatpush1.xpose.msra.mxu0 0.0
        %1981 = vmatprep.subr.mxu0 0.0
        %1982 = vmatpush1.xpose.msra.mxu0 0.0
        %1983 = vmatprep.subr.mxu0 0.0
        %1984 = vmatpush1.xpose.msra.mxu0 0.0
        %1985 = vmatprep.subr.mxu0 0.0
        %1986 = vmatpush1.xpose.msra.mxu0 0.0
        %1987 = vmatprep.subr.mxu0 0.0
        %1988 = vmatpush1.xpose.msra.mxu0 0.0
        %1989 = vmatprep.subr.mxu0 0.0
        %1990 = vmatpush1.xpose.msra.mxu0 0.0
        %1991 = vmatprep.subr.mxu0 0.0
        %1992 = vmatpush1.xpose.msra.mxu0 0.0
        %1993 = vmatprep.subr.mxu0 0.0
        %1994 = vmatpush1.xpose.msra.mxu0 0.0
        %1995 = vmatprep.subr.mxu0 0.0
        %1996 = vmatpush1.xpose.msra.mxu0 0.0
        %1997 = vmatprep.subr.mxu0 0.0
        %1998 = vmatpush1.xpose.msra.mxu0 0.0
        %1999 = vmatprep.subr.mxu0 0.0
        %2000 = vmatpush1.xpose.msra.mxu0 0.0
        %2001 = vmatprep.subr.mxu0 0.0
        %2002 = vmatpush1.xpose.msra.mxu0 0.0
        %2003 = vmatprep.subr.mxu0 0.0
        %2004 = vmatpush1.xpose.msra.mxu0 0.0
        %2005 = vmatprep.subr.mxu0 0.0
        %2006 = vmatpush1.xpose.msra.mxu0 0.0
        %2007 = vmatprep.subr.mxu0 0.0
        %2008 = vmatpush1.xpose.msra.mxu0 0.0
        %2009 = vmatprep.subr.mxu0 0.0
        %2010 = vmatpush1.xpose.msra.mxu0 0.0
        %2011 = vmatprep.mubr.f32.mxu0 0.0
        %2012 = vmatmul.mubr.f32.gmra.mrb[0].mxu0 %v1791
        %v2013 = vpop.f32.mrb[0].mxu0
        %v2014 = vadd.f32 0.0, %v2013
        %v2015 = vpop.f32.mrb[0].mxu0
        %2016 = vdwg.mxu0
        %v2017 = vmul.f32 %v1944, 0.088388346
        %v2018 = vmul.f32 %v2014, 0.088388346
        %vm2019 = vcmask 64512
        %v2020 = vsel %vm2019, %v2017, -inf
        %2021 = vmax.xlane.f32.xlu0 %v2020
        %v2022 = vpop.xlane.xlu0 %2021
        %v2023 = vsel %vm2019, %v2018, -inf
        %2024 = vmax.xlane.f32.xlu0 %v2023
        %v2025 = vpop.xlane.xlu0 %2024
        %v2026 = vsub.f32 %v2017, %v2022
        %v2027 = vsub.f32 %v2018, %v2025
        %v2028 = vmul.f32 %v2026, 1.442695
        %v2029 = vpow.pop %v2028
        %v2030 = vmul.f32 %v2027, 1.442695
        %v2031 = vpow.pop %v2030
        %v2032 = vsel %vm2019, %v2029, 0.0
        %2033 = vadd.xlane.f32.xlu0 %v2032
        %v2034 = vpop.xlane.xlu0 %2033
        %v2035 = vsel %vm2019, %v2031, 0.0
        %2036 = vadd.xlane.f32.xlu0 %v2035
        %v2037 = vpop.xlane.xlu0 %2036
        %v2038 = vrcp.pop %v2034
        %v2039 = vrcp.pop %v2037
        %v2040 = vmul.f32 %v2029, %v2038
        %v2041 = vmul.f32 %v2031, %v2039
        %v2043 = vsel %vm2019, %v2040, 0
        %2045 = vmatprep.subr.mxu0 0.0
        %2046 = vmatpush1.msra.mxu0 %v1871
        %2047 = vmatprep.subr.mxu0 0.0
        %2048 = vmatpush1.msra.mxu0 0.0
        %2049 = vmatprep.subr.mxu0 0.0
        %2050 = vmatpush1.msra.mxu0 0.0
        %2051 = vmatprep.subr.mxu0 0.0
        %2052 = vmatpush1.msra.mxu0 0.0
        %2053 = vmatprep.subr.mxu0 0.0
        %2054 = vmatpush1.msra.mxu0 0.0
        %2055 = vmatprep.subr.mxu0 0.0
        %2056 = vmatpush1.msra.mxu0 0.0
        %2057 = vmatprep.subr.mxu0 0.0
        %2058 = vmatpush1.msra.mxu0 0.0
        %2059 = vmatprep.subr.mxu0 0.0
        %2060 = vmatpush1.msra.mxu0 0.0
        %2061 = vmatprep.subr.mxu0 0.0
        %2062 = vmatpush1.msra.mxu0 0.0
        %2063 = vmatprep.subr.mxu0 0.0
        %2064 = vmatpush1.msra.mxu0 0.0
        %2065 = vmatprep.subr.mxu0 0.0
        %2066 = vmatpush1.msra.mxu0 0.0
        %2067 = vmatprep.subr.mxu0 0.0
        %2068 = vmatpush1.msra.mxu0 0.0
        %2069 = vmatprep.subr.mxu0 0.0
        %2070 = vmatpush1.msra.mxu0 0.0
        %2071 = vmatprep.subr.mxu0 0.0
        %2072 = vmatpush1.msra.mxu0 0.0
        %2073 = vmatprep.subr.mxu0 0.0
        %2074 = vmatpush1.msra.mxu0 0.0
        %2075 = vmatprep.subr.mxu0 0.0
        %2076 = vmatpush1.msra.mxu0 0.0
        %2077 = vmatprep.subr.mxu0 0.0
        %2078 = vmatpush1.msra.mxu0 0.0
        %2079 = vmatprep.subr.mxu0 0.0
        %2080 = vmatpush1.msra.mxu0 0.0
        %2081 = vmatprep.subr.mxu0 0.0
        %2082 = vmatpush1.msra.mxu0 0.0
        %2083 = vmatprep.subr.mxu0 0.0
        %2084 = vmatpush1.msra.mxu0 0.0
        %2085 = vmatprep.subr.mxu0 0.0
        %2086 = vmatpush1.msra.mxu0 0.0
        %2087 = vmatprep.subr.mxu0 0.0
        %2088 = vmatpush1.msra.mxu0 0.0
        %2089 = vmatprep.subr.mxu0 0.0
        %2090 = vmatpush1.msra.mxu0 0.0
        %2091 = vmatprep.subr.mxu0 0.0
        %2092 = vmatpush1.msra.mxu0 0.0
        %2093 = vmatprep.subr.mxu0 0.0
        %2094 = vmatpush1.msra.mxu0 0.0
        %2095 = vmatprep.subr.mxu0 0.0
        %2096 = vmatpush1.msra.mxu0 0.0
        %2097 = vmatprep.subr.mxu0 0.0
        %2098 = vmatpush1.msra.mxu0 0.0
        %2099 = vmatprep.subr.mxu0 0.0
        %2100 = vmatpush1.msra.mxu0 0.0
        %2101 = vmatprep.subr.mxu0 0.0
        %2102 = vmatpush1.msra.mxu0 0.0
        %2103 = vmatprep.subr.mxu0 0.0
        %2104 = vmatpush1.msra.mxu0 0.0
        %2105 = vmatprep.subr.mxu0 0.0
        %2106 = vmatpush1.msra.mxu0 0.0
        %2107 = vmatprep.subr.mxu0 0.0
        %2108 = vmatpush1.msra.mxu0 0.0
        %2109 = vmatprep.mubr.f32.mxu0 0.0
        %2110 = vmatmul.mubr.f32.gmra.mrb[0].mxu0 %v2043
        %v2111 = vpop.f32.mrb[0].mxu0
        %v2112 = vadd.f32 0.0, %v2111
        %v2113 = vpop.f32.mrb[0].mxu0
        %2114 = vdwg.mxu0
        %v2116 = vsel %vm2019, %v2041, 0
        %2118 = vmatprep.subr.mxu0 0.0
        %2119 = vmatpush1.msra.mxu0 %v1873
        %2120 = vmatprep.subr.mxu0 0.0
        %2121 = vmatpush1.msra.mxu0 0.0
        %2122 = vmatprep.subr.mxu0 0.0
        %2123 = vmatpush1.msra.mxu0 0.0
        %2124 = vmatprep.subr.mxu0 0.0
        %2125 = vmatpush1.msra.mxu0 0.0
        %2126 = vmatprep.subr.mxu0 0.0
        %2127 = vmatpush1.msra.mxu0 0.0
        %2128 = vmatprep.subr.mxu0 0.0
        %2129 = vmatpush1.msra.mxu0 0.0
        %2130 = vmatprep.subr.mxu0 0.0
        %2131 = vmatpush1.msra.mxu0 0.0
        %2132 = vmatprep.subr.mxu0 0.0
        %2133 = vmatpush1.msra.mxu0 0.0
        %2134 = vmatprep.subr.mxu0 0.0
        %2135 = vmatpush1.msra.mxu0 0.0
        %2136 = vmatprep.subr.mxu0 0.0
        %2137 = vmatpush1.msra.mxu0 0.0
        %2138 = vmatprep.subr.mxu0 0.0
        %2139 = vmatpush1.msra.mxu0 0.0
        %2140 = vmatprep.subr.mxu0 0.0
        %2141 = vmatpush1.msra.mxu0 0.0
        %2142 = vmatprep.subr.mxu0 0.0
        %2143 = vmatpush1.msra.mxu0 0.0
        %2144 = vmatprep.subr.mxu0 0.0
        %2145 = vmatpush1.msra.mxu0 0.0
        %2146 = vmatprep.subr.mxu0 0.0
        %2147 = vmatpush1.msra.mxu0 0.0
        %2148 = vmatprep.subr.mxu0 0.0
        %2149 = vmatpush1.msra.mxu0 0.0
        %2150 = vmatprep.subr.mxu0 0.0
        %2151 = vmatpush1.msra.mxu0 0.0
        %2152 = vmatprep.subr.mxu0 0.0
        %2153 = vmatpush1.msra.mxu0 0.0
        %2154 = vmatprep.subr.mxu0 0.0
        %2155 = vmatpush1.msra.mxu0 0.0
        %2156 = vmatprep.subr.mxu0 0.0
        %2157 = vmatpush1.msra.mxu0 0.0
        %2158 = vmatprep.subr.mxu0 0.0
        %2159 = vmatpush1.msra.mxu0 0.0
        %2160 = vmatprep.subr.mxu0 0.0
        %2161 = vmatpush1.msra.mxu0 0.0
        %2162 = vmatprep.subr.mxu0 0.0
        %2163 = vmatpush1.msra.mxu0 0.0
        %2164 = vmatprep.subr.mxu0 0.0
        %2165 = vmatpush1.msra.mxu0 0.0
        %2166 = vmatprep.subr.mxu0 0.0
        %2167 = vmatpush1.msra.mxu0 0.0
        %2168 = vmatprep.subr.mxu0 0.0
        %2169 = vmatpush1.msra.mxu0 0.0
        %2170 = vmatprep.subr.mxu0 0.0
        %2171 = vmatpush1.msra.mxu0 0.0
        %2172 = vmatprep.subr.mxu0 0.0
        %2173 = vmatpush1.msra.mxu0 0.0
        %2174 = vmatprep.subr.mxu0 0.0
        %2175 = vmatpush1.msra.mxu0 0.0
        %2176 = vmatprep.subr.mxu0 0.0
        %2177 = vmatpush1.msra.mxu0 0.0
        %2178 = vmatprep.subr.mxu0 0.0
        %2179 = vmatpush1.msra.mxu0 0.0
        %2180 = vmatprep.subr.mxu0 0.0
        %2181 = vmatpush1.msra.mxu0 0.0
        %2182 = vmatprep.mubr.f32.mxu0 0.0
        %2183 = vmatmul.mubr.f32.gmra.mrb[0].mxu0 %v2116
        %v2184 = vpop.f32.mrb[0].mxu0
        %v2185 = vadd.f32 0.0, %v2184
        %v2186 = vpop.f32.mrb[0].mxu0
        %2187 = vdwg.mxu0
        %v2188 = vpack.c.bf16 %v2112, %v2112
        %v2189 = vpack.c.bf16 %v2185, %v2185
        %v2190 = vld [vmem:[%s899] sm:$0xff]
        %v2191 = vld [vmem:[%s899 + $0x8] sm:$0xff]
        %v2192 = vld [vmem:[%s899 + $0x10] sm:$0xff]
        %v2193 = vld [vmem:[%s899 + $0x18] sm:$0xff]
        %v2194 = vld [vmem:[%s899 + $0x20] sm:$0xff]
        %v2195 = vld [vmem:[%s899 + $0x28] sm:$0xff]
        %v2196 = vld [vmem:[%s899 + $0x30] sm:$0xff]
        %v2197 = vld [vmem:[%s899 + $0x38] sm:$0xff]
        %v2198 = vld [vmem:[%s899 + $0x40] sm:$0xff]
        %v2199 = vld [vmem:[%s899 + $0x48] sm:$0xff]
        %v2200 = vld [vmem:[%s899 + $0x50] sm:$0xff]
        %v2201 = vld [vmem:[%s899 + $0x58] sm:$0xff]
        %v2202 = vld [vmem:[%s899 + $0x60] sm:$0xff]
        %v2203 = vld [vmem:[%s899 + $0x68] sm:$0xff]
        %v2204 = vld [vmem:[%s899 + $0x70] sm:$0xff]
        %v2205 = vld [vmem:[%s899 + $0x78] sm:$0xff]
        %v2206 = vld [vmem:[%s899 + $0x80] sm:$0xff]
        %v2207 = vld [vmem:[%s899 + $0x88] sm:$0xff]
        %v2208 = vld [vmem:[%s899 + $0x90] sm:$0xff]
        %v2209 = vld [vmem:[%s899 + $0x98] sm:$0xff]
        %v2210 = vld [vmem:[%s899 + $0xa0] sm:$0xff]
        %v2211 = vld [vmem:[%s899 + $0xa8] sm:$0xff]
        %v2212 = vld [vmem:[%s899 + $0xb0] sm:$0xff]
        %v2213 = vld [vmem:[%s899 + $0xb8] sm:$0xff]
        %v2214 = vld [vmem:[%s899 + $0xc0] sm:$0xff]
        %v2215 = vld [vmem:[%s899 + $0xc8] sm:$0xff]
        %v2216 = vld [vmem:[%s899 + $0xd0] sm:$0xff]
        %v2217 = vld [vmem:[%s899 + $0xd8] sm:$0xff]
        %v2218 = vld [vmem:[%s899 + $0xe0] sm:$0xff]
        %v2219 = vld [vmem:[%s899 + $0xe8] sm:$0xff]
        %v2220 = vld [vmem:[%s899 + $0xf0] sm:$0xff]
        %v2221 = vld [vmem:[%s899 + $0xf8] sm:$0xff]
        %v2222 = vld [vmem:[%s1055] sm:$0x3]
        %v2224 = vlaneseq
        %v2225 = vshrl.u32 %v2224, 7
        %v2226 = vsub.s32 0, %v2225
        %v2227 = vrot.slane %v2222, %v2226
        %v2228 = vlaneseq
        %v2229 = vshrl.u32 %v2228, 7
        %v2230 = vsub.s32 1, %v2229
        %v2231 = vrot.slane %v2222, %v2230
        %v2266 = vunpack.c.l.b16 %v2190
        %v2267 = vunpack.c.h.b16 %v2190
        %v2268 = vunpack.c.l.b16 %v2191
        %v2269 = vunpack.c.h.b16 %v2191
        %v2270 = vunpack.c.l.b16 %v2192
        %v2271 = vunpack.c.h.b16 %v2192
        %v2272 = vunpack.c.l.b16 %v2193
        %v2273 = vunpack.c.h.b16 %v2193
        %v2274 = vunpack.c.l.b16 %v2194
        %v2275 = vunpack.c.h.b16 %v2194
        %v2276 = vunpack.c.l.b16 %v2195
        %v2277 = vunpack.c.h.b16 %v2195
        %v2278 = vunpack.c.l.b16 %v2196
        %v2279 = vunpack.c.h.b16 %v2196
        %v2280 = vunpack.c.l.b16 %v2197
        %v2281 = vunpack.c.h.b16 %v2197
        %v2282 = vunpack.c.l.b16 %v2198
        %v2283 = vunpack.c.h.b16 %v2198
        %v2284 = vunpack.c.l.b16 %v2199
        %v2285 = vunpack.c.h.b16 %v2199
        %v2286 = vunpack.c.l.b16 %v2200
        %v2287 = vunpack.c.h.b16 %v2200
        %v2288 = vunpack.c.l.b16 %v2201
        %v2289 = vunpack.c.h.b16 %v2201
        %v2290 = vunpack.c.l.b16 %v2202
        %v2291 = vunpack.c.h.b16 %v2202
        %v2292 = vunpack.c.l.b16 %v2203
        %v2293 = vunpack.c.h.b16 %v2203
        %v2294 = vunpack.c.l.b16 %v2204
        %v2295 = vunpack.c.h.b16 %v2204
        %v2296 = vunpack.c.l.b16 %v2205
        %v2297 = vunpack.c.h.b16 %v2205
        %v2298 = vunpack.c.l.b16 %v2206
        %v2299 = vunpack.c.h.b16 %v2206
        %v2300 = vunpack.c.l.b16 %v2207
        %v2301 = vunpack.c.h.b16 %v2207
        %v2302 = vunpack.c.l.b16 %v2208
        %v2303 = vunpack.c.h.b16 %v2208
        %v2304 = vunpack.c.l.b16 %v2209
        %v2305 = vunpack.c.h.b16 %v2209
        %v2306 = vunpack.c.l.b16 %v2210
        %v2307 = vunpack.c.h.b16 %v2210
        %v2308 = vunpack.c.l.b16 %v2211
        %v2309 = vunpack.c.h.b16 %v2211
        %v2310 = vunpack.c.l.b16 %v2212
        %v2311 = vunpack.c.h.b16 %v2212
        %v2312 = vunpack.c.l.b16 %v2213
        %v2313 = vunpack.c.h.b16 %v2213
        %v2314 = vunpack.c.l.b16 %v2214
        %v2315 = vunpack.c.h.b16 %v2214
        %v2316 = vunpack.c.l.b16 %v2215
        %v2317 = vunpack.c.h.b16 %v2215
        %v2318 = vunpack.c.l.b16 %v2216
        %v2319 = vunpack.c.h.b16 %v2216
        %v2320 = vunpack.c.l.b16 %v2217
        %v2321 = vunpack.c.h.b16 %v2217
        %v2322 = vunpack.c.l.b16 %v2218
        %v2323 = vunpack.c.h.b16 %v2218
        %v2324 = vunpack.c.l.b16 %v2219
        %v2325 = vunpack.c.h.b16 %v2219
        %v2326 = vunpack.c.l.b16 %v2220
        %v2327 = vunpack.c.h.b16 %v2220
        %v2328 = vunpack.c.l.b16 %v2221
        %v2329 = vunpack.c.h.b16 %v2221
        %v2330 = vpack.c.b16 %v2268, %v2266
        %v2331 = vpack.c.b16 %v2269, %v2267
        %v2332 = vpack.c.b16 %v2272, %v2270
        %v2333 = vpack.c.b16 %v2273, %v2271
        %v2334 = vpack.c.b16 %v2276, %v2274
        %v2335 = vpack.c.b16 %v2277, %v2275
        %v2336 = vpack.c.b16 %v2280, %v2278
        %v2337 = vpack.c.b16 %v2281, %v2279
        %v2338 = vpack.c.b16 %v2284, %v2282
        %v2339 = vpack.c.b16 %v2285, %v2283
        %v2340 = vpack.c.b16 %v2288, %v2286
        %v2341 = vpack.c.b16 %v2289, %v2287
        %v2342 = vpack.c.b16 %v2292, %v2290
        %v2343 = vpack.c.b16 %v2293, %v2291
        %v2344 = vpack.c.b16 %v2296, %v2294
        %v2345 = vpack.c.b16 %v2297, %v2295
        %v2346 = vpack.c.b16 %v2300, %v2298
        %v2347 = vpack.c.b16 %v2301, %v2299
        %v2348 = vpack.c.b16 %v2304, %v2302
        %v2349 = vpack.c.b16 %v2305, %v2303
        %v2350 = vpack.c.b16 %v2308, %v2306
        %v2351 = vpack.c.b16 %v2309, %v2307
        %v2352 = vpack.c.b16 %v2312, %v2310
        %v2353 = vpack.c.b16 %v2313, %v2311
        %v2354 = vpack.c.b16 %v2316, %v2314
        %v2355 = vpack.c.b16 %v2317, %v2315
        %v2356 = vpack.c.b16 %v2320, %v2318
        %v2357 = vpack.c.b16 %v2321, %v2319
        %v2358 = vpack.c.b16 %v2324, %v2322
        %v2359 = vpack.c.b16 %v2325, %v2323
        %v2360 = vpack.c.b16 %v2328, %v2326
        %v2361 = vpack.c.b16 %v2329, %v2327
        %2394 = vmatprep.subr.bf16.mxu0 %v2331
        %2395 = vmatpush1.bf16.xpose.msra.mxu0 %v2330
        %2396 = vmatprep.subr.bf16.mxu0 %v2333
        %2397 = vmatpush1.bf16.xpose.msra.mxu0 %v2332
        %2398 = vmatprep.subr.bf16.mxu0 %v2335
        %2399 = vmatpush1.bf16.xpose.msra.mxu0 %v2334
        %2400 = vmatprep.subr.bf16.mxu0 %v2337
        %2401 = vmatpush1.bf16.xpose.msra.mxu0 %v2336
        %2402 = vmatprep.subr.bf16.mxu0 %v2339
        %2403 = vmatpush1.bf16.xpose.msra.mxu0 %v2338
        %2404 = vmatprep.subr.bf16.mxu0 %v2341
        %2405 = vmatpush1.bf16.xpose.msra.mxu0 %v2340
        %2406 = vmatprep.subr.bf16.mxu0 %v2343
        %2407 = vmatpush1.bf16.xpose.msra.mxu0 %v2342
        %2408 = vmatprep.subr.bf16.mxu0 %v2345
        %2409 = vmatpush1.bf16.xpose.msra.mxu0 %v2344
        %2410 = vmatprep.subr.bf16.mxu0 %v2347
        %2411 = vmatpush1.bf16.xpose.msra.mxu0 %v2346
        %2412 = vmatprep.subr.bf16.mxu0 %v2349
        %2413 = vmatpush1.bf16.xpose.msra.mxu0 %v2348
        %2414 = vmatprep.subr.bf16.mxu0 %v2351
        %2415 = vmatpush1.bf16.xpose.msra.mxu0 %v2350
        %2416 = vmatprep.subr.bf16.mxu0 %v2353
        %2417 = vmatpush1.bf16.xpose.msra.mxu0 %v2352
        %2418 = vmatprep.subr.bf16.mxu0 %v2355
        %2419 = vmatpush1.bf16.xpose.msra.mxu0 %v2354
        %2420 = vmatprep.subr.bf16.mxu0 %v2357
        %2421 = vmatpush1.bf16.xpose.msra.mxu0 %v2356
        %2422 = vmatprep.subr.bf16.mxu0 %v2359
        %2423 = vmatpush1.bf16.xpose.msra.mxu0 %v2358
        %2424 = vmatprep.subr.bf16.mxu0 %v2361
        %2425 = vmatpush1.bf16.xpose.msra.mxu0 %v2360
        %2426 = vmatprep.mubr.bf16.mxu0 %v2189
        %2427 = vmatmul.mubr.bf16.gmra.mrb[0].mxu0 %v2188
        %v2428 = vpop.f32.mrb[0].mxu0
        %v2429 = vadd.f32 %v2227, %v2428
        %v2430 = vpop.f32.mrb[0].mxu0
        %v2431 = vadd.f32 %v2231, %v2430
        %v2432 = vpop.f32.mrb[0].mxu0
        %v2433 = vpop.f32.mrb[0].mxu0
        %2434 = vdwg.mxu0
        %v2435 = vadd.f32 %v2429, %v1142
        %v2436 = vadd.f32 %v2431, %v1143
        %v2437 = vld [vmem:[%s1059] sm:$0x3]
        %v2438 = vld [vmem:[%s1063] sm:$0x3]
        %v2439 = vadd.f32 %v2435, %v2436
        %2440 = vadd.xlane.f32.xlu0 %v2439
        %v2441 = vpop.xlane.xlu0 %2440
        %v2442 = vrcp.pop 256.0
        %v2443 = vmul.f32 %v2441, %v2442
        %v2444 = vsub.f32 %v2435, %v2443
        %v2445 = vsub.f32 %v2436, %v2443
        %v2446 = vmul.f32 %v2444, %v2444
        %v2447 = vmul.f32 %v2445, %v2445
        %v2448 = vadd.f32 %v2446, %v2447
        %2449 = vadd.xlane.f32.xlu0 %v2448
        %v2450 = vpop.xlane.xlu0 %2449
        %v2451 = vmul.f32 %v2450, %v2442
        %v2452 = vadd.f32 %v2451, 1e-12
        %v2453 = vrsqrt.pop %v2452
        %v2454 = vmul.f32 %v2444, %v2453
        %v2455 = vmul.f32 %v2445, %v2453
        %v2457 = vlaneseq
        %v2458 = vshrl.u32 %v2457, 7
        %v2459 = vsub.s32 0, %v2458
        %v2460 = vrot.slane %v2437, %v2459
        %v2461 = vlaneseq
        %v2462 = vshrl.u32 %v2461, 7
        %v2463 = vsub.s32 1, %v2462
        %v2464 = vrot.slane %v2437, %v2463
        %v2467 = vmul.f32 %v2454, %v2460
        %v2468 = vmul.f32 %v2455, %v2464
        %v2470 = vlaneseq
        %v2471 = vshrl.u32 %v2470, 7
        %v2472 = vsub.s32 0, %v2471
        %v2473 = vrot.slane %v2438, %v2472
        %v2474 = vlaneseq
        %v2475 = vshrl.u32 %v2474, 7
        %v2476 = vsub.s32 1, %v2475
        %v2477 = vrot.slane %v2438, %v2476
        %v2480 = vadd.f32 %v2467, %v2473
        %v2481 = vadd.f32 %v2468, %v2477
        %v2482 = vpack.c.bf16 %v2480, %v2480
        %v2483 = vpack.c.bf16 %v2481, %v2481
        %v2484 = vld [vmem:[%s908] sm:$0xff]
        %v2485 = vld [vmem:[%s908 + $0x8] sm:$0xff]
        %v2486 = vld [vmem:[%s908 + $0x10] sm:$0xff]
        %v2487 = vld [vmem:[%s908 + $0x18] sm:$0xff]
        %v2488 = vld [vmem:[%s908 + $0x20] sm:$0xff]
        %v2489 = vld [vmem:[%s908 + $0x28] sm:$0xff]
        %v2490 = vld [vmem:[%s908 + $0x30] sm:$0xff]
        %v2491 = vld [vmem:[%s908 + $0x38] sm:$0xff]
        %v2492 = vld [vmem:[%s908 + $0x40] sm:$0xff]
        %v2493 = vld [vmem:[%s908 + $0x48] sm:$0xff]
        %v2494 = vld [vmem:[%s908 + $0x50] sm:$0xff]
        %v2495 = vld [vmem:[%s908 + $0x58] sm:$0xff]
        %v2496 = vld [vmem:[%s908 + $0x60] sm:$0xff]
        %v2497 = vld [vmem:[%s908 + $0x68] sm:$0xff]
        %v2498 = vld [vmem:[%s908 + $0x70] sm:$0xff]
        %v2499 = vld [vmem:[%s908 + $0x78] sm:$0xff]
        %v2500 = vld [vmem:[%s908 + $0x80] sm:$0xff]
        %v2501 = vld [vmem:[%s908 + $0x88] sm:$0xff]
        %v2502 = vld [vmem:[%s908 + $0x90] sm:$0xff]
        %v2503 = vld [vmem:[%s908 + $0x98] sm:$0xff]
        %v2504 = vld [vmem:[%s908 + $0xa0] sm:$0xff]
        %v2505 = vld [vmem:[%s908 + $0xa8] sm:$0xff]
        %v2506 = vld [vmem:[%s908 + $0xb0] sm:$0xff]
        %v2507 = vld [vmem:[%s908 + $0xb8] sm:$0xff]
        %v2508 = vld [vmem:[%s908 + $0xc0] sm:$0xff]
        %v2509 = vld [vmem:[%s908 + $0xc8] sm:$0xff]
        %v2510 = vld [vmem:[%s908 + $0xd0] sm:$0xff]
        %v2511 = vld [vmem:[%s908 + $0xd8] sm:$0xff]
        %v2512 = vld [vmem:[%s908 + $0xe0] sm:$0xff]
        %v2513 = vld [vmem:[%s908 + $0xe8] sm:$0xff]
        %v2514 = vld [vmem:[%s908 + $0xf0] sm:$0xff]
        %v2515 = vld [vmem:[%s908 + $0xf8] sm:$0xff]
        %v2516 = vld [vmem:[%s908 + $0x100] sm:$0xff]
        %v2517 = vld [vmem:[%s908 + $0x108] sm:$0xff]
        %v2518 = vld [vmem:[%s908 + $0x110] sm:$0xff]
        %v2519 = vld [vmem:[%s908 + $0x118] sm:$0xff]
        %v2520 = vld [vmem:[%s908 + $0x120] sm:$0xff]
        %v2521 = vld [vmem:[%s908 + $0x128] sm:$0xff]
        %v2522 = vld [vmem:[%s908 + $0x130] sm:$0xff]
        %v2523 = vld [vmem:[%s908 + $0x138] sm:$0xff]
        %v2524 = vld [vmem:[%s908 + $0x140] sm:$0xff]
        %v2525 = vld [vmem:[%s908 + $0x148] sm:$0xff]
        %v2526 = vld [vmem:[%s908 + $0x150] sm:$0xff]
        %v2527 = vld [vmem:[%s908 + $0x158] sm:$0xff]
        %v2528 = vld [vmem:[%s908 + $0x160] sm:$0xff]
        %v2529 = vld [vmem:[%s908 + $0x168] sm:$0xff]
        %v2530 = vld [vmem:[%s908 + $0x170] sm:$0xff]
        %v2531 = vld [vmem:[%s908 + $0x178] sm:$0xff]
        %v2532 = vld [vmem:[%s908 + $0x180] sm:$0xff]
        %v2533 = vld [vmem:[%s908 + $0x188] sm:$0xff]
        %v2534 = vld [vmem:[%s908 + $0x190] sm:$0xff]
        %v2535 = vld [vmem:[%s908 + $0x198] sm:$0xff]
        %v2536 = vld [vmem:[%s908 + $0x1a0] sm:$0xff]
        %v2537 = vld [vmem:[%s908 + $0x1a8] sm:$0xff]
        %v2538 = vld [vmem:[%s908 + $0x1b0] sm:$0xff]
        %v2539 = vld [vmem:[%s908 + $0x1b8] sm:$0xff]
        %v2540 = vld [vmem:[%s908 + $0x1c0] sm:$0xff]
        %v2541 = vld [vmem:[%s908 + $0x1c8] sm:$0xff]
        %v2542 = vld [vmem:[%s908 + $0x1d0] sm:$0xff]
        %v2543 = vld [vmem:[%s908 + $0x1d8] sm:$0xff]
        %v2544 = vld [vmem:[%s908 + $0x1e0] sm:$0xff]
        %v2545 = vld [vmem:[%s908 + $0x1e8] sm:$0xff]
        %v2546 = vld [vmem:[%s908 + $0x1f0] sm:$0xff]
        %v2547 = vld [vmem:[%s908 + $0x1f8] sm:$0xff]
        %v2548 = vld [vmem:[%s1067] sm:$0xf]
        %v2550 = vlaneseq
        %v2551 = vshrl.u32 %v2550, 7
        %v2552 = vsub.s32 0, %v2551
        %v2553 = vrot.slane %v2548, %v2552
        %v2554 = vlaneseq
        %v2555 = vshrl.u32 %v2554, 7
        %v2556 = vsub.s32 1, %v2555
        %v2557 = vrot.slane %v2548, %v2556
        %v2558 = vlaneseq
        %v2559 = vshrl.u32 %v2558, 7
        %v2560 = vsub.s32 2, %v2559
        %v2561 = vrot.slane %v2548, %v2560
        %v2562 = vlaneseq
        %v2563 = vshrl.u32 %v2562, 7
        %v2564 = vsub.s32 3, %v2563
        %v2565 = vrot.slane %v2548, %v2564
        %v2634 = vunpack.c.l.b16 %v2484
        %v2635 = vunpack.c.h.b16 %v2484
        %v2636 = vunpack.c.l.b16 %v2485
        %v2637 = vunpack.c.h.b16 %v2485
        %v2638 = vunpack.c.l.b16 %v2486
        %v2639 = vunpack.c.h.b16 %v2486
        %v2640 = vunpack.c.l.b16 %v2487
        %v2641 = vunpack.c.h.b16 %v2487
        %v2642 = vunpack.c.l.b16 %v2488
        %v2643 = vunpack.c.h.b16 %v2488
        %v2644 = vunpack.c.l.b16 %v2489
        %v2645 = vunpack.c.h.b16 %v2489
        %v2646 = vunpack.c.l.b16 %v2490
        %v2647 = vunpack.c.h.b16 %v2490
        %v2648 = vunpack.c.l.b16 %v2491
        %v2649 = vunpack.c.h.b16 %v2491
        %v2650 = vunpack.c.l.b16 %v2492
        %v2651 = vunpack.c.h.b16 %v2492
        %v2652 = vunpack.c.l.b16 %v2493
        %v2653 = vunpack.c.h.b16 %v2493
        %v2654 = vunpack.c.l.b16 %v2494
        %v2655 = vunpack.c.h.b16 %v2494
        %v2656 = vunpack.c.l.b16 %v2495
        %v2657 = vunpack.c.h.b16 %v2495
        %v2658 = vunpack.c.l.b16 %v2496
        %v2659 = vunpack.c.h.b16 %v2496
        %v2660 = vunpack.c.l.b16 %v2497
        %v2661 = vunpack.c.h.b16 %v2497
        %v2662 = vunpack.c.l.b16 %v2498
        %v2663 = vunpack.c.h.b16 %v2498
        %v2664 = vunpack.c.l.b16 %v2499
        %v2665 = vunpack.c.h.b16 %v2499
        %v2666 = vunpack.c.l.b16 %v2500
        %v2667 = vunpack.c.h.b16 %v2500
        %v2668 = vunpack.c.l.b16 %v2501
        %v2669 = vunpack.c.h.b16 %v2501
        %v2670 = vunpack.c.l.b16 %v2502
        %v2671 = vunpack.c.h.b16 %v2502
        %v2672 = vunpack.c.l.b16 %v2503
        %v2673 = vunpack.c.h.b16 %v2503
        %v2674 = vunpack.c.l.b16 %v2504
        %v2675 = vunpack.c.h.b16 %v2504
        %v2676 = vunpack.c.l.b16 %v2505
        %v2677 = vunpack.c.h.b16 %v2505
        %v2678 = vunpack.c.l.b16 %v2506
        %v2679 = vunpack.c.h.b16 %v2506
        %v2680 = vunpack.c.l.b16 %v2507
        %v2681 = vunpack.c.h.b16 %v2507
        %v2682 = vunpack.c.l.b16 %v2508
        %v2683 = vunpack.c.h.b16 %v2508
        %v2684 = vunpack.c.l.b16 %v2509
        %v2685 = vunpack.c.h.b16 %v2509
        %v2686 = vunpack.c.l.b16 %v2510
        %v2687 = vunpack.c.h.b16 %v2510
        %v2688 = vunpack.c.l.b16 %v2511
        %v2689 = vunpack.c.h.b16 %v2511
        %v2690 = vunpack.c.l.b16 %v2512
        %v2691 = vunpack.c.h.b16 %v2512
        %v2692 = vunpack.c.l.b16 %v2513
        %v2693 = vunpack.c.h.b16 %v2513
        %v2694 = vunpack.c.l.b16 %v2514
        %v2695 = vunpack.c.h.b16 %v2514
        %v2696 = vunpack.c.l.b16 %v2515
        %v2697 = vunpack.c.h.b16 %v2515
        %v2698 = vunpack.c.l.b16 %v2516
        %v2699 = vunpack.c.h.b16 %v2516
        %v2700 = vunpack.c.l.b16 %v2517
        %v2701 = vunpack.c.h.b16 %v2517
        %v2702 = vunpack.c.l.b16 %v2518
        %v2703 = vunpack.c.h.b16 %v2518
        %v2704 = vunpack.c.l.b16 %v2519
        %v2705 = vunpack.c.h.b16 %v2519
        %v2706 = vunpack.c.l.b16 %v2520
        %v2707 = vunpack.c.h.b16 %v2520
        %v2708 = vunpack.c.l.b16 %v2521
        %v2709 = vunpack.c.h.b16 %v2521
        %v2710 = vunpack.c.l.b16 %v2522
        %v2711 = vunpack.c.h.b16 %v2522
        %v2712 = vunpack.c.l.b16 %v2523
        %v2713 = vunpack.c.h.b16 %v2523
        %v2714 = vunpack.c.l.b16 %v2524
        %v2715 = vunpack.c.h.b16 %v2524
        %v2716 = vunpack.c.l.b16 %v2525
        %v2717 = vunpack.c.h.b16 %v2525
        %v2718 = vunpack.c.l.b16 %v2526
        %v2719 = vunpack.c.h.b16 %v2526
        %v2720 = vunpack.c.l.b16 %v2527
        %v2721 = vunpack.c.h.b16 %v2527
        %v2722 = vunpack.c.l.b16 %v2528
        %v2723 = vunpack.c.h.b16 %v2528
        %v2724 = vunpack.c.l.b16 %v2529
        %v2725 = vunpack.c.h.b16 %v2529
        %v2726 = vunpack.c.l.b16 %v2530
        %v2727 = vunpack.c.h.b16 %v2530
        %v2728 = vunpack.c.l.b16 %v2531
        %v2729 = vunpack.c.h.b16 %v2531
        %v2730 = vunpack.c.l.b16 %v2532
        %v2731 = vunpack.c.h.b16 %v2532
        %v2732 = vunpack.c.l.b16 %v2533
        %v2733 = vunpack.c.h.b16 %v2533
        %v2734 = vunpack.c.l.b16 %v2534
        %v2735 = vunpack.c.h.b16 %v2534
        %v2736 = vunpack.c.l.b16 %v2535
        %v2737 = vunpack.c.h.b16 %v2535
        %v2738 = vunpack.c.l.b16 %v2536
        %v2739 = vunpack.c.h.b16 %v2536
        %v2740 = vunpack.c.l.b16 %v2537
        %v2741 = vunpack.c.h.b16 %v2537
        %v2742 = vunpack.c.l.b16 %v2538
        %v2743 = vunpack.c.h.b16 %v2538
        %v2744 = vunpack.c.l.b16 %v2539
        %v2745 = vunpack.c.h.b16 %v2539
        %v2746 = vunpack.c.l.b16 %v2540
        %v2747 = vunpack.c.h.b16 %v2540
        %v2748 = vunpack.c.l.b16 %v2541
        %v2749 = vunpack.c.h.b16 %v2541
        %v2750 = vunpack.c.l.b16 %v2542
        %v2751 = vunpack.c.h.b16 %v2542
        %v2752 = vunpack.c.l.b16 %v2543
        %v2753 = vunpack.c.h.b16 %v2543
        %v2754 = vunpack.c.l.b16 %v2544
        %v2755 = vunpack.c.h.b16 %v2544
        %v2756 = vunpack.c.l.b16 %v2545
        %v2757 = vunpack.c.h.b16 %v2545
        %v2758 = vunpack.c.l.b16 %v2546
        %v2759 = vunpack.c.h.b16 %v2546
        %v2760 = vunpack.c.l.b16 %v2547
        %v2761 = vunpack.c.h.b16 %v2547
        %v2762 = vpack.c.b16 %v2636, %v2634
        %v2763 = vpack.c.b16 %v2637, %v2635
        %v2764 = vpack.c.b16 %v2640, %v2638
        %v2765 = vpack.c.b16 %v2641, %v2639
        %v2766 = vpack.c.b16 %v2644, %v2642
        %v2767 = vpack.c.b16 %v2645, %v2643
        %v2768 = vpack.c.b16 %v2648, %v2646
        %v2769 = vpack.c.b16 %v2649, %v2647
        %v2770 = vpack.c.b16 %v2652, %v2650
        %v2771 = vpack.c.b16 %v2653, %v2651
        %v2772 = vpack.c.b16 %v2656, %v2654
        %v2773 = vpack.c.b16 %v2657, %v2655
        %v2774 = vpack.c.b16 %v2660, %v2658
        %v2775 = vpack.c.b16 %v2661, %v2659
        %v2776 = vpack.c.b16 %v2664, %v2662
        %v2777 = vpack.c.b16 %v2665, %v2663
        %v2778 = vpack.c.b16 %v2668, %v2666
        %v2779 = vpack.c.b16 %v2669, %v2667
        %v2780 = vpack.c.b16 %v2672, %v2670
        %v2781 = vpack.c.b16 %v2673, %v2671
        %v2782 = vpack.c.b16 %v2676, %v2674
        %v2783 = vpack.c.b16 %v2677, %v2675
        %v2784 = vpack.c.b16 %v2680, %v2678
        %v2785 = vpack.c.b16 %v2681, %v2679
        %v2786 = vpack.c.b16 %v2684, %v2682
        %v2787 = vpack.c.b16 %v2685, %v2683
        %v2788 = vpack.c.b16 %v2688, %v2686
        %v2789 = vpack.c.b16 %v2689, %v2687
        %v2790 = vpack.c.b16 %v2692, %v2690
        %v2791 = vpack.c.b16 %v2693, %v2691
        %v2792 = vpack.c.b16 %v2696, %v2694
        %v2793 = vpack.c.b16 %v2697, %v2695
        %v2794 = vpack.c.b16 %v2700, %v2698
        %v2795 = vpack.c.b16 %v2701, %v2699
        %v2796 = vpack.c.b16 %v2704, %v2702
        %v2797 = vpack.c.b16 %v2705, %v2703
        %v2798 = vpack.c.b16 %v2708, %v2706
        %v2799 = vpack.c.b16 %v2709, %v2707
        %v2800 = vpack.c.b16 %v2712, %v2710
        %v2801 = vpack.c.b16 %v2713, %v2711
        %v2802 = vpack.c.b16 %v2716, %v2714
        %v2803 = vpack.c.b16 %v2717, %v2715
        %v2804 = vpack.c.b16 %v2720, %v2718
        %v2805 = vpack.c.b16 %v2721, %v2719
        %v2806 = vpack.c.b16 %v2724, %v2722
        %v2807 = vpack.c.b16 %v2725, %v2723
        %v2808 = vpack.c.b16 %v2728, %v2726
        %v2809 = vpack.c.b16 %v2729, %v2727
        %v2810 = vpack.c.b16 %v2732, %v2730
        %v2811 = vpack.c.b16 %v2733, %v2731
        %v2812 = vpack.c.b16 %v2736, %v2734
        %v2813 = vpack.c.b16 %v2737, %v2735
        %v2814 = vpack.c.b16 %v2740, %v2738
        %v2815 = vpack.c.b16 %v2741, %v2739
        %v2816 = vpack.c.b16 %v2744, %v2742
        %v2817 = vpack.c.b16 %v2745, %v2743
        %v2818 = vpack.c.b16 %v2748, %v2746
        %v2819 = vpack.c.b16 %v2749, %v2747
        %v2820 = vpack.c.b16 %v2752, %v2750
        %v2821 = vpack.c.b16 %v2753, %v2751
        %v2822 = vpack.c.b16 %v2756, %v2754
        %v2823 = vpack.c.b16 %v2757, %v2755
        %v2824 = vpack.c.b16 %v2760, %v2758
        %v2825 = vpack.c.b16 %v2761, %v2759
        %2890 = vmatprep.subr.bf16.mxu0 %v2763
        %2891 = vmatpush1.bf16.xpose.msra.mxu0 %v2762
        %2892 = vmatprep.subr.bf16.mxu0 %v2765
        %2893 = vmatpush1.bf16.xpose.msra.mxu0 %v2764
        %2894 = vmatprep.subr.bf16.mxu0 %v2767
        %2895 = vmatpush1.bf16.xpose.msra.mxu0 %v2766
        %2896 = vmatprep.subr.bf16.mxu0 %v2769
        %2897 = vmatpush1.bf16.xpose.msra.mxu0 %v2768
        %2898 = vmatprep.subr.bf16.mxu0 %v2771
        %2899 = vmatpush1.bf16.xpose.msra.mxu0 %v2770
        %2900 = vmatprep.subr.bf16.mxu0 %v2773
        %2901 = vmatpush1.bf16.xpose.msra.mxu0 %v2772
        %2902 = vmatprep.subr.bf16.mxu0 %v2775
        %2903 = vmatpush1.bf16.xpose.msra.mxu0 %v2774
        %2904 = vmatprep.subr.bf16.mxu0 %v2777
        %2905 = vmatpush1.bf16.xpose.msra.mxu0 %v2776
        %2906 = vmatprep.subr.bf16.mxu0 %v2779
        %2907 = vmatpush1.bf16.xpose.msra.mxu0 %v2778
        %2908 = vmatprep.subr.bf16.mxu0 %v2781
        %2909 = vmatpush1.bf16.xpose.msra.mxu0 %v2780
        %2910 = vmatprep.subr.bf16.mxu0 %v2783
        %2911 = vmatpush1.bf16.xpose.msra.mxu0 %v2782
        %2912 = vmatprep.subr.bf16.mxu0 %v2785
        %2913 = vmatpush1.bf16.xpose.msra.mxu0 %v2784
        %2914 = vmatprep.subr.bf16.mxu0 %v2787
        %2915 = vmatpush1.bf16.xpose.msra.mxu0 %v2786
        %2916 = vmatprep.subr.bf16.mxu0 %v2789
        %2917 = vmatpush1.bf16.xpose.msra.mxu0 %v2788
        %2918 = vmatprep.subr.bf16.mxu0 %v2791
        %2919 = vmatpush1.bf16.xpose.msra.mxu0 %v2790
        %2920 = vmatprep.subr.bf16.mxu0 %v2793
        %2921 = vmatpush1.bf16.xpose.msra.mxu0 %v2792
        %2922 = vmatprep.mubr.bf16.mxu0 %v2483
        %2923 = vmatmul.mubr.bf16.gmra.mrb[0].mxu0 %v2482
        %v2924 = vpop.f32.mrb[0].mxu0
        %v2925 = vadd.f32 %v2553, %v2924
        %v2926 = vpop.f32.mrb[0].mxu0
        %v2927 = vadd.f32 %v2557, %v2926
        %v2928 = vpop.f32.mrb[0].mxu0
        %v2929 = vpop.f32.mrb[0].mxu0
        %2930 = vdwg.mxu0
        %2931 = vmatprep.subr.bf16.mxu0 %v2795
        %2932 = vmatpush1.bf16.xpose.msra.mxu0 %v2794
        %2933 = vmatprep.subr.bf16.mxu0 %v2797
        %2934 = vmatpush1.bf16.xpose.msra.mxu0 %v2796
        %2935 = vmatprep.subr.bf16.mxu0 %v2799
        %2936 = vmatpush1.bf16.xpose.msra.mxu0 %v2798
        %2937 = vmatprep.subr.bf16.mxu0 %v2801
        %2938 = vmatpush1.bf16.xpose.msra.mxu0 %v2800
        %2939 = vmatprep.subr.bf16.mxu0 %v2803
        %2940 = vmatpush1.bf16.xpose.msra.mxu0 %v2802
        %2941 = vmatprep.subr.bf16.mxu0 %v2805
        %2942 = vmatpush1.bf16.xpose.msra.mxu0 %v2804
        %2943 = vmatprep.subr.bf16.mxu0 %v2807
        %2944 = vmatpush1.bf16.xpose.msra.mxu0 %v2806
        %2945 = vmatprep.subr.bf16.mxu0 %v2809
        %2946 = vmatpush1.bf16.xpose.msra.mxu0 %v2808
        %2947 = vmatprep.subr.bf16.mxu0 %v2811
        %2948 = vmatpush1.bf16.xpose.msra.mxu0 %v2810
        %2949 = vmatprep.subr.bf16.mxu0 %v2813
        %2950 = vmatpush1.bf16.xpose.msra.mxu0 %v2812
        %2951 = vmatprep.subr.bf16.mxu0 %v2815
        %2952 = vmatpush1.bf16.xpose.msra.mxu0 %v2814
        %2953 = vmatprep.subr.bf16.mxu0 %v2817
        %2954 = vmatpush1.bf16.xpose.msra.mxu0 %v2816
        %2955 = vmatprep.subr.bf16.mxu0 %v2819
        %2956 = vmatpush1.bf16.xpose.msra.mxu0 %v2818
        %2957 = vmatprep.subr.bf16.mxu0 %v2821
        %2958 = vmatpush1.bf16.xpose.msra.mxu0 %v2820
        %2959 = vmatprep.subr.bf16.mxu0 %v2823
        %2960 = vmatpush1.bf16.xpose.msra.mxu0 %v2822
        %2961 = vmatprep.subr.bf16.mxu0 %v2825
        %2962 = vmatpush1.bf16.xpose.msra.mxu0 %v2824
        %2963 = vmatprep.mubr.bf16.mxu0 %v2483
        %2964 = vmatmul.mubr.bf16.gmra.mrb[0].mxu0 %v2482
        %v2965 = vpop.f32.mrb[0].mxu0
        %v2966 = vadd.f32 %v2561, %v2965
        %v2967 = vpop.f32.mrb[0].mxu0
        %v2968 = vadd.f32 %v2565, %v2967
        %v2969 = vpop.f32.mrb[0].mxu0
        %v2970 = vpop.f32.mrb[0].mxu0
        %2971 = vdwg.mxu0
        %v2972 = vmul.f32 %v2925, 0.5
        %v2973 = vmul.f32 %v2927, 0.5
        %v2974 = vmul.f32 %v2966, 0.5
        %v2975 = vmul.f32 %v2968, 0.5
        %v2976 = vmul.f32 %v2925, 0.70710677
        %v2977 = vmul.f32 %v2927, 0.70710677
        %v2978 = vmul.f32 %v2966, 0.70710677
        %v2979 = vmul.f32 %v2968, 0.70710677
        %v2980 = verf.f32.pop %v2976
        %v2981 = verf.f32.pop %v2977
        %v2982 = verf.f32.pop %v2978
        %v2983 = verf.f32.pop %v2979
        %v2984 = vadd.f32 %v2980, 1.0
        %v2985 = vadd.f32 %v2981, 1.0
        %v2986 = vadd.f32 %v2982, 1.0
        %v2987 = vadd.f32 %v2983, 1.0
        %v2988 = vmul.f32 %v2972, %v2984
        %v2989 = vmul.f32 %v2973, %v2985
        %v2990 = vmul.f32 %v2974, %v2986
        %v2991 = vmul.f32 %v2975, %v2987
        %v2992 = vpack.c.bf16 %v2988, %v2988
        %v2993 = vpack.c.bf16 %v2989, %v2989
        %v2994 = vpack.c.bf16 %v2990, %v2990
        %v2995 = vpack.c.bf16 %v2991, %v2991
        %v2996 = vld [vmem:[%s917] sm:$0xff]
        %v2997 = vld [vmem:[%s917 + $0x8] sm:$0xff]
        %v2998 = vld [vmem:[%s917 + $0x10] sm:$0xff]
        %v2999 = vld [vmem:[%s917 + $0x18] sm:$0xff]
        %v3000 = vld [vmem:[%s917 + $0x20] sm:$0xff]
        %v3001 = vld [vmem:[%s917 + $0x28] sm:$0xff]
        %v3002 = vld [vmem:[%s917 + $0x30] sm:$0xff]
        %v3003 = vld [vmem:[%s917 + $0x38] sm:$0xff]
        %v3004 = vld [vmem:[%s917 + $0x40] sm:$0xff]
        %v3005 = vld [vmem:[%s917 + $0x48] sm:$0xff]
        %v3006 = vld [vmem:[%s917 + $0x50] sm:$0xff]
        %v3007 = vld [vmem:[%s917 + $0x58] sm:$0xff]
        %v3008 = vld [vmem:[%s917 + $0x60] sm:$0xff]
        %v3009 = vld [vmem:[%s917 + $0x68] sm:$0xff]
        %v3010 = vld [vmem:[%s917 + $0x70] sm:$0xff]
        %v3011 = vld [vmem:[%s917 + $0x78] sm:$0xff]
        %v3012 = vld [vmem:[%s917 + $0x80] sm:$0xff]
        %v3013 = vld [vmem:[%s917 + $0x88] sm:$0xff]
        %v3014 = vld [vmem:[%s917 + $0x90] sm:$0xff]
        %v3015 = vld [vmem:[%s917 + $0x98] sm:$0xff]
        %v3016 = vld [vmem:[%s917 + $0xa0] sm:$0xff]
        %v3017 = vld [vmem:[%s917 + $0xa8] sm:$0xff]
        %v3018 = vld [vmem:[%s917 + $0xb0] sm:$0xff]
        %v3019 = vld [vmem:[%s917 + $0xb8] sm:$0xff]
        %v3020 = vld [vmem:[%s917 + $0xc0] sm:$0xff]
        %v3021 = vld [vmem:[%s917 + $0xc8] sm:$0xff]
        %v3022 = vld [vmem:[%s917 + $0xd0] sm:$0xff]
        %v3023 = vld [vmem:[%s917 + $0xd8] sm:$0xff]
        %v3024 = vld [vmem:[%s917 + $0xe0] sm:$0xff]
        %v3025 = vld [vmem:[%s917 + $0xe8] sm:$0xff]
        %v3026 = vld [vmem:[%s917 + $0xf0] sm:$0xff]
        %v3027 = vld [vmem:[%s917 + $0xf8] sm:$0xff]
        %v3028 = vld [vmem:[%s917 + $0x100] sm:$0xff]
        %v3029 = vld [vmem:[%s917 + $0x108] sm:$0xff]
        %v3030 = vld [vmem:[%s917 + $0x110] sm:$0xff]
        %v3031 = vld [vmem:[%s917 + $0x118] sm:$0xff]
        %v3032 = vld [vmem:[%s917 + $0x120] sm:$0xff]
        %v3033 = vld [vmem:[%s917 + $0x128] sm:$0xff]
        %v3034 = vld [vmem:[%s917 + $0x130] sm:$0xff]
        %v3035 = vld [vmem:[%s917 + $0x138] sm:$0xff]
        %v3036 = vld [vmem:[%s917 + $0x140] sm:$0xff]
        %v3037 = vld [vmem:[%s917 + $0x148] sm:$0xff]
        %v3038 = vld [vmem:[%s917 + $0x150] sm:$0xff]
        %v3039 = vld [vmem:[%s917 + $0x158] sm:$0xff]
        %v3040 = vld [vmem:[%s917 + $0x160] sm:$0xff]
        %v3041 = vld [vmem:[%s917 + $0x168] sm:$0xff]
        %v3042 = vld [vmem:[%s917 + $0x170] sm:$0xff]
        %v3043 = vld [vmem:[%s917 + $0x178] sm:$0xff]
        %v3044 = vld [vmem:[%s917 + $0x180] sm:$0xff]
        %v3045 = vld [vmem:[%s917 + $0x188] sm:$0xff]
        %v3046 = vld [vmem:[%s917 + $0x190] sm:$0xff]
        %v3047 = vld [vmem:[%s917 + $0x198] sm:$0xff]
        %v3048 = vld [vmem:[%s917 + $0x1a0] sm:$0xff]
        %v3049 = vld [vmem:[%s917 + $0x1a8] sm:$0xff]
        %v3050 = vld [vmem:[%s917 + $0x1b0] sm:$0xff]
        %v3051 = vld [vmem:[%s917 + $0x1b8] sm:$0xff]
        %v3052 = vld [vmem:[%s917 + $0x1c0] sm:$0xff]
        %v3053 = vld [vmem:[%s917 + $0x1c8] sm:$0xff]
        %v3054 = vld [vmem:[%s917 + $0x1d0] sm:$0xff]
        %v3055 = vld [vmem:[%s917 + $0x1d8] sm:$0xff]
        %v3056 = vld [vmem:[%s917 + $0x1e0] sm:$0xff]
        %v3057 = vld [vmem:[%s917 + $0x1e8] sm:$0xff]
        %v3058 = vld [vmem:[%s917 + $0x1f0] sm:$0xff]
        %v3059 = vld [vmem:[%s917 + $0x1f8] sm:$0xff]
        %v3060 = vld [vmem:[%s1071] sm:$0x3]
        %v3062 = vlaneseq
        %v3063 = vshrl.u32 %v3062, 7
        %v3064 = vsub.s32 0, %v3063
        %v3065 = vrot.slane %v3060, %v3064
        %v3066 = vlaneseq
        %v3067 = vshrl.u32 %v3066, 7
        %v3068 = vsub.s32 1, %v3067
        %v3069 = vrot.slane %v3060, %v3068
        %v3136 = vunpack.c.l.b16 %v2996
        %v3137 = vunpack.c.h.b16 %v2996
        %v3138 = vunpack.c.l.b16 %v2997
        %v3139 = vunpack.c.h.b16 %v2997
        %v3140 = vunpack.c.l.b16 %v2998
        %v3141 = vunpack.c.h.b16 %v2998
        %v3142 = vunpack.c.l.b16 %v2999
        %v3143 = vunpack.c.h.b16 %v2999
        %v3144 = vunpack.c.l.b16 %v3000
        %v3145 = vunpack.c.h.b16 %v3000
        %v3146 = vunpack.c.l.b16 %v3001
        %v3147 = vunpack.c.h.b16 %v3001
        %v3148 = vunpack.c.l.b16 %v3002
        %v3149 = vunpack.c.h.b16 %v3002
        %v3150 = vunpack.c.l.b16 %v3003
        %v3151 = vunpack.c.h.b16 %v3003
        %v3152 = vunpack.c.l.b16 %v3004
        %v3153 = vunpack.c.h.b16 %v3004
        %v3154 = vunpack.c.l.b16 %v3005
        %v3155 = vunpack.c.h.b16 %v3005
        %v3156 = vunpack.c.l.b16 %v3006
        %v3157 = vunpack.c.h.b16 %v3006
        %v3158 = vunpack.c.l.b16 %v3007
        %v3159 = vunpack.c.h.b16 %v3007
        %v3160 = vunpack.c.l.b16 %v3008
        %v3161 = vunpack.c.h.b16 %v3008
        %v3162 = vunpack.c.l.b16 %v3009
        %v3163 = vunpack.c.h.b16 %v3009
        %v3164 = vunpack.c.l.b16 %v3010
        %v3165 = vunpack.c.h.b16 %v3010
        %v3166 = vunpack.c.l.b16 %v3011
        %v3167 = vunpack.c.h.b16 %v3011
        %v3168 = vunpack.c.l.b16 %v3012
        %v3169 = vunpack.c.h.b16 %v3012
        %v3170 = vunpack.c.l.b16 %v3013
        %v3171 = vunpack.c.h.b16 %v3013
        %v3172 = vunpack.c.l.b16 %v3014
        %v3173 = vunpack.c.h.b16 %v3014
        %v3174 = vunpack.c.l.b16 %v3015
        %v3175 = vunpack.c.h.b16 %v3015
        %v3176 = vunpack.c.l.b16 %v3016
        %v3177 = vunpack.c.h.b16 %v3016
        %v3178 = vunpack.c.l.b16 %v3017
        %v3179 = vunpack.c.h.b16 %v3017
        %v3180 = vunpack.c.l.b16 %v3018
        %v3181 = vunpack.c.h.b16 %v3018
        %v3182 = vunpack.c.l.b16 %v3019
        %v3183 = vunpack.c.h.b16 %v3019
        %v3184 = vunpack.c.l.b16 %v3020
        %v3185 = vunpack.c.h.b16 %v3020
        %v3186 = vunpack.c.l.b16 %v3021
        %v3187 = vunpack.c.h.b16 %v3021
        %v3188 = vunpack.c.l.b16 %v3022
        %v3189 = vunpack.c.h.b16 %v3022
        %v3190 = vunpack.c.l.b16 %v3023
        %v3191 = vunpack.c.h.b16 %v3023
        %v3192 = vunpack.c.l.b16 %v3024
        %v3193 = vunpack.c.h.b16 %v3024
        %v3194 = vunpack.c.l.b16 %v3025
        %v3195 = vunpack.c.h.b16 %v3025
        %v3196 = vunpack.c.l.b16 %v3026
        %v3197 = vunpack.c.h.b16 %v3026
        %v3198 = vunpack.c.l.b16 %v3027
        %v3199 = vunpack.c.h.b16 %v3027
        %v3200 = vunpack.c.l.b16 %v3028
        %v3201 = vunpack.c.h.b16 %v3028
        %v3202 = vunpack.c.l.b16 %v3029
        %v3203 = vunpack.c.h.b16 %v3029
        %v3204 = vunpack.c.l.b16 %v3030
        %v3205 = vunpack.c.h.b16 %v3030
        %v3206 = vunpack.c.l.b16 %v3031
        %v3207 = vunpack.c.h.b16 %v3031
        %v3208 = vunpack.c.l.b16 %v3032
        %v3209 = vunpack.c.h.b16 %v3032
        %v3210 = vunpack.c.l.b16 %v3033
        %v3211 = vunpack.c.h.b16 %v3033
        %v3212 = vunpack.c.l.b16 %v3034
        %v3213 = vunpack.c.h.b16 %v3034
        %v3214 = vunpack.c.l.b16 %v3035
        %v3215 = vunpack.c.h.b16 %v3035
        %v3216 = vunpack.c.l.b16 %v3036
        %v3217 = vunpack.c.h.b16 %v3036
        %v3218 = vunpack.c.l.b16 %v3037
        %v3219 = vunpack.c.h.b16 %v3037
        %v3220 = vunpack.c.l.b16 %v3038
        %v3221 = vunpack.c.h.b16 %v3038
        %v3222 = vunpack.c.l.b16 %v3039
        %v3223 = vunpack.c.h.b16 %v3039
        %v3224 = vunpack.c.l.b16 %v3040
        %v3225 = vunpack.c.h.b16 %v3040
        %v3226 = vunpack.c.l.b16 %v3041
        %v3227 = vunpack.c.h.b16 %v3041
        %v3228 = vunpack.c.l.b16 %v3042
        %v3229 = vunpack.c.h.b16 %v3042
        %v3230 = vunpack.c.l.b16 %v3043
        %v3231 = vunpack.c.h.b16 %v3043
        %v3232 = vunpack.c.l.b16 %v3044
        %v3233 = vunpack.c.h.b16 %v3044
        %v3234 = vunpack.c.l.b16 %v3045
        %v3235 = vunpack.c.h.b16 %v3045
        %v3236 = vunpack.c.l.b16 %v3046
        %v3237 = vunpack.c.h.b16 %v3046
        %v3238 = vunpack.c.l.b16 %v3047
        %v3239 = vunpack.c.h.b16 %v3047
        %v3240 = vunpack.c.l.b16 %v3048
        %v3241 = vunpack.c.h.b16 %v3048
        %v3242 = vunpack.c.l.b16 %v3049
        %v3243 = vunpack.c.h.b16 %v3049
        %v3244 = vunpack.c.l.b16 %v3050
        %v3245 = vunpack.c.h.b16 %v3050
        %v3246 = vunpack.c.l.b16 %v3051
        %v3247 = vunpack.c.h.b16 %v3051
        %v3248 = vunpack.c.l.b16 %v3052
        %v3249 = vunpack.c.h.b16 %v3052
        %v3250 = vunpack.c.l.b16 %v3053
        %v3251 = vunpack.c.h.b16 %v3053
        %v3252 = vunpack.c.l.b16 %v3054
        %v3253 = vunpack.c.h.b16 %v3054
        %v3254 = vunpack.c.l.b16 %v3055
        %v3255 = vunpack.c.h.b16 %v3055
        %v3256 = vunpack.c.l.b16 %v3056
        %v3257 = vunpack.c.h.b16 %v3056
        %v3258 = vunpack.c.l.b16 %v3057
        %v3259 = vunpack.c.h.b16 %v3057
        %v3260 = vunpack.c.l.b16 %v3058
        %v3261 = vunpack.c.h.b16 %v3058
        %v3262 = vunpack.c.l.b16 %v3059
        %v3263 = vunpack.c.h.b16 %v3059
        %v3264 = vpack.c.b16 %v3140, %v3136
        %v3265 = vpack.c.b16 %v3141, %v3137
        %v3266 = vpack.c.b16 %v3142, %v3138
        %v3267 = vpack.c.b16 %v3143, %v3139
        %v3268 = vpack.c.b16 %v3148, %v3144
        %v3269 = vpack.c.b16 %v3149, %v3145
        %v3270 = vpack.c.b16 %v3150, %v3146
        %v3271 = vpack.c.b16 %v3151, %v3147
        %v3272 = vpack.c.b16 %v3156, %v3152
        %v3273 = vpack.c.b16 %v3157, %v3153
        %v3274 = vpack.c.b16 %v3158, %v3154
        %v3275 = vpack.c.b16 %v3159, %v3155
        %v3276 = vpack.c.b16 %v3164, %v3160
        %v3277 = vpack.c.b16 %v3165, %v3161
        %v3278 = vpack.c.b16 %v3166, %v3162
        %v3279 = vpack.c.b16 %v3167, %v3163
        %v3280 = vpack.c.b16 %v3172, %v3168
        %v3281 = vpack.c.b16 %v3173, %v3169
        %v3282 = vpack.c.b16 %v3174, %v3170
        %v3283 = vpack.c.b16 %v3175, %v3171
        %v3284 = vpack.c.b16 %v3180, %v3176
        %v3285 = vpack.c.b16 %v3181, %v3177
        %v3286 = vpack.c.b16 %v3182, %v3178
        %v3287 = vpack.c.b16 %v3183, %v3179
        %v3288 = vpack.c.b16 %v3188, %v3184
        %v3289 = vpack.c.b16 %v3189, %v3185
        %v3290 = vpack.c.b16 %v3190, %v3186
        %v3291 = vpack.c.b16 %v3191, %v3187
        %v3292 = vpack.c.b16 %v3196, %v3192
        %v3293 = vpack.c.b16 %v3197, %v3193
        %v3294 = vpack.c.b16 %v3198, %v3194
        %v3295 = vpack.c.b16 %v3199, %v3195
        %v3296 = vpack.c.b16 %v3204, %v3200
        %v3297 = vpack.c.b16 %v3205, %v3201
        %v3298 = vpack.c.b16 %v3206, %v3202
        %v3299 = vpack.c.b16 %v3207, %v3203
        %v3300 = vpack.c.b16 %v3212, %v3208
        %v3301 = vpack.c.b16 %v3213, %v3209
        %v3302 = vpack.c.b16 %v3214, %v3210
        %v3303 = vpack.c.b16 %v3215, %v3211
        %v3304 = vpack.c.b16 %v3220, %v3216
        %v3305 = vpack.c.b16 %v3221, %v3217
        %v3306 = vpack.c.b16 %v3222, %v3218
        %v3307 = vpack.c.b16 %v3223, %v3219
        %v3308 = vpack.c.b16 %v3228, %v3224
        %v3309 = vpack.c.b16 %v3229, %v3225
        %v3310 = vpack.c.b16 %v3230, %v3226
        %v3311 = vpack.c.b16 %v3231, %v3227
        %v3312 = vpack.c.b16 %v3236, %v3232
        %v3313 = vpack.c.b16 %v3237, %v3233
        %v3314 = vpack.c.b16 %v3238, %v3234
        %v3315 = vpack.c.b16 %v3239, %v3235
        %v3316 = vpack.c.b16 %v3244, %v3240
        %v3317 = vpack.c.b16 %v3245, %v3241
        %v3318 = vpack.c.b16 %v3246, %v3242
        %v3319 = vpack.c.b16 %v3247, %v3243
        %v3320 = vpack.c.b16 %v3252, %v3248
        %v3321 = vpack.c.b16 %v3253, %v3249
        %v3322 = vpack.c.b16 %v3254, %v3250
        %v3323 = vpack.c.b16 %v3255, %v3251
        %v3324 = vpack.c.b16 %v3260, %v3256
        %v3325 = vpack.c.b16 %v3261, %v3257
        %v3326 = vpack.c.b16 %v3262, %v3258
        %v3327 = vpack.c.b16 %v3263, %v3259
        %3392 = vmatprep.subr.bf16.mxu0 %v3265
        %3393 = vmatpush1.bf16.xpose.msra.mxu0 %v3264
        %3394 = vmatprep.subr.bf16.mxu0 %v3269
        %3395 = vmatpush1.bf16.xpose.msra.mxu0 %v3268
        %3396 = vmatprep.subr.bf16.mxu0 %v3273
        %3397 = vmatpush1.bf16.xpose.msra.mxu0 %v3272
        %3398 = vmatprep.subr.bf16.mxu0 %v3277
        %3399 = vmatpush1.bf16.xpose.msra.mxu0 %v3276
        %3400 = vmatprep.subr.bf16.mxu0 %v3281
        %3401 = vmatpush1.bf16.xpose.msra.mxu0 %v3280
        %3402 = vmatprep.subr.bf16.mxu0 %v3285
        %3403 = vmatpush1.bf16.xpose.msra.mxu0 %v3284
        %3404 = vmatprep.subr.bf16.mxu0 %v3289
        %3405 = vmatpush1.bf16.xpose.msra.mxu0 %v3288
        %3406 = vmatprep.subr.bf16.mxu0 %v3293
        %3407 = vmatpush1.bf16.xpose.msra.mxu0 %v3292
        %3408 = vmatprep.subr.bf16.mxu0 %v3297
        %3409 = vmatpush1.bf16.xpose.msra.mxu0 %v3296
        %3410 = vmatprep.subr.bf16.mxu0 %v3301
        %3411 = vmatpush1.bf16.xpose.msra.mxu0 %v3300
        %3412 = vmatprep.subr.bf16.mxu0 %v3305
        %3413 = vmatpush1.bf16.xpose.msra.mxu0 %v3304
        %3414 = vmatprep.subr.bf16.mxu0 %v3309
        %3415 = vmatpush1.bf16.xpose.msra.mxu0 %v3308
        %3416 = vmatprep.subr.bf16.mxu0 %v3313
        %3417 = vmatpush1.bf16.xpose.msra.mxu0 %v3312
        %3418 = vmatprep.subr.bf16.mxu0 %v3317
        %3419 = vmatpush1.bf16.xpose.msra.mxu0 %v3316
        %3420 = vmatprep.subr.bf16.mxu0 %v3321
        %3421 = vmatpush1.bf16.xpose.msra.mxu0 %v3320
        %3422 = vmatprep.subr.bf16.mxu0 %v3325
        %3423 = vmatpush1.bf16.xpose.msra.mxu0 %v3324
        %3424 = vmatprep.mubr.bf16.mxu0 %v2993
        %3425 = vmatmul.mubr.bf16.gmra.mrb[0].mxu0 %v2992
        %v3426 = vpop.f32.mrb[0].mxu0
        %v3427 = vadd.f32 %v3065, %v3426
        %v3428 = vpop.f32.mrb[0].mxu0
        %v3429 = vadd.f32 %v3069, %v3428
        %v3430 = vpop.f32.mrb[0].mxu0
        %v3431 = vpop.f32.mrb[0].mxu0
        %3432 = vdwg.mxu0
        %3433 = vmatprep.subr.bf16.mxu0 %v3267
        %3434 = vmatpush1.bf16.xpose.msra.mxu0 %v3266
        %3435 = vmatprep.subr.bf16.mxu0 %v3271
        %3436 = vmatpush1.bf16.xpose.msra.mxu0 %v3270
        %3437 = vmatprep.subr.bf16.mxu0 %v3275
        %3438 = vmatpush1.bf16.xpose.msra.mxu0 %v3274
        %3439 = vmatprep.subr.bf16.mxu0 %v3279
        %3440 = vmatpush1.bf16.xpose.msra.mxu0 %v3278
        %3441 = vmatprep.subr.bf16.mxu0 %v3283
        %3442 = vmatpush1.bf16.xpose.msra.mxu0 %v3282
        %3443 = vmatprep.subr.bf16.mxu0 %v3287
        %3444 = vmatpush1.bf16.xpose.msra.mxu0 %v3286
        %3445 = vmatprep.subr.bf16.mxu0 %v3291
        %3446 = vmatpush1.bf16.xpose.msra.mxu0 %v3290
        %3447 = vmatprep.subr.bf16.mxu0 %v3295
        %3448 = vmatpush1.bf16.xpose.msra.mxu0 %v3294
        %3449 = vmatprep.subr.bf16.mxu0 %v3299
        %3450 = vmatpush1.bf16.xpose.msra.mxu0 %v3298
        %3451 = vmatprep.subr.bf16.mxu0 %v3303
        %3452 = vmatpush1.bf16.xpose.msra.mxu0 %v3302
        %3453 = vmatprep.subr.bf16.mxu0 %v3307
        %3454 = vmatpush1.bf16.xpose.msra.mxu0 %v3306
        %3455 = vmatprep.subr.bf16.mxu0 %v3311
        %3456 = vmatpush1.bf16.xpose.msra.mxu0 %v3310
        %3457 = vmatprep.subr.bf16.mxu0 %v3315
        %3458 = vmatpush1.bf16.xpose.msra.mxu0 %v3314
        %3459 = vmatprep.subr.bf16.mxu0 %v3319
        %3460 = vmatpush1.bf16.xpose.msra.mxu0 %v3318
        %3461 = vmatprep.subr.bf16.mxu0 %v3323
        %3462 = vmatpush1.bf16.xpose.msra.mxu0 %v3322
        %3463 = vmatprep.subr.bf16.mxu0 %v3327
        %3464 = vmatpush1.bf16.xpose.msra.mxu0 %v3326
        %3465 = vmatprep.mubr.bf16.mxu0 %v2995
        %3466 = vmatmul.mubr.bf16.gmra.mrb[0].mxu0 %v2994
        %v3467 = vpop.f32.mrb[0].mxu0
        %v3468 = vadd.f32 %v3427, %v3467
        %v3469 = vpop.f32.mrb[0].mxu0
        %v3470 = vadd.f32 %v3429, %v3469
        %v3471 = vpop.f32.mrb[0].mxu0
        %v3472 = vpop.f32.mrb[0].mxu0
        %3473 = vdwg.mxu0
        %v3474 = vadd.f32 %v3468, %v2480
        %v3475 = vadd.f32 %v3470, %v2481
        %v3476 = vld [vmem:[%s1075] sm:$0x3]
        %v3477 = vld [vmem:[%s1079] sm:$0x3]
        %v3478 = vadd.f32 %v3474, %v3475
        %3479 = vadd.xlane.f32.xlu0 %v3478
        %v3480 = vpop.xlane.xlu0 %3479
        %v3481 = vmul.f32 %v3480, %v2442
        %v3482 = vsub.f32 %v3474, %v3481
        %v3483 = vsub.f32 %v3475, %v3481
        %v3484 = vmul.f32 %v3482, %v3482
        %v3485 = vmul.f32 %v3483, %v3483
        %v3486 = vadd.f32 %v3484, %v3485
        %3487 = vadd.xlane.f32.xlu0 %v3486
        %v3488 = vpop.xlane.xlu0 %3487
        %v3489 = vmul.f32 %v3488, %v2442
        %v3490 = vadd.f32 %v3489, 1e-12
        %v3491 = vrsqrt.pop %v3490
        %v3492 = vmul.f32 %v3482, %v3491
        %v3493 = vmul.f32 %v3483, %v3491
        %v3495 = vlaneseq
        %v3496 = vshrl.u32 %v3495, 7
        %v3497 = vsub.s32 0, %v3496
        %v3498 = vrot.slane %v3476, %v3497
        %v3499 = vlaneseq
        %v3500 = vshrl.u32 %v3499, 7
        %v3501 = vsub.s32 1, %v3500
        %v3502 = vrot.slane %v3476, %v3501
        %v3505 = vmul.f32 %v3492, %v3498
        %v3506 = vmul.f32 %v3493, %v3502
        %v3508 = vlaneseq
        %v3509 = vshrl.u32 %v3508, 7
        %v3510 = vsub.s32 0, %v3509
        %v3511 = vrot.slane %v3477, %v3510
        %v3512 = vlaneseq
        %v3513 = vshrl.u32 %v3512, 7
        %v3514 = vsub.s32 1, %v3513
        %v3515 = vrot.slane %v3477, %v3514
        %v3518 = vadd.f32 %v3505, %v3511
        %v3519 = vadd.f32 %v3506, %v3515
        %3520 = vst [vmem:[#allocation2] sm:$0xff] %v3518
        %3521 = vst [vmem:[#allocation2 + $0x8] sm:$0xff] %v3519
        %p3522 = scmp.eq.s32.totalorder %s54, 1
        // Predicated region
        $region133: #{my_adapted_bert_forward.1} parent=111 // pred_check
          %p3523 = pneg %p3522
        $region134: #{my_adapted_bert_forward.1} parent=111 // pred_check_branch
          %3525 = sbr.rel (%p3523) target = $region136
        $region135: #{my_adapted_bert_forward.1} parent=111 // pred_region
          %v3528 = vcombine.low %v3518, %v3519
          %v3530 = vunpack.c.l.s4 1966171168
          %v3531 = vunpack.c.0.s8 %v3530
          %v3532 = vlaneseq
          %v3533 = vshrl.u32 %v3532, 7
          %v3534 = vsub.s32 %v3531, %v3533
          %v3535 = vrot.slane %v3528, %v3534
          %v3537 = vunpack.c.l.s4 1966171168
          %v3538 = vunpack.c.0.s8 %v3537
          %v3539 = vlaneseq
          %v3540 = vshrl.u32 %v3539, 7
          %v3541 = vsub.s32 %v3538, %v3540
          %v3542 = vrot.slane %v3535, %v3541
          %v3544 = vlaneseq
          %vm3545 = vcmp.ge.s32.totalorder %v3544, 0
          %vm3546 = vcmp.lt.s32.totalorder %v3544, 256
          %vm3547 = vmand %vm3545, %vm3546
          %3548 = vst.msk [vmem:[%s1083] sm:$0x3] %vm3547, %v3542
          %v3549 = vpack.c.bf16 %v3518, %v3518
          %v3550 = vpack.c.bf16 %v3519, %v3519
          %v3551 = vld [vmem:[%s15] sm:$0xff]
          %v3552 = vld [vmem:[%s15 + $0x8] sm:$0xff]
          %v3553 = vld [vmem:[%s15 + $0x10] sm:$0xff]
          %v3554 = vld [vmem:[%s15 + $0x18] sm:$0xff]
          %v3555 = vld [vmem:[%s15 + $0x20] sm:$0xff]
          %v3556 = vld [vmem:[%s15 + $0x28] sm:$0xff]
          %v3557 = vld [vmem:[%s15 + $0x30] sm:$0xff]
          %v3558 = vld [vmem:[%s15 + $0x38] sm:$0xff]
          %v3559 = vld [vmem:[%s15 + $0x40] sm:$0xff]
          %v3560 = vld [vmem:[%s15 + $0x48] sm:$0xff]
          %v3561 = vld [vmem:[%s15 + $0x50] sm:$0xff]
          %v3562 = vld [vmem:[%s15 + $0x58] sm:$0xff]
          %v3563 = vld [vmem:[%s15 + $0x60] sm:$0xff]
          %v3564 = vld [vmem:[%s15 + $0x68] sm:$0xff]
          %v3565 = vld [vmem:[%s15 + $0x70] sm:$0xff]
          %v3566 = vld [vmem:[%s15 + $0x78] sm:$0xff]
          %v3567 = vld [vmem:[%s15 + $0x80] sm:$0xff]
          %v3568 = vld [vmem:[%s15 + $0x88] sm:$0xff]
          %v3569 = vld [vmem:[%s15 + $0x90] sm:$0xff]
          %v3570 = vld [vmem:[%s15 + $0x98] sm:$0xff]
          %v3571 = vld [vmem:[%s15 + $0xa0] sm:$0xff]
          %v3572 = vld [vmem:[%s15 + $0xa8] sm:$0xff]
          %v3573 = vld [vmem:[%s15 + $0xb0] sm:$0xff]
          %v3574 = vld [vmem:[%s15 + $0xb8] sm:$0xff]
          %v3575 = vld [vmem:[%s15 + $0xc0] sm:$0xff]
          %v3576 = vld [vmem:[%s15 + $0xc8] sm:$0xff]
          %v3577 = vld [vmem:[%s15 + $0xd0] sm:$0xff]
          %v3578 = vld [vmem:[%s15 + $0xd8] sm:$0xff]
          %v3579 = vld [vmem:[%s15 + $0xe0] sm:$0xff]
          %v3580 = vld [vmem:[%s15 + $0xe8] sm:$0xff]
          %v3581 = vld [vmem:[%s15 + $0xf0] sm:$0xff]
          %v3582 = vld [vmem:[%s15 + $0xf8] sm:$0xff]
          %v3583 = vld [vmem:[%s16] sm:$0x3]
          %v3616 = vunpack.c.l.b16 %v3551
          %v3617 = vunpack.c.h.b16 %v3551
          %v3618 = vunpack.c.l.b16 %v3552
          %v3619 = vunpack.c.h.b16 %v3552
          %v3620 = vunpack.c.l.b16 %v3553
          %v3621 = vunpack.c.h.b16 %v3553
          %v3622 = vunpack.c.l.b16 %v3554
          %v3623 = vunpack.c.h.b16 %v3554
          %v3624 = vunpack.c.l.b16 %v3555
          %v3625 = vunpack.c.h.b16 %v3555
          %v3626 = vunpack.c.l.b16 %v3556
          %v3627 = vunpack.c.h.b16 %v3556
          %v3628 = vunpack.c.l.b16 %v3557
          %v3629 = vunpack.c.h.b16 %v3557
          %v3630 = vunpack.c.l.b16 %v3558
          %v3631 = vunpack.c.h.b16 %v3558
          %v3632 = vunpack.c.l.b16 %v3559
          %v3633 = vunpack.c.h.b16 %v3559
          %v3634 = vunpack.c.l.b16 %v3560
          %v3635 = vunpack.c.h.b16 %v3560
          %v3636 = vunpack.c.l.b16 %v3561
          %v3637 = vunpack.c.h.b16 %v3561
          %v3638 = vunpack.c.l.b16 %v3562
          %v3639 = vunpack.c.h.b16 %v3562
          %v3640 = vunpack.c.l.b16 %v3563
          %v3641 = vunpack.c.h.b16 %v3563
          %v3642 = vunpack.c.l.b16 %v3564
          %v3643 = vunpack.c.h.b16 %v3564
          %v3644 = vunpack.c.l.b16 %v3565
          %v3645 = vunpack.c.h.b16 %v3565
          %v3646 = vunpack.c.l.b16 %v3566
          %v3647 = vunpack.c.h.b16 %v3566
          %v3648 = vunpack.c.l.b16 %v3567
          %v3649 = vunpack.c.h.b16 %v3567
          %v3650 = vunpack.c.l.b16 %v3568
          %v3651 = vunpack.c.h.b16 %v3568
          %v3652 = vunpack.c.l.b16 %v3569
          %v3653 = vunpack.c.h.b16 %v3569
          %v3654 = vunpack.c.l.b16 %v3570
          %v3655 = vunpack.c.h.b16 %v3570
          %v3656 = vunpack.c.l.b16 %v3571
          %v3657 = vunpack.c.h.b16 %v3571
          %v3658 = vunpack.c.l.b16 %v3572
          %v3659 = vunpack.c.h.b16 %v3572
          %v3660 = vunpack.c.l.b16 %v3573
          %v3661 = vunpack.c.h.b16 %v3573
          %v3662 = vunpack.c.l.b16 %v3574
          %v3663 = vunpack.c.h.b16 %v3574
          %v3664 = vunpack.c.l.b16 %v3575
          %v3665 = vunpack.c.h.b16 %v3575
          %v3666 = vunpack.c.l.b16 %v3576
          %v3667 = vunpack.c.h.b16 %v3576
          %v3668 = vunpack.c.l.b16 %v3577
          %v3669 = vunpack.c.h.b16 %v3577
          %v3670 = vunpack.c.l.b16 %v3578
          %v3671 = vunpack.c.h.b16 %v3578
          %v3672 = vunpack.c.l.b16 %v3579
          %v3673 = vunpack.c.h.b16 %v3579
          %v3674 = vunpack.c.l.b16 %v3580
          %v3675 = vunpack.c.h.b16 %v3580
          %v3676 = vunpack.c.l.b16 %v3581
          %v3677 = vunpack.c.h.b16 %v3581
          %v3678 = vunpack.c.l.b16 %v3582
          %v3679 = vunpack.c.h.b16 %v3582
          %v3680 = vpack.c.b16 %v3618, %v3616
          %v3681 = vpack.c.b16 %v3619, %v3617
          %v3682 = vpack.c.b16 %v3622, %v3620
          %v3683 = vpack.c.b16 %v3623, %v3621
          %v3684 = vpack.c.b16 %v3626, %v3624
          %v3685 = vpack.c.b16 %v3627, %v3625
          %v3686 = vpack.c.b16 %v3630, %v3628
          %v3687 = vpack.c.b16 %v3631, %v3629
          %v3688 = vpack.c.b16 %v3634, %v3632
          %v3689 = vpack.c.b16 %v3635, %v3633
          %v3690 = vpack.c.b16 %v3638, %v3636
          %v3691 = vpack.c.b16 %v3639, %v3637
          %v3692 = vpack.c.b16 %v3642, %v3640
          %v3693 = vpack.c.b16 %v3643, %v3641
          %v3694 = vpack.c.b16 %v3646, %v3644
          %v3695 = vpack.c.b16 %v3647, %v3645
          %v3696 = vpack.c.b16 %v3650, %v3648
          %v3697 = vpack.c.b16 %v3651, %v3649
          %v3698 = vpack.c.b16 %v3654, %v3652
          %v3699 = vpack.c.b16 %v3655, %v3653
          %v3700 = vpack.c.b16 %v3658, %v3656
          %v3701 = vpack.c.b16 %v3659, %v3657
          %v3702 = vpack.c.b16 %v3662, %v3660
          %v3703 = vpack.c.b16 %v3663, %v3661
          %v3704 = vpack.c.b16 %v3666, %v3664
          %v3705 = vpack.c.b16 %v3667, %v3665
          %v3706 = vpack.c.b16 %v3670, %v3668
          %v3707 = vpack.c.b16 %v3671, %v3669
          %v3708 = vpack.c.b16 %v3674, %v3672
          %v3709 = vpack.c.b16 %v3675, %v3673
          %v3710 = vpack.c.b16 %v3678, %v3676
          %v3711 = vpack.c.b16 %v3679, %v3677
          %v3745 = vlaneseq
          %v3746 = vshrl.u32 %v3745, 7
          %v3747 = vsub.s32 0, %v3746
          %v3748 = vrot.slane %v3583, %v3747
          %v3749 = vlaneseq
          %v3750 = vshrl.u32 %v3749, 7
          %v3751 = vsub.s32 1, %v3750
          %v3752 = vrot.slane %v3583, %v3751
          %3755 = vmatprep.subr.bf16.mxu0 %v3681
          %3756 = vmatpush1.bf16.xpose.msra.mxu0 %v3680
          %3757 = vmatprep.subr.bf16.mxu0 %v3683
          %3758 = vmatpush1.bf16.xpose.msra.mxu0 %v3682
          %3759 = vmatprep.subr.bf16.mxu0 %v3685
          %3760 = vmatpush1.bf16.xpose.msra.mxu0 %v3684
          %3761 = vmatprep.subr.bf16.mxu0 %v3687
          %3762 = vmatpush1.bf16.xpose.msra.mxu0 %v3686
          %3763 = vmatprep.subr.bf16.mxu0 %v3689
          %3764 = vmatpush1.bf16.xpose.msra.mxu0 %v3688
          %3765 = vmatprep.subr.bf16.mxu0 %v3691
          %3766 = vmatpush1.bf16.xpose.msra.mxu0 %v3690
          %3767 = vmatprep.subr.bf16.mxu0 %v3693
          %3768 = vmatpush1.bf16.xpose.msra.mxu0 %v3692
          %3769 = vmatprep.subr.bf16.mxu0 %v3695
          %3770 = vmatpush1.bf16.xpose.msra.mxu0 %v3694
          %3771 = vmatprep.subr.bf16.mxu0 %v3697
          %3772 = vmatpush1.bf16.xpose.msra.mxu0 %v3696
          %3773 = vmatprep.subr.bf16.mxu0 %v3699
          %3774 = vmatpush1.bf16.xpose.msra.mxu0 %v3698
          %3775 = vmatprep.subr.bf16.mxu0 %v3701
          %3776 = vmatpush1.bf16.xpose.msra.mxu0 %v3700
          %3777 = vmatprep.subr.bf16.mxu0 %v3703
          %3778 = vmatpush1.bf16.xpose.msra.mxu0 %v3702
          %3779 = vmatprep.subr.bf16.mxu0 %v3705
          %3780 = vmatpush1.bf16.xpose.msra.mxu0 %v3704
          %3781 = vmatprep.subr.bf16.mxu0 %v3707
          %3782 = vmatpush1.bf16.xpose.msra.mxu0 %v3706
          %3783 = vmatprep.subr.bf16.mxu0 %v3709
          %3784 = vmatpush1.bf16.xpose.msra.mxu0 %v3708
          %3785 = vmatprep.subr.bf16.mxu0 %v3711
          %3786 = vmatpush1.bf16.xpose.msra.mxu0 %v3710
          %3787 = vmatprep.mubr.bf16.mxu0 %v3550
          %3788 = vmatmul.mubr.bf16.gmra.mrb[0].mxu0 %v3549
          %v3789 = vpop.f32.mrb[0].mxu0
          %v3790 = vadd.f32 %v3748, %v3789
          %v3791 = vpop.f32.mrb[0].mxu0
          %v3792 = vadd.f32 %v3752, %v3791
          %v3793 = vpop.f32.mrb[0].mxu0
          %v3794 = vpop.f32.mrb[0].mxu0
          %3795 = vdwg.mxu0
          %v3796 = vld [vmem:[%s19] sm:$0x3]
          %v3798 = vlaneseq
          %v3799 = vshrl.u32 %v3798, 7
          %v3800 = vsub.s32 0, %v3799
          %v3801 = vrot.slane %v3796, %v3800
          %v3802 = vlaneseq
          %v3803 = vshrl.u32 %v3802, 7
          %v3804 = vsub.s32 1, %v3803
          %v3805 = vrot.slane %v3796, %v3804
          %v3808 = vmul.f32 %v3518, %v3801
          %v3809 = vmul.f32 %v3519, %v3805
          %vm3810 = vcmask 1040384
          %v3811 = vsel %vm3810, %v3808, 0.0
          %v3812 = vsel %vm3810, %v3809, 0.0
          %v3813 = vadd.f32 %v3811, %v3812
          %3814 = vadd.xlane.f32.xlu0 %v3813
          %v3815 = vpop.xlane.xlu0 %3814
          %v3816 = vld [vmem:[%s20] sm:$0x3]
          %v3818 = vlaneseq
          %v3819 = vshrl.u32 %v3818, 7
          %v3820 = vsub.s32 0, %v3819
          %v3821 = vrot.slane %v3816, %v3820
          %v3822 = vlaneseq
          %v3823 = vshrl.u32 %v3822, 7
          %v3824 = vsub.s32 1, %v3823
          %v3825 = vrot.slane %v3816, %v3824
          %v3828 = vmul.f32 %v3518, %v3821
          %v3829 = vmul.f32 %v3519, %v3825
          %v3830 = vsel %vm3810, %v3828, 0.0
          %v3831 = vsel %vm3810, %v3829, 0.0
          %v3832 = vadd.f32 %v3830, %v3831
          %3833 = vadd.xlane.f32.xlu0 %v3832
          %v3834 = vpop.xlane.xlu0 %3833
          %v3835 = vld [vmem:[%s17] sm:$0x3]
          %v3837 = vlaneseq
          %v3838 = vshrl.u32 %v3837, 7
          %v3839 = vsub.s32 0, %v3838
          %v3840 = vrot.slane %v3835, %v3839
          %v3841 = vlaneseq
          %v3842 = vshrl.u32 %v3841, 7
          %v3843 = vsub.s32 1, %v3842
          %v3844 = vrot.slane %v3835, %v3843
          %v3847 = vmul.f32 %v3815, %v3840
          %v3848 = vmul.f32 %v3815, %v3844
          %v3849 = vsub.f32 %v3790, %v3847
          %v3850 = vsub.f32 %v3792, %v3848
          %v3851 = vld [vmem:[%s18] sm:$0x3]
          %v3853 = vlaneseq
          %v3854 = vshrl.u32 %v3853, 7
          %v3855 = vsub.s32 0, %v3854
          %v3856 = vrot.slane %v3851, %v3855
          %v3857 = vlaneseq
          %v3858 = vshrl.u32 %v3857, 7
          %v3859 = vsub.s32 1, %v3858
          %v3860 = vrot.slane %v3851, %v3859
          %v3863 = vmul.f32 %v3834, %v3856
          %v3864 = vmul.f32 %v3834, %v3860
          %v3865 = vadd.f32 %v3849, %v3863
          %v3866 = vadd.f32 %v3850, %v3864
          %v3867 = vtanh.pop %v3865
          %v3868 = vtanh.pop %v3866
          %v3871 = vcombine.low %v3867, %v3868
          %v3873 = vunpack.c.l.s4 1966171168
          %v3874 = vunpack.c.0.s8 %v3873
          %v3875 = vlaneseq
          %v3876 = vshrl.u32 %v3875, 7
          %v3877 = vsub.s32 %v3874, %v3876
          %v3878 = vrot.slane %v3871, %v3877
          %v3880 = vunpack.c.l.s4 1966171168
          %v3881 = vunpack.c.0.s8 %v3880
          %v3882 = vlaneseq
          %v3883 = vshrl.u32 %v3882, 7
          %v3884 = vsub.s32 %v3881, %v3883
          %v3885 = vrot.slane %v3878, %v3884
          %3887 = vst.msk [vmem:[%s1087] sm:$0x3] %vm3547, %v3885
          %v3888 = vpack.c.bf16 %v3867, %v3867
          %v3889 = vpack.c.bf16 %v3868, %v3868
          %v3890 = vld [vmem:[%s21] sm:$0xff]
          %v3891 = vld [vmem:[%s21 + $0x8] sm:$0xff]
          %v3892 = vld [vmem:[%s21 + $0x10] sm:$0xff]
          %v3893 = vld [vmem:[%s21 + $0x18] sm:$0xff]
          %v3894 = vld [vmem:[%s21 + $0x20] sm:$0xff]
          %v3895 = vld [vmem:[%s21 + $0x28] sm:$0xff]
          %v3896 = vld [vmem:[%s21 + $0x30] sm:$0xff]
          %v3897 = vld [vmem:[%s21 + $0x38] sm:$0xff]
          %v3898 = vld [vmem:[%s21 + $0x40] sm:$0xff]
          %v3899 = vld [vmem:[%s21 + $0x48] sm:$0xff]
          %v3900 = vld [vmem:[%s21 + $0x50] sm:$0xff]
          %v3901 = vld [vmem:[%s21 + $0x58] sm:$0xff]
          %v3902 = vld [vmem:[%s21 + $0x60] sm:$0xff]
          %v3903 = vld [vmem:[%s21 + $0x68] sm:$0xff]
          %v3904 = vld [vmem:[%s21 + $0x70] sm:$0xff]
          %v3905 = vld [vmem:[%s21 + $0x78] sm:$0xff]
          %v3906 = vld [vmem:[%s22] sm:$0x1]
          %v3923 = vunpack.c.l.b16 %v3890
          %v3924 = vunpack.c.h.b16 %v3890
          %v3925 = vunpack.c.l.b16 %v3891
          %v3926 = vunpack.c.h.b16 %v3891
          %v3927 = vunpack.c.l.b16 %v3892
          %v3928 = vunpack.c.h.b16 %v3892
          %v3929 = vunpack.c.l.b16 %v3893
          %v3930 = vunpack.c.h.b16 %v3893
          %v3931 = vunpack.c.l.b16 %v3894
          %v3932 = vunpack.c.h.b16 %v3894
          %v3933 = vunpack.c.l.b16 %v3895
          %v3934 = vunpack.c.h.b16 %v3895
          %v3935 = vunpack.c.l.b16 %v3896
          %v3936 = vunpack.c.h.b16 %v3896
          %v3937 = vunpack.c.l.b16 %v3897
          %v3938 = vunpack.c.h.b16 %v3897
          %v3939 = vunpack.c.l.b16 %v3898
          %v3940 = vunpack.c.h.b16 %v3898
          %v3941 = vunpack.c.l.b16 %v3899
          %v3942 = vunpack.c.h.b16 %v3899
          %v3943 = vunpack.c.l.b16 %v3900
          %v3944 = vunpack.c.h.b16 %v3900
          %v3945 = vunpack.c.l.b16 %v3901
          %v3946 = vunpack.c.h.b16 %v3901
          %v3947 = vunpack.c.l.b16 %v3902
          %v3948 = vunpack.c.h.b16 %v3902
          %v3949 = vunpack.c.l.b16 %v3903
          %v3950 = vunpack.c.h.b16 %v3903
          %v3951 = vunpack.c.l.b16 %v3904
          %v3952 = vunpack.c.h.b16 %v3904
          %v3953 = vunpack.c.l.b16 %v3905
          %v3954 = vunpack.c.h.b16 %v3905
          %v3955 = vpack.c.b16 %v3925, %v3923
          %v3956 = vpack.c.b16 %v3926, %v3924
          %v3957 = vpack.c.b16 %v3929, %v3927
          %v3958 = vpack.c.b16 %v3930, %v3928
          %v3959 = vpack.c.b16 %v3933, %v3931
          %v3960 = vpack.c.b16 %v3934, %v3932
          %v3961 = vpack.c.b16 %v3937, %v3935
          %v3962 = vpack.c.b16 %v3938, %v3936
          %v3963 = vpack.c.b16 %v3941, %v3939
          %v3964 = vpack.c.b16 %v3942, %v3940
          %v3965 = vpack.c.b16 %v3945, %v3943
          %v3966 = vpack.c.b16 %v3946, %v3944
          %v3967 = vpack.c.b16 %v3949, %v3947
          %v3968 = vpack.c.b16 %v3950, %v3948
          %v3969 = vpack.c.b16 %v3953, %v3951
          %v3970 = vpack.c.b16 %v3954, %v3952
          %3987 = vmatprep.subr.bf16.mxu0 %v3956
          %3988 = vmatpush1.bf16.xpose.msra.mxu0 %v3955
          %3989 = vmatprep.subr.bf16.mxu0 %v3958
          %3990 = vmatpush1.bf16.xpose.msra.mxu0 %v3957
          %3991 = vmatprep.subr.bf16.mxu0 %v3960
          %3992 = vmatpush1.bf16.xpose.msra.mxu0 %v3959
          %3993 = vmatprep.subr.bf16.mxu0 %v3962
          %3994 = vmatpush1.bf16.xpose.msra.mxu0 %v3961
          %3995 = vmatprep.subr.bf16.mxu0 %v3964
          %3996 = vmatpush1.bf16.xpose.msra.mxu0 %v3963
          %3997 = vmatprep.subr.bf16.mxu0 %v3966
          %3998 = vmatpush1.bf16.xpose.msra.mxu0 %v3965
          %3999 = vmatprep.subr.bf16.mxu0 %v3968
          %4000 = vmatpush1.bf16.xpose.msra.mxu0 %v3967
          %4001 = vmatprep.subr.bf16.mxu0 %v3970
          %4002 = vmatpush1.bf16.xpose.msra.mxu0 %v3969
          %4003 = vmatprep.subr.bf16.mxu0 0
          %4004 = vmatpush1.bf16.xpose.msra.mxu0 0
          %4005 = vmatprep.subr.bf16.mxu0 0
          %4006 = vmatpush1.bf16.xpose.msra.mxu0 0
          %4007 = vmatprep.subr.bf16.mxu0 0
          %4008 = vmatpush1.bf16.xpose.msra.mxu0 0
          %4009 = vmatprep.subr.bf16.mxu0 0
          %4010 = vmatpush1.bf16.xpose.msra.mxu0 0
          %4011 = vmatprep.subr.bf16.mxu0 0
          %4012 = vmatpush1.bf16.xpose.msra.mxu0 0
          %4013 = vmatprep.subr.bf16.mxu0 0
          %4014 = vmatpush1.bf16.xpose.msra.mxu0 0
          %4015 = vmatprep.subr.bf16.mxu0 0
          %4016 = vmatpush1.bf16.xpose.msra.mxu0 0
          %4017 = vmatprep.subr.bf16.mxu0 0
          %4018 = vmatpush1.bf16.xpose.msra.mxu0 0
          %4019 = vmatprep.mubr.bf16.mxu0 %v3889
          %4020 = vmatmul.mubr.bf16.gmra.mrb[0].mxu0 %v3888
          %v4021 = vpop.f32.mrb[0].mxu0
          %v4022 = vadd.f32 %v3906, %v4021
          %v4023 = vpop.f32.mrb[0].mxu0
          %v4024 = vpop.f32.mrb[0].mxu0
          %v4025 = vpop.f32.mrb[0].mxu0
          %4026 = vdwg.mxu0
          %4027 = vst [vmem:[%s1042] sm:$0x1] %v4022
        $region136: #{my_adapted_bert_forward.1} parent=111 // pred_fallthru
          _
        %p4028 = scmp.lt.s32.totalorder %s53, 1
        %s4029 = scalar_select %p4028, %s53, 1
        %s4030 = smul.addr %s4029, 2
        %s4031 = scalar_lea.vmem %s23, %s4030
        %p4032 = scmp.lt.s32.totalorder %s53, 1
        %s4033 = scalar_select %p4032, %s53, 1
        %s4034 = smul.addr %s4033, 2
        %s4035 = scalar_lea.vmem %s24, %s4034
        %s4036 = sand.u32 %s669, 1
        %s4037 = scalar_lea.sflag [#allocation5], %s4036
        %s4038 = sand.u32 %s669, 1
        %s4039 = scalar_lea.vmem [#allocation11], %s4038
        // Predicated region
        $region137: #{my_adapted_bert_forward.1} parent=111 // pred_check
          %p4040 = pneg %p627
        $region138: #{my_adapted_bert_forward.1} parent=111 // pred_check_branch
          %4042 = sbr.rel (%p4040) target = $region140
        $region139: #{my_adapted_bert_forward.1} parent=111 // pred_region
          _
        $region140: #{my_adapted_bert_forward.1} parent=111 // pred_fallthru
          _
        // Predicated region
        $region141: #{my_adapted_bert_forward.1} parent=111 // pred_check
          %p4043 = pneg %p653
        $region142: #{my_adapted_bert_forward.1} parent=111 // pred_check_branch
          %4045 = sbr.rel (%p4043) target = $region144
        $region143: #{my_adapted_bert_forward.1} parent=111 // pred_region
          _
        $region144: #{my_adapted_bert_forward.1} parent=111 // pred_fallthru
          _
        // Predicated region
        $region145: #{my_adapted_bert_forward.1} parent=111 // pred_check
          %p4046 = pneg %p679
        $region146: #{my_adapted_bert_forward.1} parent=111 // pred_check_branch
          %4048 = sbr.rel (%p4046) target = $region148
        $region147: #{my_adapted_bert_forward.1} parent=111 // pred_region
          %s4050 = ssub.s32 16, 16
          %4051 = vsyncadd %s4037, %s4050
          %s4052 = smul.addr %s53, 16
          %s4053 = scalar_lea.hbm %s25, %s4052
          %s4055 = sshll.u32 %s4039, 4
          %s4056 = int_to_ptr.vmem [resolvable:$true] %s4055
          %4058 = dma.vmem_to_hbm [thread:$0]  %s4056, 16, %s4053, %s4037
        $region148: #{my_adapted_bert_forward.1} parent=111 // pred_fallthru
          _
      $region112: #{my_adapted_bert_forward.1} parent=5 // pred_fallthru
        _
      %p4059 = scmp.le.s32.totalorder 2, %s44
      // Predicated region
      $region149: #{my_adapted_bert_forward.1} parent=5 // pred_check
        %p4060 = pneg %p4059
      $region150: #{my_adapted_bert_forward.1} parent=5 // pred_check_branch
        %4062 = sbr.rel (%p4060) target = $region152
      $region151: #{my_adapted_bert_forward.1} parent=5 // pred_region
        %s4063 = ssub.s32 %s44, 2
        // Predicated region
        $region153: #{my_adapted_bert_forward.1} parent=151 // pred_check
          %p4064 = pneg %p633
        $region154: #{my_adapted_bert_forward.1} parent=151 // pred_check_branch
          %4066 = sbr.rel (%p4064) target = $region156
        $region155: #{my_adapted_bert_forward.1} parent=151 // pred_region
          %p4067 = scmp.lt.s32.totalorder %s55, 1
          %s4068 = scalar_select %p4067, %s55, 1
          %s4069 = smul.addr %s4068, 2
          %s4070 = scalar_lea.vmem %s23, %s4069
        $region156: #{my_adapted_bert_forward.1} parent=151 // pred_fallthru
          _
        // Predicated region
        $region157: #{my_adapted_bert_forward.1} parent=151 // pred_check
          %p4071 = pneg %p659
        $region158: #{my_adapted_bert_forward.1} parent=151 // pred_check_branch
          %4073 = sbr.rel (%p4071) target = $region160
        $region159: #{my_adapted_bert_forward.1} parent=151 // pred_region
          %p4074 = scmp.lt.s32.totalorder %s55, 1
          %s4075 = scalar_select %p4074, %s55, 1
          %s4076 = smul.addr %s4075, 2
          %s4077 = scalar_lea.vmem %s24, %s4076
        $region160: #{my_adapted_bert_forward.1} parent=151 // pred_fallthru
          _
        // Predicated region
        $region161: #{my_adapted_bert_forward.1} parent=151 // pred_check
          %p4078 = pneg %p685
        $region162: #{my_adapted_bert_forward.1} parent=151 // pred_check_branch
          %4080 = sbr.rel (%p4078) target = $region164
        $region163: #{my_adapted_bert_forward.1} parent=151 // pred_region
          %s4081 = sand.u32 %s670, 1
          %s4082 = scalar_lea.sflag [#allocation5], %s4081
          %s4083 = sand.u32 %s670, 1
          %s4084 = scalar_lea.vmem [#allocation11], %s4083
          %4085 = dma.done %s4082, 16
        $region164: #{my_adapted_bert_forward.1} parent=151 // pred_fallthru
          _
      $region152: #{my_adapted_bert_forward.1} parent=5 // pred_fallthru
        _
    $region6: #{my_adapted_bert_forward.1} parent=1 // loop_footer
      %s48 = sadd.s32 1, %s44
    $region7: #{my_adapted_bert_forward.1} parent=1 // loop_footer_branch
      %43 = sbr.rel target = $region3
    $region8: #{my_adapted_bert_forward.1} parent=1 // loop_exit
      _
    %4086 = vsyncpa [#allocation4], 1
    %s4087 = scalar_lea.sflag [#allocation4], 1
    %4088 = vsyncpa %s4087, 1
    %4089 = vsyncpa [#allocation7], 1
    %s4090 = scalar_lea.sflag [#allocation7], 1
    %4091 = vsyncpa %s4090, 1
    %4092 = vsyncpa [#allocation10], 1
    %s4093 = scalar_lea.sflag [#allocation10], 1
    %4094 = vsyncpa %s4093, 1
    %4095 = vsyncpa [#allocation5], 1
    %s4096 = scalar_lea.sflag [#allocation5], 1
    %4097 = vsyncpa %s4096, 1

</llo_original>
